<compile_context>
chip_gen: v7x
topology: tpu7x:2x2x1
jax: 0.10.0
libtpu: 0.0.40
codegen_flags: <defaults>
</compile_context>

<pallas_src>
import functools

import jax
import jax.numpy as jnp
from jax.experimental import pallas as pl
from jax.experimental.pallas import tpu as pltpu


def _round_up(x, m):
    return (x + m - 1) // m * m


# ----------------------------------------------------------------------------
# Pallas kernels: single-K-block matmul with fused bias / ReLU / residual
# ----------------------------------------------------------------------------
def matmul_bias_kernel(a_ref, b_ref, c_ref, o_ref, *, relu):
    """o = [relu](a @ b + c).  a:(tm,K) bf16, b:(K,tn) bf16, c:(1,tn) f32."""
    y = jnp.dot(a_ref[...], b_ref[...], preferred_element_type=jnp.float32)
    y = y + c_ref[...]
    if relu:                                   # static python bool -> variant
        y = jnp.maximum(y, 0.0)
    o_ref[...] = y.astype(o_ref.dtype)


def matmul_bias_res_kernel(a_ref, b_ref, c_ref, r_ref, o_ref):
    """o = relu(a @ b + c + r): Bottleneck conv3 with the residual add fused."""
    y = jnp.dot(a_ref[...], b_ref[...], preferred_element_type=jnp.float32)
    y = y + c_ref[...] + r_ref[...].astype(jnp.float32)
    o_ref[...] = jnp.maximum(y, 0.0).astype(o_ref.dtype)


# ----------------------------------------------------------------------------
# Tile selection (VMEM-budget aware)
# ----------------------------------------------------------------------------
def _pick_tiles(M, N, Kp, has_residual):
    """tm: sublane(8)-aligned, capped at 512.  tn: always divides N so the
    output is never padded or sliced along the lane dim."""
    tm = min(_round_up(M, 8), 512)
    if N % 128 == 0:
        tn = 128
        for cand in (512, 256):
            if N % cand == 0:
                tn = cand
                break
    else:
        tn = N                                 # full-dim block (legal)

    def vmem_bytes(tm_, tn_):
        per_step = tm_ * Kp * 2 + Kp * tn_ * 2 + tn_ * 4 + tm_ * tn_ * 2
        if has_residual:
            per_step += tm_ * tn_ * 2
        return 2 * per_step                    # double-buffered

    budget = 24 * 1024 * 1024                  # headroom under 32 MiB scoped
    while vmem_bytes(tm, tn) > budget and tm > 128:
        tm = _round_up(max(128, tm // 2), 8)
    while (vmem_bytes(tm, tn) > budget and tn > 128
           and tn % 2 == 0 and N % (tn // 2) == 0):
        tn //= 2
    return tm, tn


# ----------------------------------------------------------------------------
# Matmul wrapper
# ----------------------------------------------------------------------------
def matmul_bias_act(a, w_mat, bias, *, relu, residual=None):
    """out = epilogue(a @ w_mat).  a:(M,K)  w_mat:(K,N) f32 (BN scale folded)."""
    M, K = a.shape
    N = w_mat.shape[1]

    Kp = _round_up(K, 128)                     # zero-pad contraction dim
    tm, tn = _pick_tiles(M, N, Kp, residual is not None)
    Mp = _round_up(M, tm)

    # Operand prep. Weight pad/cast are jit constants -> folded at compile time.
    ap = a.astype(jnp.bfloat16)
    if (Mp, Kp) != (M, K):
        ap = jnp.pad(ap, ((0, Mp - M), (0, Kp - K)))
    bp = jnp.pad(w_mat, ((0, Kp - K), (0, 0))).astype(jnp.bfloat16)
    cp = bias.reshape(1, N).astype(jnp.float32)

    in_specs = [
        pl.BlockSpec((tm, Kp), lambda i, j: (i, 0)),
        pl.BlockSpec((Kp, tn), lambda i, j: (0, j)),
        pl.BlockSpec((1, tn), lambda i, j: (0, j)),
    ]
    operands = [ap, bp, cp]
    if residual is None:
        kernel = functools.partial(matmul_bias_kernel, relu=relu)
    else:
        kernel = matmul_bias_res_kernel
        rp = residual.astype(jnp.bfloat16)
        if Mp != M:
            rp = jnp.pad(rp, ((0, Mp - M), (0, 0)))
        in_specs.append(pl.BlockSpec((tm, tn), lambda i, j: (i, j)))
        operands.append(rp)

    cost = pl.CostEstimate(
        flops=2 * Mp * Kp * N,
        transcendentals=0,
        bytes_accessed=Mp * Kp * 2 + Kp * N * 2 + Mp * N * 2)

    out = pl.pallas_call(
        kernel,
        out_shape=jax.ShapeDtypeStruct((Mp, N), jnp.bfloat16),
        grid=(Mp // tm, N // tn),
        in_specs=in_specs,
        out_specs=pl.BlockSpec((tm, tn), lambda i, j: (i, j)),
        compiler_params=pltpu.CompilerParams(
            dimension_semantics=("parallel", "parallel")),
        cost_estimate=cost,
    )(*operands)
    return out[:M] if Mp != M else out


# ----------------------------------------------------------------------------
# Conv (im2col glue) + folded BN + optional fused ReLU / residual
# ----------------------------------------------------------------------------
# TODO(synk): direct strided-window DMA conv (no im2col buffer) for 3x3 / 7x7.
def _im2col(x, kh, kw, stride, pad):
    """NHWC (bf16) -> (N*OH*OW, kh*kw*C).  1x1 convs are pure reshapes/views."""
    N, H, W, C = x.shape
    if kh == 1 and kw == 1 and pad == 0:
        xs = x if stride == 1 else x[:, ::stride, ::stride, :]
        OH, OW = xs.shape[1], xs.shape[2]
        return xs.reshape(N * OH * OW, C), OH, OW
    xp = jnp.pad(x, ((0, 0), (pad, pad), (pad, pad), (0, 0)))
    OH = (H + 2 * pad - kh) // stride + 1
    OW = (W + 2 * pad - kw) // stride + 1
    cols = []
    for dy in range(kh):
        for dx in range(kw):
            cols.append(xp[:, dy:dy + stride * (OH - 1) + 1:stride,
                           dx:dx + stride * (OW - 1) + 1:stride, :])
    patches = jnp.concatenate(cols, axis=-1)        # bf16 (N, OH, OW, kh*kw*C)
    return patches.reshape(N * OH * OW, kh * kw * C), OH, OW


def conv_bn(x, w, scale, bias, stride, pad, relu, residual=None):
    """x NHWC (bf16).  w PyTorch layout (Cout, Cin, KH, KW).  BN scale folded
    into the weight matrix; bias (+ReLU, +residual) fused in the epilogue."""
    cout, cin, kh, kw = w.shape
    a, OH, OW = _im2col(x, kh, kw, stride, pad)
    wmat = jnp.transpose(w, (2, 3, 1, 0)).reshape(kh * kw * cin, cout)
    wmat = wmat * scale.reshape(1, -1)              # fold BN scale (jit const)
    r2 = None if residual is None else residual.reshape(-1, cout)
    y = matmul_bias_act(a, wmat, bias, relu=relu, residual=r2)
    return y.reshape(x.shape[0], OH, OW, cout)


# ----------------------------------------------------------------------------
# MaxPool2d(3, stride=2, padding=1)
# ----------------------------------------------------------------------------
def maxpool_3x3_s2_p1(x):
    """Fused XLA maximum tree over 9 strided views of the -inf padded input.
    Purely memory-bound; avoids materializing a 9x tap stack through HBM."""
    N, H, W, C = x.shape
    OH = (H + 2 - 3) // 2 + 1
    OW = (W + 2 - 3) // 2 + 1
    xp = jnp.pad(x, ((0, 0), (1, 1), (1, 1), (0, 0)),
                 constant_values=-jnp.inf)
    out = None
    for dy in range(3):
        for dx in range(3):
            tap = xp[:, dy:dy + 2 * (OH - 1) + 1:2,
                     dx:dx + 2 * (OW - 1) + 1:2, :]
            out = tap if out is None else jnp.maximum(out, tap)
    return out


# ----------------------------------------------------------------------------
# Parameter construction (deterministic, synthetic; BN in eval mode, folded)
# ----------------------------------------------------------------------------
def _init_conv(key, cin, cout, k):
    fan_in = cin * k * k
    return jax.random.normal(key, (cout, cin, k, k), jnp.float32) / jnp.sqrt(fan_in)


def _init_bn_folded(key, c, eps=1e-5):
    k1, k2, k3, k4 = jax.random.split(key, 4)
    gamma = jax.random.uniform(k1, (c,), minval=0.5, maxval=1.5)
    beta = 0.1 * jax.random.normal(k2, (c,))
    mean = 0.1 * jax.random.normal(k3, (c,))
    var = jax.random.uniform(k4, (c,), minval=0.5, maxval=1.5)
    scale = gamma / jnp.sqrt(var + eps)
    bias = beta - mean * scale
    return scale.astype(jnp.float32), bias.astype(jnp.float32)


def make_bottleneck_params(key, in_dim, out_dim, stride):
    bneck = out_dim // 4
    ks = jax.random.split(key, 8)
    p = {"stride": stride}
    p["w1"] = _init_conv(ks[0], in_dim, bneck, 1)
    p["s1"], p["b1"] = _init_bn_folded(ks[1], bneck)
    p["w2"] = _init_conv(ks[2], bneck, bneck, 3)
    p["s2"], p["b2"] = _init_bn_folded(ks[3], bneck)
    p["w3"] = _init_conv(ks[4], bneck, out_dim, 1)
    p["s3"], p["b3"] = _init_bn_folded(ks[5], out_dim)
    if stride > 1 or out_dim != in_dim:
        p["ws"] = _init_conv(ks[6], in_dim, out_dim, 1)
        p["ss"], p["bs"] = _init_bn_folded(ks[7], out_dim)
    return p


def make_resnet_params(key, n_layers):
    keys = jax.random.split(key, 2 + sum(n_layers))
    ki = iter(keys)
    params = {}
    k_stem_w, k_stem_bn = jax.random.split(next(ki))
    params["stem"] = {"w": _init_conv(k_stem_w, 3, 64, 7)}
    params["stem"]["s"], params["stem"]["b"] = _init_bn_folded(k_stem_bn, 64)
    in_dim = 64
    stages = []
    for i, n_layer in enumerate(n_layers):
        out_dim = 256 * 2 ** i
        blocks = [make_bottleneck_params(next(ki), in_dim, out_dim,
                                         stride=1 if i == 0 else 2)]
        for _ in range(n_layer - 1):
            blocks.append(make_bottleneck_params(next(ki), out_dim, out_dim, 1))
        stages.append(blocks)
        in_dim = out_dim
    params["stages"] = stages
    params["out_dim"] = in_dim
    return params


# ----------------------------------------------------------------------------
# Forward pass
# ----------------------------------------------------------------------------
def bottleneck_forward(x, p):
    stride = p["stride"]
    if "ws" in p:
        sc = conv_bn(x, p["ws"], p["ss"], p["bs"], stride=stride, pad=0, relu=False)
    else:
        sc = x
    r = conv_bn(x, p["w1"], p["s1"], p["b1"], stride=1, pad=0, relu=True)
    r = conv_bn(r, p["w2"], p["s2"], p["b2"], stride=stride, pad=1, relu=True)
    # conv3: bias + residual add + ReLU all fused in the matmul epilogue.
    return conv_bn(r, p["w3"], p["s3"], p["b3"], stride=1, pad=0, relu=True,
                   residual=sc)


def resnet_forward(x_nchw, params):
    x = jnp.transpose(x_nchw, (0, 2, 3, 1)).astype(jnp.bfloat16)  # NCHW -> NHWC
    st = params["stem"]
    x = conv_bn(x, st["w"], st["s"], st["b"], stride=2, pad=3, relu=True)
    x = maxpool_3x3_s2_p1(x)
    for stage in params["stages"]:
        for blk in stage:
            x = bottleneck_forward(x, blk)
    return jnp.transpose(x, (0, 3, 1, 2)).astype(jnp.float32)      # NHWC -> NCHW


# ----------------------------------------------------------------------------
# Main
# ----------------------------------------------------------------------------
if __name__ == "__main__":
    key = jax.random.PRNGKey(0)
    k_param, k_input = jax.random.split(key)

    n_layers = [2, 2]                                   # small synthetic ResNet
    params = make_resnet_params(k_param, n_layers)

    x = jax.random.normal(k_input, (2, 3, 32, 32), jnp.float32)   # NCHW input

    fwd = jax.jit(lambda inp: resnet_forward(inp, params))
    out = jax.block_until_ready(fwd(x))

    # stem: 32 -> 16 (conv s2) -> 8 (maxpool s2); stage0 s1: 8; stage1 s2: 4
    assert out.shape == (2, params["out_dim"], 4, 4), out.shape
    assert bool(jnp.all(jnp.isfinite(out)))
    print("KERNEL_OK")
</pallas_src>

<mosaic_0001>
module attributes {stable_mosaic.version = 11 : i64} {
  func.func @matmul_bias_kernel(%arg0: i32, %arg1: i32, %arg2: memref<512x256xbf16, #tpu.memory_space<vmem>>, %arg3: memref<256x64xbf16, #tpu.memory_space<vmem>>, %arg4: memref<1x64xf32, #tpu.memory_space<vmem>>, %arg5: memref<512x64xbf16, #tpu.memory_space<vmem>>) attributes {dimension_semantics = [#tpu.dimension_semantics<parallel>, #tpu.dimension_semantics<parallel>], iteration_bounds = array<i64: 1, 1>, scalar_prefetch = 0 : i64, scratch_operands = 0 : i64, tpu.core_type = #tpu.core_type<tc>, window_params = [{transform_indices = @transform_0, window_bounds = array<i64: 512, 256>}, {transform_indices = @transform_1, window_bounds = array<i64: 256, 64>}, {transform_indices = @transform_2, window_bounds = array<i64: 1, 64>}, {transform_indices = @transform_3, window_bounds = array<i64: 512, 64>}]} {
    %c0 = arith.constant 0 : index
    %c0_0 = arith.constant 0 : index
    %0 = vector.load %arg2[%c0, %c0_0] : memref<512x256xbf16, #tpu.memory_space<vmem>>, vector<512x256xbf16>
    %c0_1 = arith.constant 0 : index
    %c0_2 = arith.constant 0 : index
    %1 = vector.load %arg3[%c0_1, %c0_2] : memref<256x64xbf16, #tpu.memory_space<vmem>>, vector<256x64xbf16>
    %cst = arith.constant dense<0.000000e+00> : vector<512x64xf32>
    %2 = tpu.matmul %0, %1, %cst {dimension_numbers = #tpu.dot_dimension_numbers<[1], [0], [0], [1], [0, 0, 1, 1], [], []>} : vector<512x256xbf16>, vector<256x64xbf16>, vector<512x64xf32> -> vector<512x64xf32>
    %c0_3 = arith.constant 0 : index
    %c0_4 = arith.constant 0 : index
    %3 = vector.load %arg4[%c0_3, %c0_4] : memref<1x64xf32, #tpu.memory_space<vmem>>, vector<1x64xf32>
    %4 = vector.broadcast %3 : vector<1x64xf32> to vector<512x64xf32>
    %5 = arith.addf %2, %4 : vector<512x64xf32>
    %cst_5 = arith.constant 0.000000e+00 : f32
    %6 = vector.broadcast %cst_5 : f32 to vector<512x64xf32>
    %7 = arith.maximumf %5, %6 : vector<512x64xf32>
    %8 = arith.truncf %7 : vector<512x64xf32> to vector<512x64xbf16>
    %c0_6 = arith.constant 0 : index
    %c0_7 = arith.constant 0 : index
    %9 = vector.load %arg5[%c0_6, %c0_7] : memref<512x64xbf16, #tpu.memory_space<vmem>>, vector<512x64xbf16>
    tpu.vector_store %arg5[%c0_6, %c0_7], %8 {strides = array<i32>} : memref<512x64xbf16, #tpu.memory_space<vmem>>, vector<512x64xbf16>,
    return
  }
  func.func @transform_0(%arg0: i32, %arg1: i32) -> (i32, i32) {
    %c0_i32 = arith.constant 0 : i32
    %c0_i32_0 = arith.constant 0 : i32
    return %arg0, %c0_i32 : i32, i32
  }
  func.func @transform_1(%arg0: i32, %arg1: i32) -> (i32, i32) {
    %c0_i32 = arith.constant 0 : i32
    %c0_i32_0 = arith.constant 0 : i32
    return %c0_i32, %arg1 : i32, i32
  }
  func.func @transform_2(%arg0: i32, %arg1: i32) -> (i32, i32) {
    %c0_i32 = arith.constant 0 : i32
    %c0_i32_0 = arith.constant 0 : i32
    return %c0_i32, %arg1 : i32, i32
  }
  func.func @transform_3(%arg0: i32, %arg1: i32) -> (i32, i32) {
    %c0_i32 = arith.constant 0 : i32
    return %arg0, %arg1 : i32, i32
  }
}

module attributes {stable_mosaic.version = 11 : i64} {
  func.func @matmul_bias_kernel(%arg0: i32, %arg1: i32, %arg2: memref<128x128xbf16, #tpu.memory_space<vmem>>, %arg3: memref<128x64xbf16, #tpu.memory_space<vmem>>, %arg4: memref<1x64xf32, #tpu.memory_space<vmem>>, %arg5: memref<128x64xbf16, #tpu.memory_space<vmem>>) attributes {dimension_semantics = [#tpu.dimension_semantics<parallel>, #tpu.dimension_semantics<parallel>], iteration_bounds = array<i64: 1, 1>, scalar_prefetch = 0 : i64, scratch_operands = 0 : i64, tpu.core_type = #tpu.core_type<tc>, window_params = [{transform_indices = @transform_0, window_bounds = array<i64: 128, 128>}, {transform_indices = @transform_1, window_bounds = array<i64: 128, 64>}, {transform_indices = @transform_2, window_bounds = array<i64: 1, 64>}, {transform_indices = @transform_3, window_bounds = array<i64: 128, 64>}]} {
    %c0 = arith.constant 0 : index
    %c0_0 = arith.constant 0 : index
    %0 = vector.load %arg2[%c0, %c0_0] : memref<128x128xbf16, #tpu.memory_space<vmem>>, vector<128x128xbf16>
    %c0_1 = arith.constant 0 : index
    %c0_2 = arith.constant 0 : index
    %1 = vector.load %arg3[%c0_1, %c0_2] : memref<128x64xbf16, #tpu.memory_space<vmem>>, vector<128x64xbf16>
    %cst = arith.constant dense<0.000000e+00> : vector<128x64xf32>
    %2 = tpu.matmul %0, %1, %cst {dimension_numbers = #tpu.dot_dimension_numbers<[1], [0], [0], [1], [0, 0, 1, 1], [], []>} : vector<128x128xbf16>, vector<128x64xbf16>, vector<128x64xf32> -> vector<128x64xf32>
    %c0_3 = arith.constant 0 : index
    %c0_4 = arith.constant 0 : index
    %3 = vector.load %arg4[%c0_3, %c0_4] : memref<1x64xf32, #tpu.memory_space<vmem>>, vector<1x64xf32>
    %4 = vector.broadcast %3 : vector<1x64xf32> to vector<128x64xf32>
    %5 = arith.addf %2, %4 : vector<128x64xf32>
    %cst_5 = arith.constant 0.000000e+00 : f32
    %6 = vector.broadcast %cst_5 : f32 to vector<128x64xf32>
    %7 = arith.maximumf %5, %6 : vector<128x64xf32>
    %8 = arith.truncf %7 : vector<128x64xf32> to vector<128x64xbf16>
    %c0_6 = arith.constant 0 : index
    %c0_7 = arith.constant 0 : index
    %9 = vector.load %arg5[%c0_6, %c0_7] : memref<128x64xbf16, #tpu.memory_space<vmem>>, vector<128x64xbf16>
    tpu.vector_store %arg5[%c0_6, %c0_7], %8 {strides = array<i32>} : memref<128x64xbf16, #tpu.memory_space<vmem>>, vector<128x64xbf16>,
    return
  }
  func.func @transform_0(%arg0: i32, %arg1: i32) -> (i32, i32) {
    %c0_i32 = arith.constant 0 : i32
    %c0_i32_0 = arith.constant 0 : i32
    return %arg0, %c0_i32 : i32, i32
  }
  func.func @transform_1(%arg0: i32, %arg1: i32) -> (i32, i32) {
    %c0_i32 = arith.constant 0 : i32
    %c0_i32_0 = arith.constant 0 : i32
    return %c0_i32, %arg1 : i32, i32
  }
  func.func @transform_2(%arg0: i32, %arg1: i32) -> (i32, i32) {
    %c0_i32 = arith.constant 0 : i32
    %c0_i32_0 = arith.constant 0 : i32
    return %c0_i32, %arg1 : i32, i32
  }
  func.func @transform_3(%arg0: i32, %arg1: i32) -> (i32, i32) {
    %c0_i32 = arith.constant 0 : i32
    return %arg0, %arg1 : i32, i32
  }
}

module attributes {stable_mosaic.version = 11 : i64} {
  func.func @matmul_bias_kernel(%arg0: i32, %arg1: i32, %arg2: memref<128x640xbf16, #tpu.memory_space<vmem>>, %arg3: memref<640x64xbf16, #tpu.memory_space<vmem>>, %arg4: memref<1x64xf32, #tpu.memory_space<vmem>>, %arg5: memref<128x64xbf16, #tpu.memory_space<vmem>>) attributes {dimension_semantics = [#tpu.dimension_semantics<parallel>, #tpu.dimension_semantics<parallel>], iteration_bounds = array<i64: 1, 1>, scalar_prefetch = 0 : i64, scratch_operands = 0 : i64, tpu.core_type = #tpu.core_type<tc>, window_params = [{transform_indices = @transform_0, window_bounds = array<i64: 128, 640>}, {transform_indices = @transform_1, window_bounds = array<i64: 640, 64>}, {transform_indices = @transform_2, window_bounds = array<i64: 1, 64>}, {transform_indices = @transform_3, window_bounds = array<i64: 128, 64>}]} {
    %c0 = arith.constant 0 : index
    %c0_0 = arith.constant 0 : index
    %0 = vector.load %arg2[%c0, %c0_0] : memref<128x640xbf16, #tpu.memory_space<vmem>>, vector<128x640xbf16>
    %c0_1 = arith.constant 0 : index
    %c0_2 = arith.constant 0 : index
    %1 = vector.load %arg3[%c0_1, %c0_2] : memref<640x64xbf16, #tpu.memory_space<vmem>>, vector<640x64xbf16>
    %cst = arith.constant dense<0.000000e+00> : vector<128x64xf32>
    %2 = tpu.matmul %0, %1, %cst {dimension_numbers = #tpu.dot_dimension_numbers<[1], [0], [0], [1], [0, 0, 1, 1], [], []>} : vector<128x640xbf16>, vector<640x64xbf16>, vector<128x64xf32> -> vector<128x64xf32>
    %c0_3 = arith.constant 0 : index
    %c0_4 = arith.constant 0 : index
    %3 = vector.load %arg4[%c0_3, %c0_4] : memref<1x64xf32, #tpu.memory_space<vmem>>, vector<1x64xf32>
    %4 = vector.broadcast %3 : vector<1x64xf32> to vector<128x64xf32>
    %5 = arith.addf %2, %4 : vector<128x64xf32>
    %cst_5 = arith.constant 0.000000e+00 : f32
    %6 = vector.broadcast %cst_5 : f32 to vector<128x64xf32>
    %7 = arith.maximumf %5, %6 : vector<128x64xf32>
    %8 = arith.truncf %7 : vector<128x64xf32> to vector<128x64xbf16>
    %c0_6 = arith.constant 0 : index
    %c0_7 = arith.constant 0 : index
    %9 = vector.load %arg5[%c0_6, %c0_7] : memref<128x64xbf16, #tpu.memory_space<vmem>>, vector<128x64xbf16>
    tpu.vector_store %arg5[%c0_6, %c0_7], %8 {strides = array<i32>} : memref<128x64xbf16, #tpu.memory_space<vmem>>, vector<128x64xbf16>,
    return
  }
  func.func @transform_0(%arg0: i32, %arg1: i32) -> (i32, i32) {
    %c0_i32 = arith.constant 0 : i32
    %c0_i32_0 = arith.constant 0 : i32
    return %arg0, %c0_i32 : i32, i32
  }
  func.func @transform_1(%arg0: i32, %arg1: i32) -> (i32, i32) {
    %c0_i32 = arith.constant 0 : i32
    %c0_i32_0 = arith.constant 0 : i32
    return %c0_i32, %arg1 : i32, i32
  }
  func.func @transform_2(%arg0: i32, %arg1: i32) -> (i32, i32) {
    %c0_i32 = arith.constant 0 : i32
    %c0_i32_0 = arith.constant 0 : i32
    return %c0_i32, %arg1 : i32, i32
  }
  func.func @transform_3(%arg0: i32, %arg1: i32) -> (i32, i32) {
    %c0_i32 = arith.constant 0 : i32
    return %arg0, %arg1 : i32, i32
  }
}

module attributes {stable_mosaic.version = 11 : i64} {
  func.func @matmul_bias_kernel(%arg0: i32, %arg1: i32, %arg2: memref<128x128xbf16, #tpu.memory_space<vmem>>, %arg3: memref<128x256xbf16, #tpu.memory_space<vmem>>, %arg4: memref<1x256xf32, #tpu.memory_space<vmem>>, %arg5: memref<128x256xbf16, #tpu.memory_space<vmem>>) attributes {dimension_semantics = [#tpu.dimension_semantics<parallel>, #tpu.dimension_semantics<parallel>], iteration_bounds = array<i64: 1, 1>, scalar_prefetch = 0 : i64, scratch_operands = 0 : i64, tpu.core_type = #tpu.core_type<tc>, window_params = [{transform_indices = @transform_0, window_bounds = array<i64: 128, 128>}, {transform_indices = @transform_1, window_bounds = array<i64: 128, 256>}, {transform_indices = @transform_2, window_bounds = array<i64: 1, 256>}, {transform_indices = @transform_3, window_bounds = array<i64: 128, 256>}]} {
    %c0 = arith.constant 0 : index
    %c0_0 = arith.constant 0 : index
    %0 = vector.load %arg2[%c0, %c0_0] : memref<128x128xbf16, #tpu.memory_space<vmem>>, vector<128x128xbf16>
    %c0_1 = arith.constant 0 : index
    %c0_2 = arith.constant 0 : index
    %1 = vector.load %arg3[%c0_1, %c0_2] : memref<128x256xbf16, #tpu.memory_space<vmem>>, vector<128x256xbf16>
    %cst = arith.constant dense<0.000000e+00> : vector<128x256xf32>
    %2 = tpu.matmul %0, %1, %cst {dimension_numbers = #tpu.dot_dimension_numbers<[1], [0], [0], [1], [0, 0, 1, 1], [], []>} : vector<128x128xbf16>, vector<128x256xbf16>, vector<128x256xf32> -> vector<128x256xf32>
    %c0_3 = arith.constant 0 : index
    %c0_4 = arith.constant 0 : index
    %3 = vector.load %arg4[%c0_3, %c0_4] : memref<1x256xf32, #tpu.memory_space<vmem>>, vector<1x256xf32>
    %4 = vector.broadcast %3 : vector<1x256xf32> to vector<128x256xf32>
    %5 = arith.addf %2, %4 : vector<128x256xf32>
    %6 = arith.truncf %5 : vector<128x256xf32> to vector<128x256xbf16>
    %c0_5 = arith.constant 0 : index
    %c0_6 = arith.constant 0 : index
    %7 = vector.load %arg5[%c0_5, %c0_6] : memref<128x256xbf16, #tpu.memory_space<vmem>>, vector<128x256xbf16>
    tpu.vector_store %arg5[%c0_5, %c0_6], %6 {strides = array<i32>} : memref<128x256xbf16, #tpu.memory_space<vmem>>, vector<128x256xbf16>,
    return
  }
  func.func @transform_0(%arg0: i32, %arg1: i32) -> (i32, i32) {
    %c0_i32 = arith.constant 0 : i32
    %c0_i32_0 = arith.constant 0 : i32
    return %arg0, %c0_i32 : i32, i32
  }
  func.func @transform_1(%arg0: i32, %arg1: i32) -> (i32, i32) {
    %c0_i32 = arith.constant 0 : i32
    %c0_i32_0 = arith.constant 0 : i32
    return %c0_i32, %arg1 : i32, i32
  }
  func.func @transform_2(%arg0: i32, %arg1: i32) -> (i32, i32) {
    %c0_i32 = arith.constant 0 : i32
    %c0_i32_0 = arith.constant 0 : i32
    return %c0_i32, %arg1 : i32, i32
  }
  func.func @transform_3(%arg0: i32, %arg1: i32) -> (i32, i32) {
    %c0_i32 = arith.constant 0 : i32
    return %arg0, %arg1 : i32, i32
  }
}

module attributes {stable_mosaic.version = 11 : i64} {
  func.func @matmul_bias_res_kernel(%arg0: i32, %arg1: i32, %arg2: memref<128x128xbf16, #tpu.memory_space<vmem>>, %arg3: memref<128x256xbf16, #tpu.memory_space<vmem>>, %arg4: memref<1x256xf32, #tpu.memory_space<vmem>>, %arg5: memref<128x256xbf16, #tpu.memory_space<vmem>>, %arg6: memref<128x256xbf16, #tpu.memory_space<vmem>>) attributes {dimension_semantics = [#tpu.dimension_semantics<parallel>, #tpu.dimension_semantics<parallel>], iteration_bounds = array<i64: 1, 1>, scalar_prefetch = 0 : i64, scratch_operands = 0 : i64, tpu.core_type = #tpu.core_type<tc>, window_params = [{transform_indices = @transform_0, window_bounds = array<i64: 128, 128>}, {transform_indices = @transform_1, window_bounds = array<i64: 128, 256>}, {transform_indices = @transform_2, window_bounds = array<i64: 1, 256>}, {transform_indices = @transform_3, window_bounds = array<i64: 128, 256>}, {transform_indices = @transform_4, window_bounds = array<i64: 128, 256>}]} {
    %c0 = arith.constant 0 : index
    %c0_0 = arith.constant 0 : index
    %0 = vector.load %arg2[%c0, %c0_0] : memref<128x128xbf16, #tpu.memory_space<vmem>>, vector<128x128xbf16>
    %c0_1 = arith.constant 0 : index
    %c0_2 = arith.constant 0 : index
    %1 = vector.load %arg3[%c0_1, %c0_2] : memref<128x256xbf16, #tpu.memory_space<vmem>>, vector<128x256xbf16>
    %cst = arith.constant dense<0.000000e+00> : vector<128x256xf32>
    %2 = tpu.matmul %0, %1, %cst {dimension_numbers = #tpu.dot_dimension_numbers<[1], [0], [0], [1], [0, 0, 1, 1], [], []>} : vector<128x128xbf16>, vector<128x256xbf16>, vector<128x256xf32> -> vector<128x256xf32>
    %c0_3 = arith.constant 0 : index
    %c0_4 = arith.constant 0 : index
    %3 = vector.load %arg4[%c0_3, %c0_4] : memref<1x256xf32, #tpu.memory_space<vmem>>, vector<1x256xf32>
    %4 = vector.broadcast %3 : vector<1x256xf32> to vector<128x256xf32>
    %5 = arith.addf %2, %4 : vector<128x256xf32>
    %c0_5 = arith.constant 0 : index
    %c0_6 = arith.constant 0 : index
    %6 = vector.load %arg5[%c0_5, %c0_6] : memref<128x256xbf16, #tpu.memory_space<vmem>>, vector<128x256xbf16>
    %7 = arith.extf %6 : vector<128x256xbf16> to vector<128x256xf32>
    %8 = arith.addf %5, %7 : vector<128x256xf32>
    %cst_7 = arith.constant 0.000000e+00 : f32
    %9 = vector.broadcast %cst_7 : f32 to vector<128x256xf32>
    %10 = arith.maximumf %8, %9 : vector<128x256xf32>
    %11 = arith.truncf %10 : vector<128x256xf32> to vector<128x256xbf16>
    %c0_8 = arith.constant 0 : index
    %c0_9 = arith.constant 0 : index
    %12 = vector.load %arg6[%c0_8, %c0_9] : memref<128x256xbf16, #tpu.memory_space<vmem>>, vector<128x256xbf16>
    tpu.vector_store %arg6[%c0_8, %c0_9], %11 {strides = array<i32>} : memref<128x256xbf16, #tpu.memory_space<vmem>>, vector<128x256xbf16>,
    return
  }
  func.func @transform_0(%arg0: i32, %arg1: i32) -> (i32, i32) {
    %c0_i32 = arith.constant 0 : i32
    %c0_i32_0 = arith.constant 0 : i32
    return %arg0, %c0_i32 : i32, i32
  }
  func.func @transform_1(%arg0: i32, %arg1: i32) -> (i32, i32) {
    %c0_i32 = arith.constant 0 : i32
    %c0_i32_0 = arith.constant 0 : i32
    return %c0_i32, %arg1 : i32, i32
  }
  func.func @transform_2(%arg0: i32, %arg1: i32) -> (i32, i32) {
    %c0_i32 = arith.constant 0 : i32
    %c0_i32_0 = arith.constant 0 : i32
    return %c0_i32, %arg1 : i32, i32
  }
  func.func @transform_3(%arg0: i32, %arg1: i32) -> (i32, i32) {
    %c0_i32 = arith.constant 0 : i32
    return %arg0, %arg1 : i32, i32
  }
  func.func @transform_4(%arg0: i32, %arg1: i32) -> (i32, i32) {
    %c0_i32 = arith.constant 0 : i32
    return %arg0, %arg1 : i32, i32
  }
}

module attributes {stable_mosaic.version = 11 : i64} {
  func.func @matmul_bias_kernel(%arg0: i32, %arg1: i32, %arg2: memref<128x256xbf16, #tpu.memory_space<vmem>>, %arg3: memref<256x64xbf16, #tpu.memory_space<vmem>>, %arg4: memref<1x64xf32, #tpu.memory_space<vmem>>, %arg5: memref<128x64xbf16, #tpu.memory_space<vmem>>) attributes {dimension_semantics = [#tpu.dimension_semantics<parallel>, #tpu.dimension_semantics<parallel>], iteration_bounds = array<i64: 1, 1>, scalar_prefetch = 0 : i64, scratch_operands = 0 : i64, tpu.core_type = #tpu.core_type<tc>, window_params = [{transform_indices = @transform_0, window_bounds = array<i64: 128, 256>}, {transform_indices = @transform_1, window_bounds = array<i64: 256, 64>}, {transform_indices = @transform_2, window_bounds = array<i64: 1, 64>}, {transform_indices = @transform_3, window_bounds = array<i64: 128, 64>}]} {
    %c0 = arith.constant 0 : index
    %c0_0 = arith.constant 0 : index
    %0 = vector.load %arg2[%c0, %c0_0] : memref<128x256xbf16, #tpu.memory_space<vmem>>, vector<128x256xbf16>
    %c0_1 = arith.constant 0 : index
    %c0_2 = arith.constant 0 : index
    %1 = vector.load %arg3[%c0_1, %c0_2] : memref<256x64xbf16, #tpu.memory_space<vmem>>, vector<256x64xbf16>
    %cst = arith.constant dense<0.000000e+00> : vector<128x64xf32>
    %2 = tpu.matmul %0, %1, %cst {dimension_numbers = #tpu.dot_dimension_numbers<[1], [0], [0], [1], [0, 0, 1, 1], [], []>} : vector<128x256xbf16>, vector<256x64xbf16>, vector<128x64xf32> -> vector<128x64xf32>
    %c0_3 = arith.constant 0 : index
    %c0_4 = arith.constant 0 : index
    %3 = vector.load %arg4[%c0_3, %c0_4] : memref<1x64xf32, #tpu.memory_space<vmem>>, vector<1x64xf32>
    %4 = vector.broadcast %3 : vector<1x64xf32> to vector<128x64xf32>
    %5 = arith.addf %2, %4 : vector<128x64xf32>
    %cst_5 = arith.constant 0.000000e+00 : f32
    %6 = vector.broadcast %cst_5 : f32 to vector<128x64xf32>
    %7 = arith.maximumf %5, %6 : vector<128x64xf32>
    %8 = arith.truncf %7 : vector<128x64xf32> to vector<128x64xbf16>
    %c0_6 = arith.constant 0 : index
    %c0_7 = arith.constant 0 : index
    %9 = vector.load %arg5[%c0_6, %c0_7] : memref<128x64xbf16, #tpu.memory_space<vmem>>, vector<128x64xbf16>
    tpu.vector_store %arg5[%c0_6, %c0_7], %8 {strides = array<i32>} : memref<128x64xbf16, #tpu.memory_space<vmem>>, vector<128x64xbf16>,
    return
  }
  func.func @transform_0(%arg0: i32, %arg1: i32) -> (i32, i32) {
    %c0_i32 = arith.constant 0 : i32
    %c0_i32_0 = arith.constant 0 : i32
    return %arg0, %c0_i32 : i32, i32
  }
  func.func @transform_1(%arg0: i32, %arg1: i32) -> (i32, i32) {
    %c0_i32 = arith.constant 0 : i32
    %c0_i32_0 = arith.constant 0 : i32
    return %c0_i32, %arg1 : i32, i32
  }
  func.func @transform_2(%arg0: i32, %arg1: i32) -> (i32, i32) {
    %c0_i32 = arith.constant 0 : i32
    %c0_i32_0 = arith.constant 0 : i32
    return %c0_i32, %arg1 : i32, i32
  }
  func.func @transform_3(%arg0: i32, %arg1: i32) -> (i32, i32) {
    %c0_i32 = arith.constant 0 : i32
    return %arg0, %arg1 : i32, i32
  }
}

module attributes {stable_mosaic.version = 11 : i64} {
  func.func @matmul_bias_kernel(%arg0: i32, %arg1: i32, %arg2: memref<128x256xbf16, #tpu.memory_space<vmem>>, %arg3: memref<256x128xbf16, #tpu.memory_space<vmem>>, %arg4: memref<1x128xf32, #tpu.memory_space<vmem>>, %arg5: memref<128x128xbf16, #tpu.memory_space<vmem>>) attributes {dimension_semantics = [#tpu.dimension_semantics<parallel>, #tpu.dimension_semantics<parallel>], iteration_bounds = array<i64: 1, 1>, scalar_prefetch = 0 : i64, scratch_operands = 0 : i64, tpu.core_type = #tpu.core_type<tc>, window_params = [{transform_indices = @transform_0, window_bounds = array<i64: 128, 256>}, {transform_indices = @transform_1, window_bounds = array<i64: 256, 128>}, {transform_indices = @transform_2, window_bounds = array<i64: 1, 128>}, {transform_indices = @transform_3, window_bounds = array<i64: 128, 128>}]} {
    %c0 = arith.constant 0 : index
    %c0_0 = arith.constant 0 : index
    %0 = vector.load %arg2[%c0, %c0_0] : memref<128x256xbf16, #tpu.memory_space<vmem>>, vector<128x256xbf16>
    %c0_1 = arith.constant 0 : index
    %c0_2 = arith.constant 0 : index
    %1 = vector.load %arg3[%c0_1, %c0_2] : memref<256x128xbf16, #tpu.memory_space<vmem>>, vector<256x128xbf16>
    %cst = arith.constant dense<0.000000e+00> : vector<128x128xf32>
    %2 = tpu.matmul %0, %1, %cst {dimension_numbers = #tpu.dot_dimension_numbers<[1], [0], [0], [1], [0, 0, 1, 1], [], []>} : vector<128x256xbf16>, vector<256x128xbf16>, vector<128x128xf32> -> vector<128x128xf32>
    %c0_3 = arith.constant 0 : index
    %c0_4 = arith.constant 0 : index
    %3 = vector.load %arg4[%c0_3, %c0_4] : memref<1x128xf32, #tpu.memory_space<vmem>>, vector<1x128xf32>
    %4 = vector.broadcast %3 : vector<1x128xf32> to vector<128x128xf32>
    %5 = arith.addf %2, %4 : vector<128x128xf32>
    %cst_5 = arith.constant 0.000000e+00 : f32
    %6 = vector.broadcast %cst_5 : f32 to vector<128x128xf32>
    %7 = arith.maximumf %5, %6 : vector<128x128xf32>
    %8 = arith.truncf %7 : vector<128x128xf32> to vector<128x128xbf16>
    %c0_6 = arith.constant 0 : index
    %c0_7 = arith.constant 0 : index
    %9 = vector.load %arg5[%c0_6, %c0_7] : memref<128x128xbf16, #tpu.memory_space<vmem>>, vector<128x128xbf16>
    tpu.vector_store %arg5[%c0_6, %c0_7], %8 {strides = array<i32>} : memref<128x128xbf16, #tpu.memory_space<vmem>>, vector<128x128xbf16>,
    return
  }
  func.func @transform_0(%arg0: i32, %arg1: i32) -> (i32, i32) {
    %c0_i32 = arith.constant 0 : i32
    %c0_i32_0 = arith.constant 0 : i32
    return %arg0, %c0_i32 : i32, i32
  }
  func.func @transform_1(%arg0: i32, %arg1: i32) -> (i32, i32) {
    %c0_i32 = arith.constant 0 : i32
    %c0_i32_0 = arith.constant 0 : i32
    return %c0_i32, %arg1 : i32, i32
  }
  func.func @transform_2(%arg0: i32, %arg1: i32) -> (i32, i32) {
    %c0_i32 = arith.constant 0 : i32
    %c0_i32_0 = arith.constant 0 : i32
    return %c0_i32, %arg1 : i32, i32
  }
  func.func @transform_3(%arg0: i32, %arg1: i32) -> (i32, i32) {
    %c0_i32 = arith.constant 0 : i32
    return %arg0, %arg1 : i32, i32
  }
}

module attributes {stable_mosaic.version = 11 : i64} {
  func.func @matmul_bias_kernel(%arg0: i32, %arg1: i32, %arg2: memref<32x1152xbf16, #tpu.memory_space<vmem>>, %arg3: memref<1152x128xbf16, #tpu.memory_space<vmem>>, %arg4: memref<1x128xf32, #tpu.memory_space<vmem>>, %arg5: memref<32x128xbf16, #tpu.memory_space<vmem>>) attributes {dimension_semantics = [#tpu.dimension_semantics<parallel>, #tpu.dimension_semantics<parallel>], iteration_bounds = array<i64: 1, 1>, scalar_prefetch = 0 : i64, scratch_operands = 0 : i64, tpu.core_type = #tpu.core_type<tc>, window_params = [{transform_indices = @transform_0, window_bounds = array<i64: 32, 1152>}, {transform_indices = @transform_1, window_bounds = array<i64: 1152, 128>}, {transform_indices = @transform_2, window_bounds = array<i64: 1, 128>}, {transform_indices = @transform_3, window_bounds = array<i64: 32, 128>}]} {
    %c0 = arith.constant 0 : index
    %c0_0 = arith.constant 0 : index
    %0 = vector.load %arg2[%c0, %c0_0] : memref<32x1152xbf16, #tpu.memory_space<vmem>>, vector<32x1152xbf16>
    %c0_1 = arith.constant 0 : index
    %c0_2 = arith.constant 0 : index
    %1 = vector.load %arg3[%c0_1, %c0_2] : memref<1152x128xbf16, #tpu.memory_space<vmem>>, vector<1152x128xbf16>
    %cst = arith.constant dense<0.000000e+00> : vector<32x128xf32>
    %2 = tpu.matmul %0, %1, %cst {dimension_numbers = #tpu.dot_dimension_numbers<[1], [0], [0], [1], [0, 0, 1, 1], [], []>} : vector<32x1152xbf16>, vector<1152x128xbf16>, vector<32x128xf32> -> vector<32x128xf32>
    %c0_3 = arith.constant 0 : index
    %c0_4 = arith.constant 0 : index
    %3 = vector.load %arg4[%c0_3, %c0_4] : memref<1x128xf32, #tpu.memory_space<vmem>>, vector<1x128xf32>
    %4 = vector.broadcast %3 : vector<1x128xf32> to vector<32x128xf32>
    %5 = arith.addf %2, %4 : vector<32x128xf32>
    %cst_5 = arith.constant 0.000000e+00 : f32
    %6 = vector.broadcast %cst_5 : f32 to vector<32x128xf32>
    %7 = arith.maximumf %5, %6 : vector<32x128xf32>
    %8 = arith.truncf %7 : vector<32x128xf32> to vector<32x128xbf16>
    %c0_6 = arith.constant 0 : index
    %c0_7 = arith.constant 0 : index
    %9 = vector.load %arg5[%c0_6, %c0_7] : memref<32x128xbf16, #tpu.memory_space<vmem>>, vector<32x128xbf16>
    tpu.vector_store %arg5[%c0_6, %c0_7], %8 {strides = array<i32>} : memref<32x128xbf16, #tpu.memory_space<vmem>>, vector<32x128xbf16>,
    return
  }
  func.func @transform_0(%arg0: i32, %arg1: i32) -> (i32, i32) {
    %c0_i32 = arith.constant 0 : i32
    %c0_i32_0 = arith.constant 0 : i32
    return %arg0, %c0_i32 : i32, i32
  }
  func.func @transform_1(%arg0: i32, %arg1: i32) -> (i32, i32) {
    %c0_i32 = arith.constant 0 : i32
    %c0_i32_0 = arith.constant 0 : i32
    return %c0_i32, %arg1 : i32, i32
  }
  func.func @transform_2(%arg0: i32, %arg1: i32) -> (i32, i32) {
    %c0_i32 = arith.constant 0 : i32
    %c0_i32_0 = arith.constant 0 : i32
    return %c0_i32, %arg1 : i32, i32
  }
  func.func @transform_3(%arg0: i32, %arg1: i32) -> (i32, i32) {
    %c0_i32 = arith.constant 0 : i32
    return %arg0, %arg1 : i32, i32
  }
}

module attributes {stable_mosaic.version = 11 : i64} {
  func.func @matmul_bias_kernel(%arg0: i32, %arg1: i32, %arg2: memref<32x256xbf16, #tpu.memory_space<vmem>>, %arg3: memref<256x512xbf16, #tpu.memory_space<vmem>>, %arg4: memref<1x512xf32, #tpu.memory_space<vmem>>, %arg5: memref<32x512xbf16, #tpu.memory_space<vmem>>) attributes {dimension_semantics = [#tpu.dimension_semantics<parallel>, #tpu.dimension_semantics<parallel>], iteration_bounds = array<i64: 1, 1>, scalar_prefetch = 0 : i64, scratch_operands = 0 : i64, tpu.core_type = #tpu.core_type<tc>, window_params = [{transform_indices = @transform_0, window_bounds = array<i64: 32, 256>}, {transform_indices = @transform_1, window_bounds = array<i64: 256, 512>}, {transform_indices = @transform_2, window_bounds = array<i64: 1, 512>}, {transform_indices = @transform_3, window_bounds = array<i64: 32, 512>}]} {
    %c0 = arith.constant 0 : index
    %c0_0 = arith.constant 0 : index
    %0 = vector.load %arg2[%c0, %c0_0] : memref<32x256xbf16, #tpu.memory_space<vmem>>, vector<32x256xbf16>
    %c0_1 = arith.constant 0 : index
    %c0_2 = arith.constant 0 : index
    %1 = vector.load %arg3[%c0_1, %c0_2] : memref<256x512xbf16, #tpu.memory_space<vmem>>, vector<256x512xbf16>
    %cst = arith.constant dense<0.000000e+00> : vector<32x512xf32>
    %2 = tpu.matmul %0, %1, %cst {dimension_numbers = #tpu.dot_dimension_numbers<[1], [0], [0], [1], [0, 0, 1, 1], [], []>} : vector<32x256xbf16>, vector<256x512xbf16>, vector<32x512xf32> -> vector<32x512xf32>
    %c0_3 = arith.constant 0 : index
    %c0_4 = arith.constant 0 : index
    %3 = vector.load %arg4[%c0_3, %c0_4] : memref<1x512xf32, #tpu.memory_space<vmem>>, vector<1x512xf32>
    %4 = vector.broadcast %3 : vector<1x512xf32> to vector<32x512xf32>
    %5 = arith.addf %2, %4 : vector<32x512xf32>
    %6 = arith.truncf %5 : vector<32x512xf32> to vector<32x512xbf16>
    %c0_5 = arith.constant 0 : index
    %c0_6 = arith.constant 0 : index
    %7 = vector.load %arg5[%c0_5, %c0_6] : memref<32x512xbf16, #tpu.memory_space<vmem>>, vector<32x512xbf16>
    tpu.vector_store %arg5[%c0_5, %c0_6], %6 {strides = array<i32>} : memref<32x512xbf16, #tpu.memory_space<vmem>>, vector<32x512xbf16>,
    return
  }
  func.func @transform_0(%arg0: i32, %arg1: i32) -> (i32, i32) {
    %c0_i32 = arith.constant 0 : i32
    %c0_i32_0 = arith.constant 0 : i32
    return %arg0, %c0_i32 : i32, i32
  }
  func.func @transform_1(%arg0: i32, %arg1: i32) -> (i32, i32) {
    %c0_i32 = arith.constant 0 : i32
    %c0_i32_0 = arith.constant 0 : i32
    return %c0_i32, %arg1 : i32, i32
  }
  func.func @transform_2(%arg0: i32, %arg1: i32) -> (i32, i32) {
    %c0_i32 = arith.constant 0 : i32
    %c0_i32_0 = arith.constant 0 : i32
    return %c0_i32, %arg1 : i32, i32
  }
  func.func @transform_3(%arg0: i32, %arg1: i32) -> (i32, i32) {
    %c0_i32 = arith.constant 0 : i32
    return %arg0, %arg1 : i32, i32
  }
}

module attributes {stable_mosaic.version = 11 : i64} {
  func.func @matmul_bias_res_kernel(%arg0: i32, %arg1: i32, %arg2: memref<32x128xbf16, #tpu.memory_space<vmem>>, %arg3: memref<128x512xbf16, #tpu.memory_space<vmem>>, %arg4: memref<1x512xf32, #tpu.memory_space<vmem>>, %arg5: memref<32x512xbf16, #tpu.memory_space<vmem>>, %arg6: memref<32x512xbf16, #tpu.memory_space<vmem>>) attributes {dimension_semantics = [#tpu.dimension_semantics<parallel>, #tpu.dimension_semantics<parallel>], iteration_bounds = array<i64: 1, 1>, scalar_prefetch = 0 : i64, scratch_operands = 0 : i64, tpu.core_type = #tpu.core_type<tc>, window_params = [{transform_indices = @transform_0, window_bounds = array<i64: 32, 128>}, {transform_indices = @transform_1, window_bounds = array<i64: 128, 512>}, {transform_indices = @transform_2, window_bounds = array<i64: 1, 512>}, {transform_indices = @transform_3, window_bounds = array<i64: 32, 512>}, {transform_indices = @transform_4, window_bounds = array<i64: 32, 512>}]} {
    %c0 = arith.constant 0 : index
    %c0_0 = arith.constant 0 : index
    %0 = vector.load %arg2[%c0, %c0_0] : memref<32x128xbf16, #tpu.memory_space<vmem>>, vector<32x128xbf16>
    %c0_1 = arith.constant 0 : index
    %c0_2 = arith.constant 0 : index
    %1 = vector.load %arg3[%c0_1, %c0_2] : memref<128x512xbf16, #tpu.memory_space<vmem>>, vector<128x512xbf16>
    %cst = arith.constant dense<0.000000e+00> : vector<32x512xf32>
    %2 = tpu.matmul %0, %1, %cst {dimension_numbers = #tpu.dot_dimension_numbers<[1], [0], [0], [1], [0, 0, 1, 1], [], []>} : vector<32x128xbf16>, vector<128x512xbf16>, vector<32x512xf32> -> vector<32x512xf32>
    %c0_3 = arith.constant 0 : index
    %c0_4 = arith.constant 0 : index
    %3 = vector.load %arg4[%c0_3, %c0_4] : memref<1x512xf32, #tpu.memory_space<vmem>>, vector<1x512xf32>
    %4 = vector.broadcast %3 : vector<1x512xf32> to vector<32x512xf32>
    %5 = arith.addf %2, %4 : vector<32x512xf32>
    %c0_5 = arith.constant 0 : index
    %c0_6 = arith.constant 0 : index
    %6 = vector.load %arg5[%c0_5, %c0_6] : memref<32x512xbf16, #tpu.memory_space<vmem>>, vector<32x512xbf16>
    %7 = arith.extf %6 : vector<32x512xbf16> to vector<32x512xf32>
    %8 = arith.addf %5, %7 : vector<32x512xf32>
    %cst_7 = arith.constant 0.000000e+00 : f32
    %9 = vector.broadcast %cst_7 : f32 to vector<32x512xf32>
    %10 = arith.maximumf %8, %9 : vector<32x512xf32>
    %11 = arith.truncf %10 : vector<32x512xf32> to vector<32x512xbf16>
    %c0_8 = arith.constant 0 : index
    %c0_9 = arith.constant 0 : index
    %12 = vector.load %arg6[%c0_8, %c0_9] : memref<32x512xbf16, #tpu.memory_space<vmem>>, vector<32x512xbf16>
    tpu.vector_store %arg6[%c0_8, %c0_9], %11 {strides = array<i32>} : memref<32x512xbf16, #tpu.memory_space<vmem>>, vector<32x512xbf16>,
    return
  }
  func.func @transform_0(%arg0: i32, %arg1: i32) -> (i32, i32) {
    %c0_i32 = arith.constant 0 : i32
    %c0_i32_0 = arith.constant 0 : i32
    return %arg0, %c0_i32 : i32, i32
  }
  func.func @transform_1(%arg0: i32, %arg1: i32) -> (i32, i32) {
    %c0_i32 = arith.constant 0 : i32
    %c0_i32_0 = arith.constant 0 : i32
    return %c0_i32, %arg1 : i32, i32
  }
  func.func @transform_2(%arg0: i32, %arg1: i32) -> (i32, i32) {
    %c0_i32 = arith.constant 0 : i32
    %c0_i32_0 = arith.constant 0 : i32
    return %c0_i32, %arg1 : i32, i32
  }
  func.func @transform_3(%arg0: i32, %arg1: i32) -> (i32, i32) {
    %c0_i32 = arith.constant 0 : i32
    return %arg0, %arg1 : i32, i32
  }
  func.func @transform_4(%arg0: i32, %arg1: i32) -> (i32, i32) {
    %c0_i32 = arith.constant 0 : i32
    return %arg0, %arg1 : i32, i32
  }
}

module attributes {stable_mosaic.version = 11 : i64} {
  func.func @matmul_bias_kernel(%arg0: i32, %arg1: i32, %arg2: memref<32x512xbf16, #tpu.memory_space<vmem>>, %arg3: memref<512x128xbf16, #tpu.memory_space<vmem>>, %arg4: memref<1x128xf32, #tpu.memory_space<vmem>>, %arg5: memref<32x128xbf16, #tpu.memory_space<vmem>>) attributes {dimension_semantics = [#tpu.dimension_semantics<parallel>, #tpu.dimension_semantics<parallel>], iteration_bounds = array<i64: 1, 1>, scalar_prefetch = 0 : i64, scratch_operands = 0 : i64, tpu.core_type = #tpu.core_type<tc>, window_params = [{transform_indices = @transform_0, window_bounds = array<i64: 32, 512>}, {transform_indices = @transform_1, window_bounds = array<i64: 512, 128>}, {transform_indices = @transform_2, window_bounds = array<i64: 1, 128>}, {transform_indices = @transform_3, window_bounds = array<i64: 32, 128>}]} {
    %c0 = arith.constant 0 : index
    %c0_0 = arith.constant 0 : index
    %0 = vector.load %arg2[%c0, %c0_0] : memref<32x512xbf16, #tpu.memory_space<vmem>>, vector<32x512xbf16>
    %c0_1 = arith.constant 0 : index
    %c0_2 = arith.constant 0 : index
    %1 = vector.load %arg3[%c0_1, %c0_2] : memref<512x128xbf16, #tpu.memory_space<vmem>>, vector<512x128xbf16>
    %cst = arith.constant dense<0.000000e+00> : vector<32x128xf32>
    %2 = tpu.matmul %0, %1, %cst {dimension_numbers = #tpu.dot_dimension_numbers<[1], [0], [0], [1], [0, 0, 1, 1], [], []>} : vector<32x512xbf16>, vector<512x128xbf16>, vector<32x128xf32> -> vector<32x128xf32>
    %c0_3 = arith.constant 0 : index
    %c0_4 = arith.constant 0 : index
    %3 = vector.load %arg4[%c0_3, %c0_4] : memref<1x128xf32, #tpu.memory_space<vmem>>, vector<1x128xf32>
    %4 = vector.broadcast %3 : vector<1x128xf32> to vector<32x128xf32>
    %5 = arith.addf %2, %4 : vector<32x128xf32>
    %cst_5 = arith.constant 0.000000e+00 : f32
    %6 = vector.broadcast %cst_5 : f32 to vector<32x128xf32>
    %7 = arith.maximumf %5, %6 : vector<32x128xf32>
    %8 = arith.truncf %7 : vector<32x128xf32> to vector<32x128xbf16>
    %c0_6 = arith.constant 0 : index
    %c0_7 = arith.constant 0 : index
    %9 = vector.load %arg5[%c0_6, %c0_7] : memref<32x128xbf16, #tpu.memory_space<vmem>>, vector<32x128xbf16>
    tpu.vector_store %arg5[%c0_6, %c0_7], %8 {strides = array<i32>} : memref<32x128xbf16, #tpu.memory_space<vmem>>, vector<32x128xbf16>,
    return
  }
  func.func @transform_0(%arg0: i32, %arg1: i32) -> (i32, i32) {
    %c0_i32 = arith.constant 0 : i32
    %c0_i32_0 = arith.constant 0 : i32
    return %arg0, %c0_i32 : i32, i32
  }
  func.func @transform_1(%arg0: i32, %arg1: i32) -> (i32, i32) {
    %c0_i32 = arith.constant 0 : i32
    %c0_i32_0 = arith.constant 0 : i32
    return %c0_i32, %arg1 : i32, i32
  }
  func.func @transform_2(%arg0: i32, %arg1: i32) -> (i32, i32) {
    %c0_i32 = arith.constant 0 : i32
    %c0_i32_0 = arith.constant 0 : i32
    return %c0_i32, %arg1 : i32, i32
  }
  func.func @transform_3(%arg0: i32, %arg1: i32) -> (i32, i32) {
    %c0_i32 = arith.constant 0 : i32
    return %arg0, %arg1 : i32, i32
  }
}

</mosaic_0001>

<llo_original>
// kernel: _lambda_.17
$region0: #{_lambda_.17}
  #allocation0 [shape = 'u32[]', space=smem, size = 0x4, offset = 0x4, fixed_abs, tag = 'smem constant byte address 0x4 - core index']
  #allocation1 [shape = 'u32[144,128]{1,0:T(1,128)}', space=vmem, size = 0x12000, scoped, tag = 'internal scratch']
  %s0 = inlined_call_operand.vmem [shape: bf16[128,128], index: 0, kind: input, shape index: {}]
  %s1 = inlined_call_operand.vmem [shape: bf16[128,64], index: 1, kind: input, shape index: {}]
  %s2 = inlined_call_operand.vmem [shape: f32[1,64], index: 2, kind: input, shape index: {}]
  %s3 = inlined_call_operand.vmem [shape: bf16[128,64], index: 3, kind: output, shape index: {}]
  %s4 = sld [smem:[#allocation0]]
  $region22: #{_lambda_.17} parent=0
    _
  %s6 = ssub.s32 1, %s4
  %s7 = scalar_select 0, %s6, %s4
  // Predicated region
  $region2: #{_lambda_.17} parent=0 // pred_check
    _
  $region3: #{_lambda_.17} parent=0 // pred_check_branch
    %9 = sbr.rel (0) target = $region5
  $region4: #{_lambda_.17} parent=0 // pred_region
    _
  $region5: #{_lambda_.17} parent=0 // pred_fallthru
    _
  // Predicated region
  $region6: #{_lambda_.17} parent=0 // pred_check
    _
  $region7: #{_lambda_.17} parent=0 // pred_check_branch
    %11 = sbr.rel (0) target = $region9
  $region8: #{_lambda_.17} parent=0 // pred_region
    _
  $region9: #{_lambda_.17} parent=0 // pred_fallthru
    _
  // Predicated region
  $region10: #{_lambda_.17} parent=0 // pred_check
    _
  $region11: #{_lambda_.17} parent=0 // pred_check_branch
    %13 = sbr.rel (0) target = $region13
  $region12: #{_lambda_.17} parent=0 // pred_region
    _
  $region13: #{_lambda_.17} parent=0 // pred_fallthru
    _
  %v15 = vld [vmem:[%s0] sm:$0xf]
  %v16 = vld [vmem:[%s0 + $0x4] sm:$0xf]
  %v17 = vld [vmem:[%s0 + $0x8] sm:$0xf]
  %v18 = vld [vmem:[%s0 + $0xc] sm:$0xf]
  %v19 = vld [vmem:[%s0 + $0x10] sm:$0xf]
  %v20 = vld [vmem:[%s0 + $0x14] sm:$0xf]
  %v21 = vld [vmem:[%s0 + $0x18] sm:$0xf]
  %v22 = vld [vmem:[%s0 + $0x1c] sm:$0xf]
  %v23 = vld [vmem:[%s0 + $0x20] sm:$0xf]
  %v24 = vld [vmem:[%s0 + $0x24] sm:$0xf]
  %v25 = vld [vmem:[%s0 + $0x28] sm:$0xf]
  %v26 = vld [vmem:[%s0 + $0x2c] sm:$0xf]
  %v27 = vld [vmem:[%s0 + $0x30] sm:$0xf]
  %v28 = vld [vmem:[%s0 + $0x34] sm:$0xf]
  %v29 = vld [vmem:[%s0 + $0x38] sm:$0xf]
  %v30 = vld [vmem:[%s0 + $0x3c] sm:$0xf]
  %v31 = vld [vmem:[%s1] sm:$0xf]
  %v32 = vld [vmem:[%s1 + $0x4] sm:$0xf]
  %v33 = vld [vmem:[%s1 + $0x8] sm:$0xf]
  %v34 = vld [vmem:[%s1 + $0xc] sm:$0xf]
  %v35 = vld [vmem:[%s1 + $0x10] sm:$0xf]
  %v36 = vld [vmem:[%s1 + $0x14] sm:$0xf]
  %v37 = vld [vmem:[%s1 + $0x18] sm:$0xf]
  %v38 = vld [vmem:[%s1 + $0x1c] sm:$0xf]
  %v39 = vld [vmem:[%s1 + $0x20] sm:$0xf]
  %v40 = vld [vmem:[%s1 + $0x24] sm:$0xf]
  %v41 = vld [vmem:[%s1 + $0x28] sm:$0xf]
  %v42 = vld [vmem:[%s1 + $0x2c] sm:$0xf]
  %v43 = vld [vmem:[%s1 + $0x30] sm:$0xf]
  %v44 = vld [vmem:[%s1 + $0x34] sm:$0xf]
  %v45 = vld [vmem:[%s1 + $0x38] sm:$0xf]
  %v46 = vld [vmem:[%s1 + $0x3c] sm:$0xf]
  %v47 = vld [vmem:[%s2] sm:$0x1]
  %v49 = vlaneseq
  %v50 = vshrl.u32 %v49, 7
  %v51 = vsub.s32 0, %v50
  %v52 = vrot.slane %v47, %v51
  %v70 = vunpack.c.l.b16 %v15
  %v71 = vunpack.c.l.b16 %v16
  %v72 = vunpack.c.l.b16 %v17
  %v73 = vunpack.c.l.b16 %v18
  %v74 = vunpack.c.l.b16 %v19
  %v75 = vunpack.c.l.b16 %v20
  %v76 = vunpack.c.l.b16 %v21
  %v77 = vunpack.c.l.b16 %v22
  %v78 = vunpack.c.l.b16 %v23
  %v79 = vunpack.c.l.b16 %v24
  %v80 = vunpack.c.l.b16 %v25
  %v81 = vunpack.c.l.b16 %v26
  %v82 = vunpack.c.l.b16 %v27
  %v83 = vunpack.c.l.b16 %v28
  %v84 = vunpack.c.l.b16 %v29
  %v85 = vunpack.c.l.b16 %v30
  %v86 = vpack.c.b16 %v71, %v70
  %v87 = vpack.c.b16 %v73, %v72
  %v88 = vpack.c.b16 %v75, %v74
  %v89 = vpack.c.b16 %v77, %v76
  %v90 = vpack.c.b16 %v79, %v78
  %v91 = vpack.c.b16 %v81, %v80
  %v92 = vpack.c.b16 %v83, %v82
  %v93 = vpack.c.b16 %v85, %v84
  %v118 = vunpack.c.l.b16 %v31
  %v119 = vunpack.c.l.b16 %v32
  %v120 = vunpack.c.l.b16 %v33
  %v121 = vunpack.c.l.b16 %v34
  %v122 = vunpack.c.l.b16 %v35
  %v123 = vunpack.c.l.b16 %v36
  %v124 = vunpack.c.l.b16 %v37
  %v125 = vunpack.c.l.b16 %v38
  %v126 = vunpack.c.l.b16 %v39
  %v127 = vunpack.c.l.b16 %v40
  %v128 = vunpack.c.l.b16 %v41
  %v129 = vunpack.c.l.b16 %v42
  %v130 = vunpack.c.l.b16 %v43
  %v131 = vunpack.c.l.b16 %v44
  %v132 = vunpack.c.l.b16 %v45
  %v133 = vunpack.c.l.b16 %v46
  %v134 = vpack.c.b16 %v119, %v118
  %v135 = vpack.c.b16 %v121, %v120
  %v136 = vpack.c.b16 %v123, %v122
  %v137 = vpack.c.b16 %v125, %v124
  %v138 = vpack.c.b16 %v127, %v126
  %v139 = vpack.c.b16 %v129, %v128
  %v140 = vpack.c.b16 %v131, %v130
  %v141 = vpack.c.b16 %v133, %v132
  %150 = vmatprep.subr.bf16.mxu0 0
  %151 = vmatpush1.bf16.msra.mxu0 %v134
  %152 = vmatprep.subr.bf16.mxu0 0
  %153 = vmatpush1.bf16.msra.mxu0 %v135
  %154 = vmatprep.subr.bf16.mxu0 0
  %155 = vmatpush1.bf16.msra.mxu0 %v136
  %156 = vmatprep.subr.bf16.mxu0 0
  %157 = vmatpush1.bf16.msra.mxu0 %v137
  %158 = vmatprep.subr.bf16.mxu0 0
  %159 = vmatpush1.bf16.msra.mxu0 %v138
  %160 = vmatprep.subr.bf16.mxu0 0
  %161 = vmatpush1.bf16.msra.mxu0 %v139
  %162 = vmatprep.subr.bf16.mxu0 0
  %163 = vmatpush1.bf16.msra.mxu0 %v140
  %164 = vmatprep.subr.bf16.mxu0 0
  %165 = vmatpush1.bf16.msra.mxu0 %v141
  %166 = vmatprep.subr.bf16.mxu0 0
  %167 = vmatpush1.bf16.msra.mxu0 0
  %168 = vmatprep.subr.bf16.mxu0 0
  %169 = vmatpush1.bf16.msra.mxu0 0
  %170 = vmatprep.subr.bf16.mxu0 0
  %171 = vmatpush1.bf16.msra.mxu0 0
  %172 = vmatprep.subr.bf16.mxu0 0
  %173 = vmatpush1.bf16.msra.mxu0 0
  %174 = vmatprep.subr.bf16.mxu0 0
  %175 = vmatpush1.bf16.msra.mxu0 0
  %176 = vmatprep.subr.bf16.mxu0 0
  %177 = vmatpush1.bf16.msra.mxu0 0
  %178 = vmatprep.subr.bf16.mxu0 0
  %179 = vmatpush1.bf16.msra.mxu0 0
  %180 = vmatprep.subr.bf16.mxu0 0
  %181 = vmatpush1.bf16.msra.mxu0 0
  %182 = vmatprep.mubr.bf16.mxu0 0
  %183 = vmatmul.mubr.bf16.gmra.mrb[0].mxu0 %v86
  %v184 = vpop.f32.mrb[0].mxu0
  %v185 = vadd.f32 %v52, %v184
  %v186 = vpop.f32.mrb[0].mxu0
  %v187 = vpop.f32.mrb[0].mxu0
  %v188 = vadd.f32 %v52, %v187
  %v189 = vpop.f32.mrb[0].mxu0
  %190 = vmatprep.mubr.bf16.mxu0 0
  %191 = vmatmul.mubr.bf16.gmra.mrb[0].mxu0 %v87
  %v192 = vpop.f32.mrb[0].mxu0
  %v193 = vadd.f32 %v52, %v192
  %v194 = vpop.f32.mrb[0].mxu0
  %v195 = vpop.f32.mrb[0].mxu0
  %v196 = vadd.f32 %v52, %v195
  %v197 = vpop.f32.mrb[0].mxu0
  %198 = vmatprep.mubr.bf16.mxu0 0
  %199 = vmatmul.mubr.bf16.gmra.mrb[0].mxu0 %v88
  %v200 = vpop.f32.mrb[0].mxu0
  %v201 = vadd.f32 %v52, %v200
  %v202 = vpop.f32.mrb[0].mxu0
  %v203 = vpop.f32.mrb[0].mxu0
  %v204 = vadd.f32 %v52, %v203
  %v205 = vpop.f32.mrb[0].mxu0
  %206 = vmatprep.mubr.bf16.mxu0 0
  %207 = vmatmul.mubr.bf16.gmra.mrb[0].mxu0 %v89
  %v208 = vpop.f32.mrb[0].mxu0
  %v209 = vadd.f32 %v52, %v208
  %v210 = vpop.f32.mrb[0].mxu0
  %v211 = vpop.f32.mrb[0].mxu0
  %v212 = vadd.f32 %v52, %v211
  %v213 = vpop.f32.mrb[0].mxu0
  %214 = vmatprep.mubr.bf16.mxu0 0
  %215 = vmatmul.mubr.bf16.gmra.mrb[0].mxu0 %v90
  %v216 = vpop.f32.mrb[0].mxu0
  %v217 = vadd.f32 %v52, %v216
  %v218 = vpop.f32.mrb[0].mxu0
  %v219 = vpop.f32.mrb[0].mxu0
  %v220 = vadd.f32 %v52, %v219
  %v221 = vpop.f32.mrb[0].mxu0
  %222 = vmatprep.mubr.bf16.mxu0 0
  %223 = vmatmul.mubr.bf16.gmra.mrb[0].mxu0 %v91
  %v224 = vpop.f32.mrb[0].mxu0
  %v225 = vadd.f32 %v52, %v224
  %v226 = vpop.f32.mrb[0].mxu0
  %v227 = vpop.f32.mrb[0].mxu0
  %v228 = vadd.f32 %v52, %v227
  %v229 = vpop.f32.mrb[0].mxu0
  %230 = vmatprep.mubr.bf16.mxu0 0
  %231 = vmatmul.mubr.bf16.gmra.mrb[0].mxu0 %v92
  %v232 = vpop.f32.mrb[0].mxu0
  %v233 = vadd.f32 %v52, %v232
  %v234 = vpop.f32.mrb[0].mxu0
  %v235 = vpop.f32.mrb[0].mxu0
  %v236 = vadd.f32 %v52, %v235
  %v237 = vpop.f32.mrb[0].mxu0
  %238 = vmatprep.mubr.bf16.mxu0 0
  %239 = vmatmul.mubr.bf16.gmra.mrb[0].mxu0 %v93
  %v240 = vpop.f32.mrb[0].mxu0
  %v241 = vadd.f32 %v52, %v240
  %v242 = vpop.f32.mrb[0].mxu0
  %v243 = vpop.f32.mrb[0].mxu0
  %v244 = vadd.f32 %v52, %v243
  %v245 = vpop.f32.mrb[0].mxu0
  %246 = vdwg.mxu0
  %v247 = vmax.f32 %v185, 0.0
  %v248 = vmax.f32 %v188, 0.0
  %v249 = vmax.f32 %v193, 0.0
  %v250 = vmax.f32 %v196, 0.0
  %v251 = vmax.f32 %v201, 0.0
  %v252 = vmax.f32 %v204, 0.0
  %v253 = vmax.f32 %v209, 0.0
  %v254 = vmax.f32 %v212, 0.0
  %v255 = vmax.f32 %v217, 0.0
  %v256 = vmax.f32 %v220, 0.0
  %v257 = vmax.f32 %v225, 0.0
  %v258 = vmax.f32 %v228, 0.0
  %v259 = vmax.f32 %v233, 0.0
  %v260 = vmax.f32 %v236, 0.0
  %v261 = vmax.f32 %v241, 0.0
  %v262 = vmax.f32 %v244, 0.0
  %v263 = vpack.c.bf16 %v248, %v247
  %v264 = vpack.c.bf16 %v250, %v249
  %v265 = vpack.c.bf16 %v252, %v251
  %v266 = vpack.c.bf16 %v254, %v253
  %v267 = vpack.c.bf16 %v256, %v255
  %v268 = vpack.c.bf16 %v258, %v257
  %v269 = vpack.c.bf16 %v260, %v259
  %v270 = vpack.c.bf16 %v262, %v261
  %v279 = vunpack.c.l.b16 %v263
  %v280 = vunpack.c.h.b16 %v263
  %v281 = vunpack.c.l.b16 %v264
  %v282 = vunpack.c.h.b16 %v264
  %v283 = vunpack.c.l.b16 %v265
  %v284 = vunpack.c.h.b16 %v265
  %v285 = vunpack.c.l.b16 %v266
  %v286 = vunpack.c.h.b16 %v266
  %v287 = vunpack.c.l.b16 %v267
  %v288 = vunpack.c.h.b16 %v267
  %v289 = vunpack.c.l.b16 %v268
  %v290 = vunpack.c.h.b16 %v268
  %v291 = vunpack.c.l.b16 %v269
  %v292 = vunpack.c.h.b16 %v269
  %v293 = vunpack.c.l.b16 %v270
  %v294 = vunpack.c.h.b16 %v270
  %v295 = vpack.c.b16 %v279, %v279
  %v296 = vpack.c.b16 %v280, %v280
  %v297 = vpack.c.b16 %v281, %v281
  %v298 = vpack.c.b16 %v282, %v282
  %v299 = vpack.c.b16 %v283, %v283
  %v300 = vpack.c.b16 %v284, %v284
  %v301 = vpack.c.b16 %v285, %v285
  %v302 = vpack.c.b16 %v286, %v286
  %v303 = vpack.c.b16 %v287, %v287
  %v304 = vpack.c.b16 %v288, %v288
  %v305 = vpack.c.b16 %v289, %v289
  %v306 = vpack.c.b16 %v290, %v290
  %v307 = vpack.c.b16 %v291, %v291
  %v308 = vpack.c.b16 %v292, %v292
  %v309 = vpack.c.b16 %v293, %v293
  %v310 = vpack.c.b16 %v294, %v294
  %vm327 = vcmask 519168
  %328 = vst.msk [vmem:[%s3] sm:$0xf] %vm327, %v295
  %329 = vst.msk [vmem:[%s3 + $0x4] sm:$0xf] %vm327, %v296
  %330 = vst.msk [vmem:[%s3 + $0x8] sm:$0xf] %vm327, %v297
  %331 = vst.msk [vmem:[%s3 + $0xc] sm:$0xf] %vm327, %v298
  %332 = vst.msk [vmem:[%s3 + $0x10] sm:$0xf] %vm327, %v299
  %333 = vst.msk [vmem:[%s3 + $0x14] sm:$0xf] %vm327, %v300
  %334 = vst.msk [vmem:[%s3 + $0x18] sm:$0xf] %vm327, %v301
  %335 = vst.msk [vmem:[%s3 + $0x1c] sm:$0xf] %vm327, %v302
  %336 = vst.msk [vmem:[%s3 + $0x20] sm:$0xf] %vm327, %v303
  %337 = vst.msk [vmem:[%s3 + $0x24] sm:$0xf] %vm327, %v304
  %338 = vst.msk [vmem:[%s3 + $0x28] sm:$0xf] %vm327, %v305
  %339 = vst.msk [vmem:[%s3 + $0x2c] sm:$0xf] %vm327, %v306
  %340 = vst.msk [vmem:[%s3 + $0x30] sm:$0xf] %vm327, %v307
  %341 = vst.msk [vmem:[%s3 + $0x34] sm:$0xf] %vm327, %v308
  %342 = vst.msk [vmem:[%s3 + $0x38] sm:$0xf] %vm327, %v309
  %343 = vst.msk [vmem:[%s3 + $0x3c] sm:$0xf] %vm327, %v310
  // Predicated region
  $region14: #{_lambda_.17} parent=0 // pred_check
    _
  $region15: #{_lambda_.17} parent=0 // pred_check_branch
    %345 = sbr.rel (0) target = $region17
  $region16: #{_lambda_.17} parent=0 // pred_region
    _
  $region17: #{_lambda_.17} parent=0 // pred_fallthru
    _
  // Predicated region
  $region18: #{_lambda_.17} parent=0 // pred_check
    _
  $region19: #{_lambda_.17} parent=0 // pred_check_branch
    %347 = sbr.rel (0) target = $region21
  $region20: #{_lambda_.17} parent=0 // pred_region
    _
  $region21: #{_lambda_.17} parent=0 // pred_fallthru
    _

// kernel: _lambda_.15
$region0: #{_lambda_.15}
  #allocation0 [shape = 'u32[]', space=smem, size = 0x4, offset = 0x4, fixed_abs, tag = 'smem constant byte address 0x4 - core index']
  #allocation1 [shape = 'u32[144,128]{1,0:T(1,128)}', space=vmem, size = 0x12000, scoped, tag = 'internal scratch']
  %s0 = inlined_call_operand.vmem [shape: bf16[512,256], index: 0, kind: input, shape index: {}]
  %s1 = inlined_call_operand.vmem [shape: bf16[256,64], index: 1, kind: input, shape index: {}]
  %s2 = inlined_call_operand.vmem [shape: f32[1,64], index: 2, kind: input, shape index: {}]
  %s3 = inlined_call_operand.vmem [shape: bf16[512,64], index: 3, kind: output, shape index: {}]
  %s4 = sld [smem:[#allocation0]]
  $region22: #{_lambda_.15} parent=0
    _
  %s6 = ssub.s32 1, %s4
  %s7 = scalar_select 0, %s6, %s4
  // Predicated region
  $region2: #{_lambda_.15} parent=0 // pred_check
    _
  $region3: #{_lambda_.15} parent=0 // pred_check_branch
    %9 = sbr.rel (0) target = $region5
  $region4: #{_lambda_.15} parent=0 // pred_region
    _
  $region5: #{_lambda_.15} parent=0 // pred_fallthru
    _
  // Predicated region
  $region6: #{_lambda_.15} parent=0 // pred_check
    _
  $region7: #{_lambda_.15} parent=0 // pred_check_branch
    %11 = sbr.rel (0) target = $region9
  $region8: #{_lambda_.15} parent=0 // pred_region
    _
  $region9: #{_lambda_.15} parent=0 // pred_fallthru
    _
  // Predicated region
  $region10: #{_lambda_.15} parent=0 // pred_check
    _
  $region11: #{_lambda_.15} parent=0 // pred_check_branch
    %13 = sbr.rel (0) target = $region13
  $region12: #{_lambda_.15} parent=0 // pred_region
    _
  $region13: #{_lambda_.15} parent=0 // pred_fallthru
    _
  %v15 = vld [vmem:[%s0] sm:$0xff]
  %v16 = vld [vmem:[%s0 + $0x8] sm:$0xff]
  %v17 = vld [vmem:[%s0 + $0x10] sm:$0xff]
  %v18 = vld [vmem:[%s0 + $0x18] sm:$0xff]
  %v19 = vld [vmem:[%s0 + $0x20] sm:$0xff]
  %v20 = vld [vmem:[%s0 + $0x28] sm:$0xff]
  %v21 = vld [vmem:[%s0 + $0x30] sm:$0xff]
  %v22 = vld [vmem:[%s0 + $0x38] sm:$0xff]
  %v23 = vld [vmem:[%s0 + $0x40] sm:$0xff]
  %v24 = vld [vmem:[%s0 + $0x48] sm:$0xff]
  %v25 = vld [vmem:[%s0 + $0x50] sm:$0xff]
  %v26 = vld [vmem:[%s0 + $0x58] sm:$0xff]
  %v27 = vld [vmem:[%s0 + $0x60] sm:$0xff]
  %v28 = vld [vmem:[%s0 + $0x68] sm:$0xff]
  %v29 = vld [vmem:[%s0 + $0x70] sm:$0xff]
  %v30 = vld [vmem:[%s0 + $0x78] sm:$0xff]
  %v31 = vld [vmem:[%s0 + $0x80] sm:$0xff]
  %v32 = vld [vmem:[%s0 + $0x88] sm:$0xff]
  %v33 = vld [vmem:[%s0 + $0x90] sm:$0xff]
  %v34 = vld [vmem:[%s0 + $0x98] sm:$0xff]
  %v35 = vld [vmem:[%s0 + $0xa0] sm:$0xff]
  %v36 = vld [vmem:[%s0 + $0xa8] sm:$0xff]
  %v37 = vld [vmem:[%s0 + $0xb0] sm:$0xff]
  %v38 = vld [vmem:[%s0 + $0xb8] sm:$0xff]
  %v39 = vld [vmem:[%s0 + $0xc0] sm:$0xff]
  %v40 = vld [vmem:[%s0 + $0xc8] sm:$0xff]
  %v41 = vld [vmem:[%s0 + $0xd0] sm:$0xff]
  %v42 = vld [vmem:[%s0 + $0xd8] sm:$0xff]
  %v43 = vld [vmem:[%s0 + $0xe0] sm:$0xff]
  %v44 = vld [vmem:[%s0 + $0xe8] sm:$0xff]
  %v45 = vld [vmem:[%s0 + $0xf0] sm:$0xff]
  %v46 = vld [vmem:[%s0 + $0xf8] sm:$0xff]
  %v47 = vld [vmem:[%s0 + $0x100] sm:$0xff]
  %v48 = vld [vmem:[%s0 + $0x108] sm:$0xff]
  %v49 = vld [vmem:[%s0 + $0x110] sm:$0xff]
  %v50 = vld [vmem:[%s0 + $0x118] sm:$0xff]
  %v51 = vld [vmem:[%s0 + $0x120] sm:$0xff]
  %v52 = vld [vmem:[%s0 + $0x128] sm:$0xff]
  %v53 = vld [vmem:[%s0 + $0x130] sm:$0xff]
  %v54 = vld [vmem:[%s0 + $0x138] sm:$0xff]
  %v55 = vld [vmem:[%s0 + $0x140] sm:$0xff]
  %v56 = vld [vmem:[%s0 + $0x148] sm:$0xff]
  %v57 = vld [vmem:[%s0 + $0x150] sm:$0xff]
  %v58 = vld [vmem:[%s0 + $0x158] sm:$0xff]
  %v59 = vld [vmem:[%s0 + $0x160] sm:$0xff]
  %v60 = vld [vmem:[%s0 + $0x168] sm:$0xff]
  %v61 = vld [vmem:[%s0 + $0x170] sm:$0xff]
  %v62 = vld [vmem:[%s0 + $0x178] sm:$0xff]
  %v63 = vld [vmem:[%s0 + $0x180] sm:$0xff]
  %v64 = vld [vmem:[%s0 + $0x188] sm:$0xff]
  %v65 = vld [vmem:[%s0 + $0x190] sm:$0xff]
  %v66 = vld [vmem:[%s0 + $0x198] sm:$0xff]
  %v67 = vld [vmem:[%s0 + $0x1a0] sm:$0xff]
  %v68 = vld [vmem:[%s0 + $0x1a8] sm:$0xff]
  %v69 = vld [vmem:[%s0 + $0x1b0] sm:$0xff]
  %v70 = vld [vmem:[%s0 + $0x1b8] sm:$0xff]
  %v71 = vld [vmem:[%s0 + $0x1c0] sm:$0xff]
  %v72 = vld [vmem:[%s0 + $0x1c8] sm:$0xff]
  %v73 = vld [vmem:[%s0 + $0x1d0] sm:$0xff]
  %v74 = vld [vmem:[%s0 + $0x1d8] sm:$0xff]
  %v75 = vld [vmem:[%s0 + $0x1e0] sm:$0xff]
  %v76 = vld [vmem:[%s0 + $0x1e8] sm:$0xff]
  %v77 = vld [vmem:[%s0 + $0x1f0] sm:$0xff]
  %v78 = vld [vmem:[%s0 + $0x1f8] sm:$0xff]
  %v79 = vld [vmem:[%s1] sm:$0xf]
  %v80 = vld [vmem:[%s1 + $0x4] sm:$0xf]
  %v81 = vld [vmem:[%s1 + $0x8] sm:$0xf]
  %v82 = vld [vmem:[%s1 + $0xc] sm:$0xf]
  %v83 = vld [vmem:[%s1 + $0x10] sm:$0xf]
  %v84 = vld [vmem:[%s1 + $0x14] sm:$0xf]
  %v85 = vld [vmem:[%s1 + $0x18] sm:$0xf]
  %v86 = vld [vmem:[%s1 + $0x1c] sm:$0xf]
  %v87 = vld [vmem:[%s1 + $0x20] sm:$0xf]
  %v88 = vld [vmem:[%s1 + $0x24] sm:$0xf]
  %v89 = vld [vmem:[%s1 + $0x28] sm:$0xf]
  %v90 = vld [vmem:[%s1 + $0x2c] sm:$0xf]
  %v91 = vld [vmem:[%s1 + $0x30] sm:$0xf]
  %v92 = vld [vmem:[%s1 + $0x34] sm:$0xf]
  %v93 = vld [vmem:[%s1 + $0x38] sm:$0xf]
  %v94 = vld [vmem:[%s1 + $0x3c] sm:$0xf]
  %v95 = vld [vmem:[%s1 + $0x40] sm:$0xf]
  %v96 = vld [vmem:[%s1 + $0x44] sm:$0xf]
  %v97 = vld [vmem:[%s1 + $0x48] sm:$0xf]
  %v98 = vld [vmem:[%s1 + $0x4c] sm:$0xf]
  %v99 = vld [vmem:[%s1 + $0x50] sm:$0xf]
  %v100 = vld [vmem:[%s1 + $0x54] sm:$0xf]
  %v101 = vld [vmem:[%s1 + $0x58] sm:$0xf]
  %v102 = vld [vmem:[%s1 + $0x5c] sm:$0xf]
  %v103 = vld [vmem:[%s1 + $0x60] sm:$0xf]
  %v104 = vld [vmem:[%s1 + $0x64] sm:$0xf]
  %v105 = vld [vmem:[%s1 + $0x68] sm:$0xf]
  %v106 = vld [vmem:[%s1 + $0x6c] sm:$0xf]
  %v107 = vld [vmem:[%s1 + $0x70] sm:$0xf]
  %v108 = vld [vmem:[%s1 + $0x74] sm:$0xf]
  %v109 = vld [vmem:[%s1 + $0x78] sm:$0xf]
  %v110 = vld [vmem:[%s1 + $0x7c] sm:$0xf]
  %v111 = vld [vmem:[%s2] sm:$0x1]
  %v113 = vlaneseq
  %v114 = vshrl.u32 %v113, 7
  %v115 = vsub.s32 0, %v114
  %v116 = vrot.slane %v111, %v115
  %v182 = vunpack.c.l.b16 %v15
  %v183 = vunpack.c.h.b16 %v15
  %v184 = vunpack.c.l.b16 %v16
  %v185 = vunpack.c.h.b16 %v16
  %v186 = vunpack.c.l.b16 %v17
  %v187 = vunpack.c.h.b16 %v17
  %v188 = vunpack.c.l.b16 %v18
  %v189 = vunpack.c.h.b16 %v18
  %v190 = vunpack.c.l.b16 %v19
  %v191 = vunpack.c.h.b16 %v19
  %v192 = vunpack.c.l.b16 %v20
  %v193 = vunpack.c.h.b16 %v20
  %v194 = vunpack.c.l.b16 %v21
  %v195 = vunpack.c.h.b16 %v21
  %v196 = vunpack.c.l.b16 %v22
  %v197 = vunpack.c.h.b16 %v22
  %v198 = vunpack.c.l.b16 %v23
  %v199 = vunpack.c.h.b16 %v23
  %v200 = vunpack.c.l.b16 %v24
  %v201 = vunpack.c.h.b16 %v24
  %v202 = vunpack.c.l.b16 %v25
  %v203 = vunpack.c.h.b16 %v25
  %v204 = vunpack.c.l.b16 %v26
  %v205 = vunpack.c.h.b16 %v26
  %v206 = vunpack.c.l.b16 %v27
  %v207 = vunpack.c.h.b16 %v27
  %v208 = vunpack.c.l.b16 %v28
  %v209 = vunpack.c.h.b16 %v28
  %v210 = vunpack.c.l.b16 %v29
  %v211 = vunpack.c.h.b16 %v29
  %v212 = vunpack.c.l.b16 %v30
  %v213 = vunpack.c.h.b16 %v30
  %v214 = vunpack.c.l.b16 %v31
  %v215 = vunpack.c.h.b16 %v31
  %v216 = vunpack.c.l.b16 %v32
  %v217 = vunpack.c.h.b16 %v32
  %v218 = vunpack.c.l.b16 %v33
  %v219 = vunpack.c.h.b16 %v33
  %v220 = vunpack.c.l.b16 %v34
  %v221 = vunpack.c.h.b16 %v34
  %v222 = vunpack.c.l.b16 %v35
  %v223 = vunpack.c.h.b16 %v35
  %v224 = vunpack.c.l.b16 %v36
  %v225 = vunpack.c.h.b16 %v36
  %v226 = vunpack.c.l.b16 %v37
  %v227 = vunpack.c.h.b16 %v37
  %v228 = vunpack.c.l.b16 %v38
  %v229 = vunpack.c.h.b16 %v38
  %v230 = vunpack.c.l.b16 %v39
  %v231 = vunpack.c.h.b16 %v39
  %v232 = vunpack.c.l.b16 %v40
  %v233 = vunpack.c.h.b16 %v40
  %v234 = vunpack.c.l.b16 %v41
  %v235 = vunpack.c.h.b16 %v41
  %v236 = vunpack.c.l.b16 %v42
  %v237 = vunpack.c.h.b16 %v42
  %v238 = vunpack.c.l.b16 %v43
  %v239 = vunpack.c.h.b16 %v43
  %v240 = vunpack.c.l.b16 %v44
  %v241 = vunpack.c.h.b16 %v44
  %v242 = vunpack.c.l.b16 %v45
  %v243 = vunpack.c.h.b16 %v45
  %v244 = vunpack.c.l.b16 %v46
  %v245 = vunpack.c.h.b16 %v46
  %v246 = vunpack.c.l.b16 %v47
  %v247 = vunpack.c.h.b16 %v47
  %v248 = vunpack.c.l.b16 %v48
  %v249 = vunpack.c.h.b16 %v48
  %v250 = vunpack.c.l.b16 %v49
  %v251 = vunpack.c.h.b16 %v49
  %v252 = vunpack.c.l.b16 %v50
  %v253 = vunpack.c.h.b16 %v50
  %v254 = vunpack.c.l.b16 %v51
  %v255 = vunpack.c.h.b16 %v51
  %v256 = vunpack.c.l.b16 %v52
  %v257 = vunpack.c.h.b16 %v52
  %v258 = vunpack.c.l.b16 %v53
  %v259 = vunpack.c.h.b16 %v53
  %v260 = vunpack.c.l.b16 %v54
  %v261 = vunpack.c.h.b16 %v54
  %v262 = vunpack.c.l.b16 %v55
  %v263 = vunpack.c.h.b16 %v55
  %v264 = vunpack.c.l.b16 %v56
  %v265 = vunpack.c.h.b16 %v56
  %v266 = vunpack.c.l.b16 %v57
  %v267 = vunpack.c.h.b16 %v57
  %v268 = vunpack.c.l.b16 %v58
  %v269 = vunpack.c.h.b16 %v58
  %v270 = vunpack.c.l.b16 %v59
  %v271 = vunpack.c.h.b16 %v59
  %v272 = vunpack.c.l.b16 %v60
  %v273 = vunpack.c.h.b16 %v60
  %v274 = vunpack.c.l.b16 %v61
  %v275 = vunpack.c.h.b16 %v61
  %v276 = vunpack.c.l.b16 %v62
  %v277 = vunpack.c.h.b16 %v62
  %v278 = vunpack.c.l.b16 %v63
  %v279 = vunpack.c.h.b16 %v63
  %v280 = vunpack.c.l.b16 %v64
  %v281 = vunpack.c.h.b16 %v64
  %v282 = vunpack.c.l.b16 %v65
  %v283 = vunpack.c.h.b16 %v65
  %v284 = vunpack.c.l.b16 %v66
  %v285 = vunpack.c.h.b16 %v66
  %v286 = vunpack.c.l.b16 %v67
  %v287 = vunpack.c.h.b16 %v67
  %v288 = vunpack.c.l.b16 %v68
  %v289 = vunpack.c.h.b16 %v68
  %v290 = vunpack.c.l.b16 %v69
  %v291 = vunpack.c.h.b16 %v69
  %v292 = vunpack.c.l.b16 %v70
  %v293 = vunpack.c.h.b16 %v70
  %v294 = vunpack.c.l.b16 %v71
  %v295 = vunpack.c.h.b16 %v71
  %v296 = vunpack.c.l.b16 %v72
  %v297 = vunpack.c.h.b16 %v72
  %v298 = vunpack.c.l.b16 %v73
  %v299 = vunpack.c.h.b16 %v73
  %v300 = vunpack.c.l.b16 %v74
  %v301 = vunpack.c.h.b16 %v74
  %v302 = vunpack.c.l.b16 %v75
  %v303 = vunpack.c.h.b16 %v75
  %v304 = vunpack.c.l.b16 %v76
  %v305 = vunpack.c.h.b16 %v76
  %v306 = vunpack.c.l.b16 %v77
  %v307 = vunpack.c.h.b16 %v77
  %v308 = vunpack.c.l.b16 %v78
  %v309 = vunpack.c.h.b16 %v78
  %v310 = vpack.c.b16 %v184, %v182
  %v311 = vpack.c.b16 %v185, %v183
  %v312 = vpack.c.b16 %v188, %v186
  %v313 = vpack.c.b16 %v189, %v187
  %v314 = vpack.c.b16 %v192, %v190
  %v315 = vpack.c.b16 %v193, %v191
  %v316 = vpack.c.b16 %v196, %v194
  %v317 = vpack.c.b16 %v197, %v195
  %v318 = vpack.c.b16 %v200, %v198
  %v319 = vpack.c.b16 %v201, %v199
  %v320 = vpack.c.b16 %v204, %v202
  %v321 = vpack.c.b16 %v205, %v203
  %v322 = vpack.c.b16 %v208, %v206
  %v323 = vpack.c.b16 %v209, %v207
  %v324 = vpack.c.b16 %v212, %v210
  %v325 = vpack.c.b16 %v213, %v211
  %v326 = vpack.c.b16 %v216, %v214
  %v327 = vpack.c.b16 %v217, %v215
  %v328 = vpack.c.b16 %v220, %v218
  %v329 = vpack.c.b16 %v221, %v219
  %v330 = vpack.c.b16 %v224, %v222
  %v331 = vpack.c.b16 %v225, %v223
  %v332 = vpack.c.b16 %v228, %v226
  %v333 = vpack.c.b16 %v229, %v227
  %v334 = vpack.c.b16 %v232, %v230
  %v335 = vpack.c.b16 %v233, %v231
  %v336 = vpack.c.b16 %v236, %v234
  %v337 = vpack.c.b16 %v237, %v235
  %v338 = vpack.c.b16 %v240, %v238
  %v339 = vpack.c.b16 %v241, %v239
  %v340 = vpack.c.b16 %v244, %v242
  %v341 = vpack.c.b16 %v245, %v243
  %v342 = vpack.c.b16 %v248, %v246
  %v343 = vpack.c.b16 %v249, %v247
  %v344 = vpack.c.b16 %v252, %v250
  %v345 = vpack.c.b16 %v253, %v251
  %v346 = vpack.c.b16 %v256, %v254
  %v347 = vpack.c.b16 %v257, %v255
  %v348 = vpack.c.b16 %v260, %v258
  %v349 = vpack.c.b16 %v261, %v259
  %v350 = vpack.c.b16 %v264, %v262
  %v351 = vpack.c.b16 %v265, %v263
  %v352 = vpack.c.b16 %v268, %v266
  %v353 = vpack.c.b16 %v269, %v267
  %v354 = vpack.c.b16 %v272, %v270
  %v355 = vpack.c.b16 %v273, %v271
  %v356 = vpack.c.b16 %v276, %v274
  %v357 = vpack.c.b16 %v277, %v275
  %v358 = vpack.c.b16 %v280, %v278
  %v359 = vpack.c.b16 %v281, %v279
  %v360 = vpack.c.b16 %v284, %v282
  %v361 = vpack.c.b16 %v285, %v283
  %v362 = vpack.c.b16 %v288, %v286
  %v363 = vpack.c.b16 %v289, %v287
  %v364 = vpack.c.b16 %v292, %v290
  %v365 = vpack.c.b16 %v293, %v291
  %v366 = vpack.c.b16 %v296, %v294
  %v367 = vpack.c.b16 %v297, %v295
  %v368 = vpack.c.b16 %v300, %v298
  %v369 = vpack.c.b16 %v301, %v299
  %v370 = vpack.c.b16 %v304, %v302
  %v371 = vpack.c.b16 %v305, %v303
  %v372 = vpack.c.b16 %v308, %v306
  %v373 = vpack.c.b16 %v309, %v307
  %v470 = vunpack.c.l.b16 %v79
  %v471 = vunpack.c.l.b16 %v80
  %v472 = vunpack.c.l.b16 %v81
  %v473 = vunpack.c.l.b16 %v82
  %v474 = vunpack.c.l.b16 %v83
  %v475 = vunpack.c.l.b16 %v84
  %v476 = vunpack.c.l.b16 %v85
  %v477 = vunpack.c.l.b16 %v86
  %v478 = vunpack.c.l.b16 %v87
  %v479 = vunpack.c.l.b16 %v88
  %v480 = vunpack.c.l.b16 %v89
  %v481 = vunpack.c.l.b16 %v90
  %v482 = vunpack.c.l.b16 %v91
  %v483 = vunpack.c.l.b16 %v92
  %v484 = vunpack.c.l.b16 %v93
  %v485 = vunpack.c.l.b16 %v94
  %v486 = vunpack.c.l.b16 %v95
  %v487 = vunpack.c.l.b16 %v96
  %v488 = vunpack.c.l.b16 %v97
  %v489 = vunpack.c.l.b16 %v98
  %v490 = vunpack.c.l.b16 %v99
  %v491 = vunpack.c.l.b16 %v100
  %v492 = vunpack.c.l.b16 %v101
  %v493 = vunpack.c.l.b16 %v102
  %v494 = vunpack.c.l.b16 %v103
  %v495 = vunpack.c.l.b16 %v104
  %v496 = vunpack.c.l.b16 %v105
  %v497 = vunpack.c.l.b16 %v106
  %v498 = vunpack.c.l.b16 %v107
  %v499 = vunpack.c.l.b16 %v108
  %v500 = vunpack.c.l.b16 %v109
  %v501 = vunpack.c.l.b16 %v110
  %v502 = vpack.c.b16 %v471, %v470
  %v503 = vpack.c.b16 %v473, %v472
  %v504 = vpack.c.b16 %v475, %v474
  %v505 = vpack.c.b16 %v477, %v476
  %v506 = vpack.c.b16 %v479, %v478
  %v507 = vpack.c.b16 %v481, %v480
  %v508 = vpack.c.b16 %v483, %v482
  %v509 = vpack.c.b16 %v485, %v484
  %v510 = vpack.c.b16 %v487, %v486
  %v511 = vpack.c.b16 %v489, %v488
  %v512 = vpack.c.b16 %v491, %v490
  %v513 = vpack.c.b16 %v493, %v492
  %v514 = vpack.c.b16 %v495, %v494
  %v515 = vpack.c.b16 %v497, %v496
  %v516 = vpack.c.b16 %v499, %v498
  %v517 = vpack.c.b16 %v501, %v500
  %534 = vmatprep.subr.bf16.mxu0 0
  %535 = vmatpush1.bf16.msra.mxu0 %v502
  %536 = vmatprep.subr.bf16.mxu0 0
  %537 = vmatpush1.bf16.msra.mxu0 %v503
  %538 = vmatprep.subr.bf16.mxu0 0
  %539 = vmatpush1.bf16.msra.mxu0 %v504
  %540 = vmatprep.subr.bf16.mxu0 0
  %541 = vmatpush1.bf16.msra.mxu0 %v505
  %542 = vmatprep.subr.bf16.mxu0 0
  %543 = vmatpush1.bf16.msra.mxu0 %v506
  %544 = vmatprep.subr.bf16.mxu0 0
  %545 = vmatpush1.bf16.msra.mxu0 %v507
  %546 = vmatprep.subr.bf16.mxu0 0
  %547 = vmatpush1.bf16.msra.mxu0 %v508
  %548 = vmatprep.subr.bf16.mxu0 0
  %549 = vmatpush1.bf16.msra.mxu0 %v509
  %550 = vmatprep.subr.bf16.mxu0 0
  %551 = vmatpush1.bf16.msra.mxu0 %v510
  %552 = vmatprep.subr.bf16.mxu0 0
  %553 = vmatpush1.bf16.msra.mxu0 %v511
  %554 = vmatprep.subr.bf16.mxu0 0
  %555 = vmatpush1.bf16.msra.mxu0 %v512
  %556 = vmatprep.subr.bf16.mxu0 0
  %557 = vmatpush1.bf16.msra.mxu0 %v513
  %558 = vmatprep.subr.bf16.mxu0 0
  %559 = vmatpush1.bf16.msra.mxu0 %v514
  %560 = vmatprep.subr.bf16.mxu0 0
  %561 = vmatpush1.bf16.msra.mxu0 %v515
  %562 = vmatprep.subr.bf16.mxu0 0
  %563 = vmatpush1.bf16.msra.mxu0 %v516
  %564 = vmatprep.subr.bf16.mxu0 0
  %565 = vmatpush1.bf16.msra.mxu0 %v517
  %566 = vmatprep.mubr.bf16.mxu0 %v311
  %567 = vmatmul.mubr.bf16.gmra.mrb[0].mxu0 %v310
  %v568 = vpop.f32.mrb[0].mxu0
  %v569 = vadd.f32 %v116, %v568
  %v570 = vpop.f32.mrb[0].mxu0
  %v571 = vpop.f32.mrb[0].mxu0
  %v572 = vadd.f32 %v116, %v571
  %v573 = vpop.f32.mrb[0].mxu0
  %574 = vmatprep.mubr.bf16.mxu0 %v313
  %575 = vmatmul.mubr.bf16.gmra.mrb[0].mxu0 %v312
  %v576 = vpop.f32.mrb[0].mxu0
  %v577 = vadd.f32 %v116, %v576
  %v578 = vpop.f32.mrb[0].mxu0
  %v579 = vpop.f32.mrb[0].mxu0
  %v580 = vadd.f32 %v116, %v579
  %v581 = vpop.f32.mrb[0].mxu0
  %582 = vmatprep.mubr.bf16.mxu0 %v315
  %583 = vmatmul.mubr.bf16.gmra.mrb[0].mxu0 %v314
  %v584 = vpop.f32.mrb[0].mxu0
  %v585 = vadd.f32 %v116, %v584
  %v586 = vpop.f32.mrb[0].mxu0
  %v587 = vpop.f32.mrb[0].mxu0
  %v588 = vadd.f32 %v116, %v587
  %v589 = vpop.f32.mrb[0].mxu0
  %590 = vmatprep.mubr.bf16.mxu0 %v317
  %591 = vmatmul.mubr.bf16.gmra.mrb[0].mxu0 %v316
  %v592 = vpop.f32.mrb[0].mxu0
  %v593 = vadd.f32 %v116, %v592
  %v594 = vpop.f32.mrb[0].mxu0
  %v595 = vpop.f32.mrb[0].mxu0
  %v596 = vadd.f32 %v116, %v595
  %v597 = vpop.f32.mrb[0].mxu0
  %598 = vmatprep.mubr.bf16.mxu0 %v319
  %599 = vmatmul.mubr.bf16.gmra.mrb[0].mxu0 %v318
  %v600 = vpop.f32.mrb[0].mxu0
  %v601 = vadd.f32 %v116, %v600
  %v602 = vpop.f32.mrb[0].mxu0
  %v603 = vpop.f32.mrb[0].mxu0
  %v604 = vadd.f32 %v116, %v603
  %v605 = vpop.f32.mrb[0].mxu0
  %606 = vmatprep.mubr.bf16.mxu0 %v321
  %607 = vmatmul.mubr.bf16.gmra.mrb[0].mxu0 %v320
  %v608 = vpop.f32.mrb[0].mxu0
  %v609 = vadd.f32 %v116, %v608
  %v610 = vpop.f32.mrb[0].mxu0
  %v611 = vpop.f32.mrb[0].mxu0
  %v612 = vadd.f32 %v116, %v611
  %v613 = vpop.f32.mrb[0].mxu0
  %614 = vmatprep.mubr.bf16.mxu0 %v323
  %615 = vmatmul.mubr.bf16.gmra.mrb[0].mxu0 %v322
  %v616 = vpop.f32.mrb[0].mxu0
  %v617 = vadd.f32 %v116, %v616
  %v618 = vpop.f32.mrb[0].mxu0
  %v619 = vpop.f32.mrb[0].mxu0
  %v620 = vadd.f32 %v116, %v619
  %v621 = vpop.f32.mrb[0].mxu0
  %622 = vmatprep.mubr.bf16.mxu0 %v325
  %623 = vmatmul.mubr.bf16.gmra.mrb[0].mxu0 %v324
  %v624 = vpop.f32.mrb[0].mxu0
  %v625 = vadd.f32 %v116, %v624
  %v626 = vpop.f32.mrb[0].mxu0
  %v627 = vpop.f32.mrb[0].mxu0
  %v628 = vadd.f32 %v116, %v627
  %v629 = vpop.f32.mrb[0].mxu0
  %630 = vmatprep.mubr.bf16.mxu0 %v327
  %631 = vmatmul.mubr.bf16.gmra.mrb[0].mxu0 %v326
  %v632 = vpop.f32.mrb[0].mxu0
  %v633 = vadd.f32 %v116, %v632
  %v634 = vpop.f32.mrb[0].mxu0
  %v635 = vpop.f32.mrb[0].mxu0
  %v636 = vadd.f32 %v116, %v635
  %v637 = vpop.f32.mrb[0].mxu0
  %638 = vmatprep.mubr.bf16.mxu0 %v329
  %639 = vmatmul.mubr.bf16.gmra.mrb[0].mxu0 %v328
  %v640 = vpop.f32.mrb[0].mxu0
  %v641 = vadd.f32 %v116, %v640
  %v642 = vpop.f32.mrb[0].mxu0
  %v643 = vpop.f32.mrb[0].mxu0
  %v644 = vadd.f32 %v116, %v643
  %v645 = vpop.f32.mrb[0].mxu0
  %646 = vmatprep.mubr.bf16.mxu0 %v331
  %647 = vmatmul.mubr.bf16.gmra.mrb[0].mxu0 %v330
  %v648 = vpop.f32.mrb[0].mxu0
  %v649 = vadd.f32 %v116, %v648
  %v650 = vpop.f32.mrb[0].mxu0
  %v651 = vpop.f32.mrb[0].mxu0
  %v652 = vadd.f32 %v116, %v651
  %v653 = vpop.f32.mrb[0].mxu0
  %654 = vmatprep.mubr.bf16.mxu0 %v333
  %655 = vmatmul.mubr.bf16.gmra.mrb[0].mxu0 %v332
  %v656 = vpop.f32.mrb[0].mxu0
  %v657 = vadd.f32 %v116, %v656
  %v658 = vpop.f32.mrb[0].mxu0
  %v659 = vpop.f32.mrb[0].mxu0
  %v660 = vadd.f32 %v116, %v659
  %v661 = vpop.f32.mrb[0].mxu0
  %662 = vmatprep.mubr.bf16.mxu0 %v335
  %663 = vmatmul.mubr.bf16.gmra.mrb[0].mxu0 %v334
  %v664 = vpop.f32.mrb[0].mxu0
  %v665 = vadd.f32 %v116, %v664
  %v666 = vpop.f32.mrb[0].mxu0
  %v667 = vpop.f32.mrb[0].mxu0
  %v668 = vadd.f32 %v116, %v667
  %v669 = vpop.f32.mrb[0].mxu0
  %670 = vmatprep.mubr.bf16.mxu0 %v337
  %671 = vmatmul.mubr.bf16.gmra.mrb[0].mxu0 %v336
  %v672 = vpop.f32.mrb[0].mxu0
  %v673 = vadd.f32 %v116, %v672
  %v674 = vpop.f32.mrb[0].mxu0
  %v675 = vpop.f32.mrb[0].mxu0
  %v676 = vadd.f32 %v116, %v675
  %v677 = vpop.f32.mrb[0].mxu0
  %678 = vmatprep.mubr.bf16.mxu0 %v339
  %679 = vmatmul.mubr.bf16.gmra.mrb[0].mxu0 %v338
  %v680 = vpop.f32.mrb[0].mxu0
  %v681 = vadd.f32 %v116, %v680
  %v682 = vpop.f32.mrb[0].mxu0
  %v683 = vpop.f32.mrb[0].mxu0
  %v684 = vadd.f32 %v116, %v683
  %v685 = vpop.f32.mrb[0].mxu0
  %686 = vmatprep.mubr.bf16.mxu0 %v341
  %687 = vmatmul.mubr.bf16.gmra.mrb[0].mxu0 %v340
  %v688 = vpop.f32.mrb[0].mxu0
  %v689 = vadd.f32 %v116, %v688
  %v690 = vpop.f32.mrb[0].mxu0
  %v691 = vpop.f32.mrb[0].mxu0
  %v692 = vadd.f32 %v116, %v691
  %v693 = vpop.f32.mrb[0].mxu0
  %694 = vmatprep.mubr.bf16.mxu0 %v343
  %695 = vmatmul.mubr.bf16.gmra.mrb[0].mxu0 %v342
  %v696 = vpop.f32.mrb[0].mxu0
  %v697 = vadd.f32 %v116, %v696
  %v698 = vpop.f32.mrb[0].mxu0
  %v699 = vpop.f32.mrb[0].mxu0
  %v700 = vadd.f32 %v116, %v699
  %v701 = vpop.f32.mrb[0].mxu0
  %702 = vmatprep.mubr.bf16.mxu0 %v345
  %703 = vmatmul.mubr.bf16.gmra.mrb[0].mxu0 %v344
  %v704 = vpop.f32.mrb[0].mxu0
  %v705 = vadd.f32 %v116, %v704
  %v706 = vpop.f32.mrb[0].mxu0
  %v707 = vpop.f32.mrb[0].mxu0
  %v708 = vadd.f32 %v116, %v707
  %v709 = vpop.f32.mrb[0].mxu0
  %710 = vmatprep.mubr.bf16.mxu0 %v347
  %711 = vmatmul.mubr.bf16.gmra.mrb[0].mxu0 %v346
  %v712 = vpop.f32.mrb[0].mxu0
  %v713 = vadd.f32 %v116, %v712
  %v714 = vpop.f32.mrb[0].mxu0
  %v715 = vpop.f32.mrb[0].mxu0
  %v716 = vadd.f32 %v116, %v715
  %v717 = vpop.f32.mrb[0].mxu0
  %718 = vmatprep.mubr.bf16.mxu0 %v349
  %719 = vmatmul.mubr.bf16.gmra.mrb[0].mxu0 %v348
  %v720 = vpop.f32.mrb[0].mxu0
  %v721 = vadd.f32 %v116, %v720
  %v722 = vpop.f32.mrb[0].mxu0
  %v723 = vpop.f32.mrb[0].mxu0
  %v724 = vadd.f32 %v116, %v723
  %v725 = vpop.f32.mrb[0].mxu0
  %726 = vmatprep.mubr.bf16.mxu0 %v351
  %727 = vmatmul.mubr.bf16.gmra.mrb[0].mxu0 %v350
  %v728 = vpop.f32.mrb[0].mxu0
  %v729 = vadd.f32 %v116, %v728
  %v730 = vpop.f32.mrb[0].mxu0
  %v731 = vpop.f32.mrb[0].mxu0
  %v732 = vadd.f32 %v116, %v731
  %v733 = vpop.f32.mrb[0].mxu0
  %734 = vmatprep.mubr.bf16.mxu0 %v353
  %735 = vmatmul.mubr.bf16.gmra.mrb[0].mxu0 %v352
  %v736 = vpop.f32.mrb[0].mxu0
  %v737 = vadd.f32 %v116, %v736
  %v738 = vpop.f32.mrb[0].mxu0
  %v739 = vpop.f32.mrb[0].mxu0
  %v740 = vadd.f32 %v116, %v739
  %v741 = vpop.f32.mrb[0].mxu0
  %742 = vmatprep.mubr.bf16.mxu0 %v355
  %743 = vmatmul.mubr.bf16.gmra.mrb[0].mxu0 %v354
  %v744 = vpop.f32.mrb[0].mxu0
  %v745 = vadd.f32 %v116, %v744
  %v746 = vpop.f32.mrb[0].mxu0
  %v747 = vpop.f32.mrb[0].mxu0
  %v748 = vadd.f32 %v116, %v747
  %v749 = vpop.f32.mrb[0].mxu0
  %750 = vmatprep.mubr.bf16.mxu0 %v357
  %751 = vmatmul.mubr.bf16.gmra.mrb[0].mxu0 %v356
  %v752 = vpop.f32.mrb[0].mxu0
  %v753 = vadd.f32 %v116, %v752
  %v754 = vpop.f32.mrb[0].mxu0
  %v755 = vpop.f32.mrb[0].mxu0
  %v756 = vadd.f32 %v116, %v755
  %v757 = vpop.f32.mrb[0].mxu0
  %758 = vmatprep.mubr.bf16.mxu0 %v359
  %759 = vmatmul.mubr.bf16.gmra.mrb[0].mxu0 %v358
  %v760 = vpop.f32.mrb[0].mxu0
  %v761 = vadd.f32 %v116, %v760
  %v762 = vpop.f32.mrb[0].mxu0
  %v763 = vpop.f32.mrb[0].mxu0
  %v764 = vadd.f32 %v116, %v763
  %v765 = vpop.f32.mrb[0].mxu0
  %766 = vmatprep.mubr.bf16.mxu0 %v361
  %767 = vmatmul.mubr.bf16.gmra.mrb[0].mxu0 %v360
  %v768 = vpop.f32.mrb[0].mxu0
  %v769 = vadd.f32 %v116, %v768
  %v770 = vpop.f32.mrb[0].mxu0
  %v771 = vpop.f32.mrb[0].mxu0
  %v772 = vadd.f32 %v116, %v771
  %v773 = vpop.f32.mrb[0].mxu0
  %774 = vmatprep.mubr.bf16.mxu0 %v363
  %775 = vmatmul.mubr.bf16.gmra.mrb[0].mxu0 %v362
  %v776 = vpop.f32.mrb[0].mxu0
  %v777 = vadd.f32 %v116, %v776
  %v778 = vpop.f32.mrb[0].mxu0
  %v779 = vpop.f32.mrb[0].mxu0
  %v780 = vadd.f32 %v116, %v779
  %v781 = vpop.f32.mrb[0].mxu0
  %782 = vmatprep.mubr.bf16.mxu0 %v365
  %783 = vmatmul.mubr.bf16.gmra.mrb[0].mxu0 %v364
  %v784 = vpop.f32.mrb[0].mxu0
  %v785 = vadd.f32 %v116, %v784
  %v786 = vpop.f32.mrb[0].mxu0
  %v787 = vpop.f32.mrb[0].mxu0
  %v788 = vadd.f32 %v116, %v787
  %v789 = vpop.f32.mrb[0].mxu0
  %790 = vmatprep.mubr.bf16.mxu0 %v367
  %791 = vmatmul.mubr.bf16.gmra.mrb[0].mxu0 %v366
  %v792 = vpop.f32.mrb[0].mxu0
  %v793 = vadd.f32 %v116, %v792
  %v794 = vpop.f32.mrb[0].mxu0
  %v795 = vpop.f32.mrb[0].mxu0
  %v796 = vadd.f32 %v116, %v795
  %v797 = vpop.f32.mrb[0].mxu0
  %798 = vmatprep.mubr.bf16.mxu0 %v369
  %799 = vmatmul.mubr.bf16.gmra.mrb[0].mxu0 %v368
  %v800 = vpop.f32.mrb[0].mxu0
  %v801 = vadd.f32 %v116, %v800
  %v802 = vpop.f32.mrb[0].mxu0
  %v803 = vpop.f32.mrb[0].mxu0
  %v804 = vadd.f32 %v116, %v803
  %v805 = vpop.f32.mrb[0].mxu0
  %806 = vmatprep.mubr.bf16.mxu0 %v371
  %807 = vmatmul.mubr.bf16.gmra.mrb[0].mxu0 %v370
  %v808 = vpop.f32.mrb[0].mxu0
  %v809 = vadd.f32 %v116, %v808
  %v810 = vpop.f32.mrb[0].mxu0
  %v811 = vpop.f32.mrb[0].mxu0
  %v812 = vadd.f32 %v116, %v811
  %v813 = vpop.f32.mrb[0].mxu0
  %814 = vmatprep.mubr.bf16.mxu0 %v373
  %815 = vmatmul.mubr.bf16.gmra.mrb[0].mxu0 %v372
  %v816 = vpop.f32.mrb[0].mxu0
  %v817 = vadd.f32 %v116, %v816
  %v818 = vpop.f32.mrb[0].mxu0
  %v819 = vpop.f32.mrb[0].mxu0
  %v820 = vadd.f32 %v116, %v819
  %v821 = vpop.f32.mrb[0].mxu0
  %822 = vdwg.mxu0
  %v823 = vmax.f32 %v569, 0.0
  %v824 = vmax.f32 %v572, 0.0
  %v825 = vmax.f32 %v577, 0.0
  %v826 = vmax.f32 %v580, 0.0
  %v827 = vmax.f32 %v585, 0.0
  %v828 = vmax.f32 %v588, 0.0
  %v829 = vmax.f32 %v593, 0.0
  %v830 = vmax.f32 %v596, 0.0
  %v831 = vmax.f32 %v601, 0.0
  %v832 = vmax.f32 %v604, 0.0
  %v833 = vmax.f32 %v609, 0.0
  %v834 = vmax.f32 %v612, 0.0
  %v835 = vmax.f32 %v617, 0.0
  %v836 = vmax.f32 %v620, 0.0
  %v837 = vmax.f32 %v625, 0.0
  %v838 = vmax.f32 %v628, 0.0
  %v839 = vmax.f32 %v633, 0.0
  %v840 = vmax.f32 %v636, 0.0
  %v841 = vmax.f32 %v641, 0.0
  %v842 = vmax.f32 %v644, 0.0
  %v843 = vmax.f32 %v649, 0.0
  %v844 = vmax.f32 %v652, 0.0
  %v845 = vmax.f32 %v657, 0.0
  %v846 = vmax.f32 %v660, 0.0
  %v847 = vmax.f32 %v665, 0.0
  %v848 = vmax.f32 %v668, 0.0
  %v849 = vmax.f32 %v673, 0.0
  %v850 = vmax.f32 %v676, 0.0
  %v851 = vmax.f32 %v681, 0.0
  %v852 = vmax.f32 %v684, 0.0
  %v853 = vmax.f32 %v689, 0.0
  %v854 = vmax.f32 %v692, 0.0
  %v855 = vmax.f32 %v697, 0.0
  %v856 = vmax.f32 %v700, 0.0
  %v857 = vmax.f32 %v705, 0.0
  %v858 = vmax.f32 %v708, 0.0
  %v859 = vmax.f32 %v713, 0.0
  %v860 = vmax.f32 %v716, 0.0
  %v861 = vmax.f32 %v721, 0.0
  %v862 = vmax.f32 %v724, 0.0
  %v863 = vmax.f32 %v729, 0.0
  %v864 = vmax.f32 %v732, 0.0
  %v865 = vmax.f32 %v737, 0.0
  %v866 = vmax.f32 %v740, 0.0
  %v867 = vmax.f32 %v745, 0.0
  %v868 = vmax.f32 %v748, 0.0
  %v869 = vmax.f32 %v753, 0.0
  %v870 = vmax.f32 %v756, 0.0
  %v871 = vmax.f32 %v761, 0.0
  %v872 = vmax.f32 %v764, 0.0
  %v873 = vmax.f32 %v769, 0.0
  %v874 = vmax.f32 %v772, 0.0
  %v875 = vmax.f32 %v777, 0.0
  %v876 = vmax.f32 %v780, 0.0
  %v877 = vmax.f32 %v785, 0.0
  %v878 = vmax.f32 %v788, 0.0
  %v879 = vmax.f32 %v793, 0.0
  %v880 = vmax.f32 %v796, 0.0
  %v881 = vmax.f32 %v801, 0.0
  %v882 = vmax.f32 %v804, 0.0
  %v883 = vmax.f32 %v809, 0.0
  %v884 = vmax.f32 %v812, 0.0
  %v885 = vmax.f32 %v817, 0.0
  %v886 = vmax.f32 %v820, 0.0
  %v887 = vpack.c.bf16 %v824, %v823
  %v888 = vpack.c.bf16 %v826, %v825
  %v889 = vpack.c.bf16 %v828, %v827
  %v890 = vpack.c.bf16 %v830, %v829
  %v891 = vpack.c.bf16 %v832, %v831
  %v892 = vpack.c.bf16 %v834, %v833
  %v893 = vpack.c.bf16 %v836, %v835
  %v894 = vpack.c.bf16 %v838, %v837
  %v895 = vpack.c.bf16 %v840, %v839
  %v896 = vpack.c.bf16 %v842, %v841
  %v897 = vpack.c.bf16 %v844, %v843
  %v898 = vpack.c.bf16 %v846, %v845
  %v899 = vpack.c.bf16 %v848, %v847
  %v900 = vpack.c.bf16 %v850, %v849
  %v901 = vpack.c.bf16 %v852, %v851
  %v902 = vpack.c.bf16 %v854, %v853
  %v903 = vpack.c.bf16 %v856, %v855
  %v904 = vpack.c.bf16 %v858, %v857
  %v905 = vpack.c.bf16 %v860, %v859
  %v906 = vpack.c.bf16 %v862, %v861
  %v907 = vpack.c.bf16 %v864, %v863
  %v908 = vpack.c.bf16 %v866, %v865
  %v909 = vpack.c.bf16 %v868, %v867
  %v910 = vpack.c.bf16 %v870, %v869
  %v911 = vpack.c.bf16 %v872, %v871
  %v912 = vpack.c.bf16 %v874, %v873
  %v913 = vpack.c.bf16 %v876, %v875
  %v914 = vpack.c.bf16 %v878, %v877
  %v915 = vpack.c.bf16 %v880, %v879
  %v916 = vpack.c.bf16 %v882, %v881
  %v917 = vpack.c.bf16 %v884, %v883
  %v918 = vpack.c.bf16 %v886, %v885
  %v951 = vunpack.c.l.b16 %v887
  %v952 = vunpack.c.h.b16 %v887
  %v953 = vunpack.c.l.b16 %v888
  %v954 = vunpack.c.h.b16 %v888
  %v955 = vunpack.c.l.b16 %v889
  %v956 = vunpack.c.h.b16 %v889
  %v957 = vunpack.c.l.b16 %v890
  %v958 = vunpack.c.h.b16 %v890
  %v959 = vunpack.c.l.b16 %v891
  %v960 = vunpack.c.h.b16 %v891
  %v961 = vunpack.c.l.b16 %v892
  %v962 = vunpack.c.h.b16 %v892
  %v963 = vunpack.c.l.b16 %v893
  %v964 = vunpack.c.h.b16 %v893
  %v965 = vunpack.c.l.b16 %v894
  %v966 = vunpack.c.h.b16 %v894
  %v967 = vunpack.c.l.b16 %v895
  %v968 = vunpack.c.h.b16 %v895
  %v969 = vunpack.c.l.b16 %v896
  %v970 = vunpack.c.h.b16 %v896
  %v971 = vunpack.c.l.b16 %v897
  %v972 = vunpack.c.h.b16 %v897
  %v973 = vunpack.c.l.b16 %v898
  %v974 = vunpack.c.h.b16 %v898
  %v975 = vunpack.c.l.b16 %v899
  %v976 = vunpack.c.h.b16 %v899
  %v977 = vunpack.c.l.b16 %v900
  %v978 = vunpack.c.h.b16 %v900
  %v979 = vunpack.c.l.b16 %v901
  %v980 = vunpack.c.h.b16 %v901
  %v981 = vunpack.c.l.b16 %v902
  %v982 = vunpack.c.h.b16 %v902
  %v983 = vunpack.c.l.b16 %v903
  %v984 = vunpack.c.h.b16 %v903
  %v985 = vunpack.c.l.b16 %v904
  %v986 = vunpack.c.h.b16 %v904
  %v987 = vunpack.c.l.b16 %v905
  %v988 = vunpack.c.h.b16 %v905
  %v989 = vunpack.c.l.b16 %v906
  %v990 = vunpack.c.h.b16 %v906
  %v991 = vunpack.c.l.b16 %v907
  %v992 = vunpack.c.h.b16 %v907
  %v993 = vunpack.c.l.b16 %v908
  %v994 = vunpack.c.h.b16 %v908
  %v995 = vunpack.c.l.b16 %v909
  %v996 = vunpack.c.h.b16 %v909
  %v997 = vunpack.c.l.b16 %v910
  %v998 = vunpack.c.h.b16 %v910
  %v999 = vunpack.c.l.b16 %v911
  %v1000 = vunpack.c.h.b16 %v911
  %v1001 = vunpack.c.l.b16 %v912
  %v1002 = vunpack.c.h.b16 %v912
  %v1003 = vunpack.c.l.b16 %v913
  %v1004 = vunpack.c.h.b16 %v913
  %v1005 = vunpack.c.l.b16 %v914
  %v1006 = vunpack.c.h.b16 %v914
  %v1007 = vunpack.c.l.b16 %v915
  %v1008 = vunpack.c.h.b16 %v915
  %v1009 = vunpack.c.l.b16 %v916
  %v1010 = vunpack.c.h.b16 %v916
  %v1011 = vunpack.c.l.b16 %v917
  %v1012 = vunpack.c.h.b16 %v917
  %v1013 = vunpack.c.l.b16 %v918
  %v1014 = vunpack.c.h.b16 %v918
  %v1015 = vpack.c.b16 %v951, %v951
  %v1016 = vpack.c.b16 %v952, %v952
  %v1017 = vpack.c.b16 %v953, %v953
  %v1018 = vpack.c.b16 %v954, %v954
  %v1019 = vpack.c.b16 %v955, %v955
  %v1020 = vpack.c.b16 %v956, %v956
  %v1021 = vpack.c.b16 %v957, %v957
  %v1022 = vpack.c.b16 %v958, %v958
  %v1023 = vpack.c.b16 %v959, %v959
  %v1024 = vpack.c.b16 %v960, %v960
  %v1025 = vpack.c.b16 %v961, %v961
  %v1026 = vpack.c.b16 %v962, %v962
  %v1027 = vpack.c.b16 %v963, %v963
  %v1028 = vpack.c.b16 %v964, %v964
  %v1029 = vpack.c.b16 %v965, %v965
  %v1030 = vpack.c.b16 %v966, %v966
  %v1031 = vpack.c.b16 %v967, %v967
  %v1032 = vpack.c.b16 %v968, %v968
  %v1033 = vpack.c.b16 %v969, %v969
  %v1034 = vpack.c.b16 %v970, %v970
  %v1035 = vpack.c.b16 %v971, %v971
  %v1036 = vpack.c.b16 %v972, %v972
  %v1037 = vpack.c.b16 %v973, %v973
  %v1038 = vpack.c.b16 %v974, %v974
  %v1039 = vpack.c.b16 %v975, %v975
  %v1040 = vpack.c.b16 %v976, %v976
  %v1041 = vpack.c.b16 %v977, %v977
  %v1042 = vpack.c.b16 %v978, %v978
  %v1043 = vpack.c.b16 %v979, %v979
  %v1044 = vpack.c.b16 %v980, %v980
  %v1045 = vpack.c.b16 %v981, %v981
  %v1046 = vpack.c.b16 %v982, %v982
  %v1047 = vpack.c.b16 %v983, %v983
  %v1048 = vpack.c.b16 %v984, %v984
  %v1049 = vpack.c.b16 %v985, %v985
  %v1050 = vpack.c.b16 %v986, %v986
  %v1051 = vpack.c.b16 %v987, %v987
  %v1052 = vpack.c.b16 %v988, %v988
  %v1053 = vpack.c.b16 %v989, %v989
  %v1054 = vpack.c.b16 %v990, %v990
  %v1055 = vpack.c.b16 %v991, %v991
  %v1056 = vpack.c.b16 %v992, %v992
  %v1057 = vpack.c.b16 %v993, %v993
  %v1058 = vpack.c.b16 %v994, %v994
  %v1059 = vpack.c.b16 %v995, %v995
  %v1060 = vpack.c.b16 %v996, %v996
  %v1061 = vpack.c.b16 %v997, %v997
  %v1062 = vpack.c.b16 %v998, %v998
  %v1063 = vpack.c.b16 %v999, %v999
  %v1064 = vpack.c.b16 %v1000, %v1000
  %v1065 = vpack.c.b16 %v1001, %v1001
  %v1066 = vpack.c.b16 %v1002, %v1002
  %v1067 = vpack.c.b16 %v1003, %v1003
  %v1068 = vpack.c.b16 %v1004, %v1004
  %v1069 = vpack.c.b16 %v1005, %v1005
  %v1070 = vpack.c.b16 %v1006, %v1006
  %v1071 = vpack.c.b16 %v1007, %v1007
  %v1072 = vpack.c.b16 %v1008, %v1008
  %v1073 = vpack.c.b16 %v1009, %v1009
  %v1074 = vpack.c.b16 %v1010, %v1010
  %v1075 = vpack.c.b16 %v1011, %v1011
  %v1076 = vpack.c.b16 %v1012, %v1012
  %v1077 = vpack.c.b16 %v1013, %v1013
  %v1078 = vpack.c.b16 %v1014, %v1014
  %vm1143 = vcmask 519168
  %1144 = vst.msk [vmem:[%s3] sm:$0xf] %vm1143, %v1015
  %1145 = vst.msk [vmem:[%s3 + $0x4] sm:$0xf] %vm1143, %v1016
  %1146 = vst.msk [vmem:[%s3 + $0x8] sm:$0xf] %vm1143, %v1017
  %1147 = vst.msk [vmem:[%s3 + $0xc] sm:$0xf] %vm1143, %v1018
  %1148 = vst.msk [vmem:[%s3 + $0x10] sm:$0xf] %vm1143, %v1019
  %1149 = vst.msk [vmem:[%s3 + $0x14] sm:$0xf] %vm1143, %v1020
  %1150 = vst.msk [vmem:[%s3 + $0x18] sm:$0xf] %vm1143, %v1021
  %1151 = vst.msk [vmem:[%s3 + $0x1c] sm:$0xf] %vm1143, %v1022
  %1152 = vst.msk [vmem:[%s3 + $0x20] sm:$0xf] %vm1143, %v1023
  %1153 = vst.msk [vmem:[%s3 + $0x24] sm:$0xf] %vm1143, %v1024
  %1154 = vst.msk [vmem:[%s3 + $0x28] sm:$0xf] %vm1143, %v1025
  %1155 = vst.msk [vmem:[%s3 + $0x2c] sm:$0xf] %vm1143, %v1026
  %1156 = vst.msk [vmem:[%s3 + $0x30] sm:$0xf] %vm1143, %v1027
  %1157 = vst.msk [vmem:[%s3 + $0x34] sm:$0xf] %vm1143, %v1028
  %1158 = vst.msk [vmem:[%s3 + $0x38] sm:$0xf] %vm1143, %v1029
  %1159 = vst.msk [vmem:[%s3 + $0x3c] sm:$0xf] %vm1143, %v1030
  %1160 = vst.msk [vmem:[%s3 + $0x40] sm:$0xf] %vm1143, %v1031
  %1161 = vst.msk [vmem:[%s3 + $0x44] sm:$0xf] %vm1143, %v1032
  %1162 = vst.msk [vmem:[%s3 + $0x48] sm:$0xf] %vm1143, %v1033
  %1163 = vst.msk [vmem:[%s3 + $0x4c] sm:$0xf] %vm1143, %v1034
  %1164 = vst.msk [vmem:[%s3 + $0x50] sm:$0xf] %vm1143, %v1035
  %1165 = vst.msk [vmem:[%s3 + $0x54] sm:$0xf] %vm1143, %v1036
  %1166 = vst.msk [vmem:[%s3 + $0x58] sm:$0xf] %vm1143, %v1037
  %1167 = vst.msk [vmem:[%s3 + $0x5c] sm:$0xf] %vm1143, %v1038
  %1168 = vst.msk [vmem:[%s3 + $0x60] sm:$0xf] %vm1143, %v1039
  %1169 = vst.msk [vmem:[%s3 + $0x64] sm:$0xf] %vm1143, %v1040
  %1170 = vst.msk [vmem:[%s3 + $0x68] sm:$0xf] %vm1143, %v1041
  %1171 = vst.msk [vmem:[%s3 + $0x6c] sm:$0xf] %vm1143, %v1042
  %1172 = vst.msk [vmem:[%s3 + $0x70] sm:$0xf] %vm1143, %v1043
  %1173 = vst.msk [vmem:[%s3 + $0x74] sm:$0xf] %vm1143, %v1044
  %1174 = vst.msk [vmem:[%s3 + $0x78] sm:$0xf] %vm1143, %v1045
  %1175 = vst.msk [vmem:[%s3 + $0x7c] sm:$0xf] %vm1143, %v1046
  %1176 = vst.msk [vmem:[%s3 + $0x80] sm:$0xf] %vm1143, %v1047
  %1177 = vst.msk [vmem:[%s3 + $0x84] sm:$0xf] %vm1143, %v1048
  %1178 = vst.msk [vmem:[%s3 + $0x88] sm:$0xf] %vm1143, %v1049
  %1179 = vst.msk [vmem:[%s3 + $0x8c] sm:$0xf] %vm1143, %v1050
  %1180 = vst.msk [vmem:[%s3 + $0x90] sm:$0xf] %vm1143, %v1051
  %1181 = vst.msk [vmem:[%s3 + $0x94] sm:$0xf] %vm1143, %v1052
  %1182 = vst.msk [vmem:[%s3 + $0x98] sm:$0xf] %vm1143, %v1053
  %1183 = vst.msk [vmem:[%s3 + $0x9c] sm:$0xf] %vm1143, %v1054
  %1184 = vst.msk [vmem:[%s3 + $0xa0] sm:$0xf] %vm1143, %v1055
  %1185 = vst.msk [vmem:[%s3 + $0xa4] sm:$0xf] %vm1143, %v1056
  %1186 = vst.msk [vmem:[%s3 + $0xa8] sm:$0xf] %vm1143, %v1057
  %1187 = vst.msk [vmem:[%s3 + $0xac] sm:$0xf] %vm1143, %v1058
  %1188 = vst.msk [vmem:[%s3 + $0xb0] sm:$0xf] %vm1143, %v1059
  %1189 = vst.msk [vmem:[%s3 + $0xb4] sm:$0xf] %vm1143, %v1060
  %1190 = vst.msk [vmem:[%s3 + $0xb8] sm:$0xf] %vm1143, %v1061
  %1191 = vst.msk [vmem:[%s3 + $0xbc] sm:$0xf] %vm1143, %v1062
  %1192 = vst.msk [vmem:[%s3 + $0xc0] sm:$0xf] %vm1143, %v1063
  %1193 = vst.msk [vmem:[%s3 + $0xc4] sm:$0xf] %vm1143, %v1064
  %1194 = vst.msk [vmem:[%s3 + $0xc8] sm:$0xf] %vm1143, %v1065
  %1195 = vst.msk [vmem:[%s3 + $0xcc] sm:$0xf] %vm1143, %v1066
  %1196 = vst.msk [vmem:[%s3 + $0xd0] sm:$0xf] %vm1143, %v1067
  %1197 = vst.msk [vmem:[%s3 + $0xd4] sm:$0xf] %vm1143, %v1068
  %1198 = vst.msk [vmem:[%s3 + $0xd8] sm:$0xf] %vm1143, %v1069
  %1199 = vst.msk [vmem:[%s3 + $0xdc] sm:$0xf] %vm1143, %v1070
  %1200 = vst.msk [vmem:[%s3 + $0xe0] sm:$0xf] %vm1143, %v1071
  %1201 = vst.msk [vmem:[%s3 + $0xe4] sm:$0xf] %vm1143, %v1072
  %1202 = vst.msk [vmem:[%s3 + $0xe8] sm:$0xf] %vm1143, %v1073
  %1203 = vst.msk [vmem:[%s3 + $0xec] sm:$0xf] %vm1143, %v1074
  %1204 = vst.msk [vmem:[%s3 + $0xf0] sm:$0xf] %vm1143, %v1075
  %1205 = vst.msk [vmem:[%s3 + $0xf4] sm:$0xf] %vm1143, %v1076
  %1206 = vst.msk [vmem:[%s3 + $0xf8] sm:$0xf] %vm1143, %v1077
  %1207 = vst.msk [vmem:[%s3 + $0xfc] sm:$0xf] %vm1143, %v1078
  // Predicated region
  $region14: #{_lambda_.15} parent=0 // pred_check
    _
  $region15: #{_lambda_.15} parent=0 // pred_check_branch
    %1209 = sbr.rel (0) target = $region17
  $region16: #{_lambda_.15} parent=0 // pred_region
    _
  $region17: #{_lambda_.15} parent=0 // pred_fallthru
    _
  // Predicated region
  $region18: #{_lambda_.15} parent=0 // pred_check
    _
  $region19: #{_lambda_.15} parent=0 // pred_check_branch
    %1211 = sbr.rel (0) target = $region21
  $region20: #{_lambda_.15} parent=0 // pred_region
    _
  $region21: #{_lambda_.15} parent=0 // pred_fallthru
    _

// kernel: _lambda_.16
$region0: #{_lambda_.16}
  #allocation0 [shape = 'u32[]', space=smem, size = 0x4, offset = 0x4, fixed_abs, tag = 'smem constant byte address 0x4 - core index']
  #allocation1 [shape = 'u32[144,128]{1,0:T(1,128)}', space=vmem, size = 0x12000, scoped, tag = 'internal scratch']
  %s0 = inlined_call_operand.vmem [shape: bf16[128,128], index: 0, kind: input, shape index: {}]
  %s1 = inlined_call_operand.vmem [shape: bf16[128,256], index: 1, kind: input, shape index: {}]
  %s2 = inlined_call_operand.vmem [shape: f32[1,256], index: 2, kind: input, shape index: {}]
  %s3 = inlined_call_operand.vmem [shape: bf16[128,256], index: 3, kind: output, shape index: {}]
  %s4 = sld [smem:[#allocation0]]
  $region22: #{_lambda_.16} parent=0
    _
  %s6 = ssub.s32 1, %s4
  %s7 = scalar_select 0, %s6, %s4
  // Predicated region
  $region2: #{_lambda_.16} parent=0 // pred_check
    _
  $region3: #{_lambda_.16} parent=0 // pred_check_branch
    %9 = sbr.rel (0) target = $region5
  $region4: #{_lambda_.16} parent=0 // pred_region
    _
  $region5: #{_lambda_.16} parent=0 // pred_fallthru
    _
  // Predicated region
  $region6: #{_lambda_.16} parent=0 // pred_check
    _
  $region7: #{_lambda_.16} parent=0 // pred_check_branch
    %11 = sbr.rel (0) target = $region9
  $region8: #{_lambda_.16} parent=0 // pred_region
    _
  $region9: #{_lambda_.16} parent=0 // pred_fallthru
    _
  // Predicated region
  $region10: #{_lambda_.16} parent=0 // pred_check
    _
  $region11: #{_lambda_.16} parent=0 // pred_check_branch
    %13 = sbr.rel (0) target = $region13
  $region12: #{_lambda_.16} parent=0 // pred_region
    _
  $region13: #{_lambda_.16} parent=0 // pred_fallthru
    _
  %v15 = vld [vmem:[%s0] sm:$0xf]
  %v16 = vld [vmem:[%s0 + $0x4] sm:$0xf]
  %v17 = vld [vmem:[%s0 + $0x8] sm:$0xf]
  %v18 = vld [vmem:[%s0 + $0xc] sm:$0xf]
  %v19 = vld [vmem:[%s0 + $0x10] sm:$0xf]
  %v20 = vld [vmem:[%s0 + $0x14] sm:$0xf]
  %v21 = vld [vmem:[%s0 + $0x18] sm:$0xf]
  %v22 = vld [vmem:[%s0 + $0x1c] sm:$0xf]
  %v23 = vld [vmem:[%s0 + $0x20] sm:$0xf]
  %v24 = vld [vmem:[%s0 + $0x24] sm:$0xf]
  %v25 = vld [vmem:[%s0 + $0x28] sm:$0xf]
  %v26 = vld [vmem:[%s0 + $0x2c] sm:$0xf]
  %v27 = vld [vmem:[%s0 + $0x30] sm:$0xf]
  %v28 = vld [vmem:[%s0 + $0x34] sm:$0xf]
  %v29 = vld [vmem:[%s0 + $0x38] sm:$0xf]
  %v30 = vld [vmem:[%s0 + $0x3c] sm:$0xf]
  %v31 = vld [vmem:[%s1] sm:$0xff]
  %v32 = vld [vmem:[%s1 + $0x8] sm:$0xff]
  %v33 = vld [vmem:[%s1 + $0x10] sm:$0xff]
  %v34 = vld [vmem:[%s1 + $0x18] sm:$0xff]
  %v35 = vld [vmem:[%s1 + $0x20] sm:$0xff]
  %v36 = vld [vmem:[%s1 + $0x28] sm:$0xff]
  %v37 = vld [vmem:[%s1 + $0x30] sm:$0xff]
  %v38 = vld [vmem:[%s1 + $0x38] sm:$0xff]
  %v39 = vld [vmem:[%s1 + $0x40] sm:$0xff]
  %v40 = vld [vmem:[%s1 + $0x48] sm:$0xff]
  %v41 = vld [vmem:[%s1 + $0x50] sm:$0xff]
  %v42 = vld [vmem:[%s1 + $0x58] sm:$0xff]
  %v43 = vld [vmem:[%s1 + $0x60] sm:$0xff]
  %v44 = vld [vmem:[%s1 + $0x68] sm:$0xff]
  %v45 = vld [vmem:[%s1 + $0x70] sm:$0xff]
  %v46 = vld [vmem:[%s1 + $0x78] sm:$0xff]
  %v47 = vld [vmem:[%s2] sm:$0x3]
  %v49 = vlaneseq
  %v50 = vshrl.u32 %v49, 7
  %v51 = vsub.s32 0, %v50
  %v52 = vrot.slane %v47, %v51
  %v53 = vlaneseq
  %v54 = vshrl.u32 %v53, 7
  %v55 = vsub.s32 1, %v54
  %v56 = vrot.slane %v47, %v55
  %v75 = vunpack.c.l.b16 %v15
  %v76 = vunpack.c.l.b16 %v16
  %v77 = vunpack.c.l.b16 %v17
  %v78 = vunpack.c.l.b16 %v18
  %v79 = vunpack.c.l.b16 %v19
  %v80 = vunpack.c.l.b16 %v20
  %v81 = vunpack.c.l.b16 %v21
  %v82 = vunpack.c.l.b16 %v22
  %v83 = vunpack.c.l.b16 %v23
  %v84 = vunpack.c.l.b16 %v24
  %v85 = vunpack.c.l.b16 %v25
  %v86 = vunpack.c.l.b16 %v26
  %v87 = vunpack.c.l.b16 %v27
  %v88 = vunpack.c.l.b16 %v28
  %v89 = vunpack.c.l.b16 %v29
  %v90 = vunpack.c.l.b16 %v30
  %v91 = vpack.c.b16 %v76, %v75
  %v92 = vpack.c.b16 %v78, %v77
  %v93 = vpack.c.b16 %v80, %v79
  %v94 = vpack.c.b16 %v82, %v81
  %v95 = vpack.c.b16 %v84, %v83
  %v96 = vpack.c.b16 %v86, %v85
  %v97 = vpack.c.b16 %v88, %v87
  %v98 = vpack.c.b16 %v90, %v89
  %v123 = vunpack.c.l.b16 %v31
  %v124 = vunpack.c.h.b16 %v31
  %v125 = vunpack.c.l.b16 %v32
  %v126 = vunpack.c.h.b16 %v32
  %v127 = vunpack.c.l.b16 %v33
  %v128 = vunpack.c.h.b16 %v33
  %v129 = vunpack.c.l.b16 %v34
  %v130 = vunpack.c.h.b16 %v34
  %v131 = vunpack.c.l.b16 %v35
  %v132 = vunpack.c.h.b16 %v35
  %v133 = vunpack.c.l.b16 %v36
  %v134 = vunpack.c.h.b16 %v36
  %v135 = vunpack.c.l.b16 %v37
  %v136 = vunpack.c.h.b16 %v37
  %v137 = vunpack.c.l.b16 %v38
  %v138 = vunpack.c.h.b16 %v38
  %v139 = vunpack.c.l.b16 %v39
  %v140 = vunpack.c.h.b16 %v39
  %v141 = vunpack.c.l.b16 %v40
  %v142 = vunpack.c.h.b16 %v40
  %v143 = vunpack.c.l.b16 %v41
  %v144 = vunpack.c.h.b16 %v41
  %v145 = vunpack.c.l.b16 %v42
  %v146 = vunpack.c.h.b16 %v42
  %v147 = vunpack.c.l.b16 %v43
  %v148 = vunpack.c.h.b16 %v43
  %v149 = vunpack.c.l.b16 %v44
  %v150 = vunpack.c.h.b16 %v44
  %v151 = vunpack.c.l.b16 %v45
  %v152 = vunpack.c.h.b16 %v45
  %v153 = vunpack.c.l.b16 %v46
  %v154 = vunpack.c.h.b16 %v46
  %v155 = vpack.c.b16 %v125, %v123
  %v156 = vpack.c.b16 %v126, %v124
  %v157 = vpack.c.b16 %v129, %v127
  %v158 = vpack.c.b16 %v130, %v128
  %v159 = vpack.c.b16 %v133, %v131
  %v160 = vpack.c.b16 %v134, %v132
  %v161 = vpack.c.b16 %v137, %v135
  %v162 = vpack.c.b16 %v138, %v136
  %v163 = vpack.c.b16 %v141, %v139
  %v164 = vpack.c.b16 %v142, %v140
  %v165 = vpack.c.b16 %v145, %v143
  %v166 = vpack.c.b16 %v146, %v144
  %v167 = vpack.c.b16 %v149, %v147
  %v168 = vpack.c.b16 %v150, %v148
  %v169 = vpack.c.b16 %v153, %v151
  %v170 = vpack.c.b16 %v154, %v152
  %187 = vmatprep.subr.bf16.mxu0 %v156
  %188 = vmatpush1.bf16.msra.mxu0 %v155
  %189 = vmatprep.subr.bf16.mxu0 %v158
  %190 = vmatpush1.bf16.msra.mxu0 %v157
  %191 = vmatprep.subr.bf16.mxu0 %v160
  %192 = vmatpush1.bf16.msra.mxu0 %v159
  %193 = vmatprep.subr.bf16.mxu0 %v162
  %194 = vmatpush1.bf16.msra.mxu0 %v161
  %195 = vmatprep.subr.bf16.mxu0 %v164
  %196 = vmatpush1.bf16.msra.mxu0 %v163
  %197 = vmatprep.subr.bf16.mxu0 %v166
  %198 = vmatpush1.bf16.msra.mxu0 %v165
  %199 = vmatprep.subr.bf16.mxu0 %v168
  %200 = vmatpush1.bf16.msra.mxu0 %v167
  %201 = vmatprep.subr.bf16.mxu0 %v170
  %202 = vmatpush1.bf16.msra.mxu0 %v169
  %203 = vmatprep.subr.bf16.mxu0 0
  %204 = vmatpush1.bf16.msra.mxu0 0
  %205 = vmatprep.subr.bf16.mxu0 0
  %206 = vmatpush1.bf16.msra.mxu0 0
  %207 = vmatprep.subr.bf16.mxu0 0
  %208 = vmatpush1.bf16.msra.mxu0 0
  %209 = vmatprep.subr.bf16.mxu0 0
  %210 = vmatpush1.bf16.msra.mxu0 0
  %211 = vmatprep.subr.bf16.mxu0 0
  %212 = vmatpush1.bf16.msra.mxu0 0
  %213 = vmatprep.subr.bf16.mxu0 0
  %214 = vmatpush1.bf16.msra.mxu0 0
  %215 = vmatprep.subr.bf16.mxu0 0
  %216 = vmatpush1.bf16.msra.mxu0 0
  %217 = vmatprep.subr.bf16.mxu0 0
  %218 = vmatpush1.bf16.msra.mxu0 0
  %219 = vmatprep.mubr.bf16.mxu0 0
  %220 = vmatmul.mubr.bf16.gmra.mrb[0].mxu0 %v91
  %v221 = vpop.f32.mrb[0].mxu0
  %v222 = vadd.f32 %v52, %v221
  %v223 = vpop.f32.mrb[0].mxu0
  %v224 = vadd.f32 %v56, %v223
  %v225 = vpop.f32.mrb[0].mxu0
  %v226 = vadd.f32 %v52, %v225
  %v227 = vpop.f32.mrb[0].mxu0
  %v228 = vadd.f32 %v56, %v227
  %229 = vmatprep.mubr.bf16.mxu0 0
  %230 = vmatmul.mubr.bf16.gmra.mrb[0].mxu0 %v92
  %v231 = vpop.f32.mrb[0].mxu0
  %v232 = vadd.f32 %v52, %v231
  %v233 = vpop.f32.mrb[0].mxu0
  %v234 = vadd.f32 %v56, %v233
  %v235 = vpop.f32.mrb[0].mxu0
  %v236 = vadd.f32 %v52, %v235
  %v237 = vpop.f32.mrb[0].mxu0
  %v238 = vadd.f32 %v56, %v237
  %239 = vmatprep.mubr.bf16.mxu0 0
  %240 = vmatmul.mubr.bf16.gmra.mrb[0].mxu0 %v93
  %v241 = vpop.f32.mrb[0].mxu0
  %v242 = vadd.f32 %v52, %v241
  %v243 = vpop.f32.mrb[0].mxu0
  %v244 = vadd.f32 %v56, %v243
  %v245 = vpop.f32.mrb[0].mxu0
  %v246 = vadd.f32 %v52, %v245
  %v247 = vpop.f32.mrb[0].mxu0
  %v248 = vadd.f32 %v56, %v247
  %249 = vmatprep.mubr.bf16.mxu0 0
  %250 = vmatmul.mubr.bf16.gmra.mrb[0].mxu0 %v94
  %v251 = vpop.f32.mrb[0].mxu0
  %v252 = vadd.f32 %v52, %v251
  %v253 = vpop.f32.mrb[0].mxu0
  %v254 = vadd.f32 %v56, %v253
  %v255 = vpop.f32.mrb[0].mxu0
  %v256 = vadd.f32 %v52, %v255
  %v257 = vpop.f32.mrb[0].mxu0
  %v258 = vadd.f32 %v56, %v257
  %259 = vmatprep.mubr.bf16.mxu0 0
  %260 = vmatmul.mubr.bf16.gmra.mrb[0].mxu0 %v95
  %v261 = vpop.f32.mrb[0].mxu0
  %v262 = vadd.f32 %v52, %v261
  %v263 = vpop.f32.mrb[0].mxu0
  %v264 = vadd.f32 %v56, %v263
  %v265 = vpop.f32.mrb[0].mxu0
  %v266 = vadd.f32 %v52, %v265
  %v267 = vpop.f32.mrb[0].mxu0
  %v268 = vadd.f32 %v56, %v267
  %269 = vmatprep.mubr.bf16.mxu0 0
  %270 = vmatmul.mubr.bf16.gmra.mrb[0].mxu0 %v96
  %v271 = vpop.f32.mrb[0].mxu0
  %v272 = vadd.f32 %v52, %v271
  %v273 = vpop.f32.mrb[0].mxu0
  %v274 = vadd.f32 %v56, %v273
  %v275 = vpop.f32.mrb[0].mxu0
  %v276 = vadd.f32 %v52, %v275
  %v277 = vpop.f32.mrb[0].mxu0
  %v278 = vadd.f32 %v56, %v277
  %279 = vmatprep.mubr.bf16.mxu0 0
  %280 = vmatmul.mubr.bf16.gmra.mrb[0].mxu0 %v97
  %v281 = vpop.f32.mrb[0].mxu0
  %v282 = vadd.f32 %v52, %v281
  %v283 = vpop.f32.mrb[0].mxu0
  %v284 = vadd.f32 %v56, %v283
  %v285 = vpop.f32.mrb[0].mxu0
  %v286 = vadd.f32 %v52, %v285
  %v287 = vpop.f32.mrb[0].mxu0
  %v288 = vadd.f32 %v56, %v287
  %289 = vmatprep.mubr.bf16.mxu0 0
  %290 = vmatmul.mubr.bf16.gmra.mrb[0].mxu0 %v98
  %v291 = vpop.f32.mrb[0].mxu0
  %v292 = vadd.f32 %v52, %v291
  %v293 = vpop.f32.mrb[0].mxu0
  %v294 = vadd.f32 %v56, %v293
  %v295 = vpop.f32.mrb[0].mxu0
  %v296 = vadd.f32 %v52, %v295
  %v297 = vpop.f32.mrb[0].mxu0
  %v298 = vadd.f32 %v56, %v297
  %299 = vdwg.mxu0
  %v300 = vpack.c.bf16 %v226, %v222
  %v301 = vpack.c.bf16 %v228, %v224
  %v302 = vpack.c.bf16 %v236, %v232
  %v303 = vpack.c.bf16 %v238, %v234
  %v304 = vpack.c.bf16 %v246, %v242
  %v305 = vpack.c.bf16 %v248, %v244
  %v306 = vpack.c.bf16 %v256, %v252
  %v307 = vpack.c.bf16 %v258, %v254
  %v308 = vpack.c.bf16 %v266, %v262
  %v309 = vpack.c.bf16 %v268, %v264
  %v310 = vpack.c.bf16 %v276, %v272
  %v311 = vpack.c.bf16 %v278, %v274
  %v312 = vpack.c.bf16 %v286, %v282
  %v313 = vpack.c.bf16 %v288, %v284
  %v314 = vpack.c.bf16 %v296, %v292
  %v315 = vpack.c.bf16 %v298, %v294
  %v332 = vunpack.c.l.b16 %v300
  %v333 = vunpack.c.l.b16 %v301
  %v334 = vunpack.c.h.b16 %v300
  %v335 = vunpack.c.h.b16 %v301
  %v336 = vunpack.c.l.b16 %v302
  %v337 = vunpack.c.l.b16 %v303
  %v338 = vunpack.c.h.b16 %v302
  %v339 = vunpack.c.h.b16 %v303
  %v340 = vunpack.c.l.b16 %v304
  %v341 = vunpack.c.l.b16 %v305
  %v342 = vunpack.c.h.b16 %v304
  %v343 = vunpack.c.h.b16 %v305
  %v344 = vunpack.c.l.b16 %v306
  %v345 = vunpack.c.l.b16 %v307
  %v346 = vunpack.c.h.b16 %v306
  %v347 = vunpack.c.h.b16 %v307
  %v348 = vunpack.c.l.b16 %v308
  %v349 = vunpack.c.l.b16 %v309
  %v350 = vunpack.c.h.b16 %v308
  %v351 = vunpack.c.h.b16 %v309
  %v352 = vunpack.c.l.b16 %v310
  %v353 = vunpack.c.l.b16 %v311
  %v354 = vunpack.c.h.b16 %v310
  %v355 = vunpack.c.h.b16 %v311
  %v356 = vunpack.c.l.b16 %v312
  %v357 = vunpack.c.l.b16 %v313
  %v358 = vunpack.c.h.b16 %v312
  %v359 = vunpack.c.h.b16 %v313
  %v360 = vunpack.c.l.b16 %v314
  %v361 = vunpack.c.l.b16 %v315
  %v362 = vunpack.c.h.b16 %v314
  %v363 = vunpack.c.h.b16 %v315
  %v364 = vpack.c.b16 %v333, %v332
  %v365 = vpack.c.b16 %v335, %v334
  %v366 = vpack.c.b16 %v337, %v336
  %v367 = vpack.c.b16 %v339, %v338
  %v368 = vpack.c.b16 %v341, %v340
  %v369 = vpack.c.b16 %v343, %v342
  %v370 = vpack.c.b16 %v345, %v344
  %v371 = vpack.c.b16 %v347, %v346
  %v372 = vpack.c.b16 %v349, %v348
  %v373 = vpack.c.b16 %v351, %v350
  %v374 = vpack.c.b16 %v353, %v352
  %v375 = vpack.c.b16 %v355, %v354
  %v376 = vpack.c.b16 %v357, %v356
  %v377 = vpack.c.b16 %v359, %v358
  %v378 = vpack.c.b16 %v361, %v360
  %v379 = vpack.c.b16 %v363, %v362
  %396 = vst [vmem:[%s3] sm:$0xff] %v364
  %397 = vst [vmem:[%s3 + $0x8] sm:$0xff] %v365
  %398 = vst [vmem:[%s3 + $0x10] sm:$0xff] %v366
  %399 = vst [vmem:[%s3 + $0x18] sm:$0xff] %v367
  %400 = vst [vmem:[%s3 + $0x20] sm:$0xff] %v368
  %401 = vst [vmem:[%s3 + $0x28] sm:$0xff] %v369
  %402 = vst [vmem:[%s3 + $0x30] sm:$0xff] %v370
  %403 = vst [vmem:[%s3 + $0x38] sm:$0xff] %v371
  %404 = vst [vmem:[%s3 + $0x40] sm:$0xff] %v372
  %405 = vst [vmem:[%s3 + $0x48] sm:$0xff] %v373
  %406 = vst [vmem:[%s3 + $0x50] sm:$0xff] %v374
  %407 = vst [vmem:[%s3 + $0x58] sm:$0xff] %v375
  %408 = vst [vmem:[%s3 + $0x60] sm:$0xff] %v376
  %409 = vst [vmem:[%s3 + $0x68] sm:$0xff] %v377
  %410 = vst [vmem:[%s3 + $0x70] sm:$0xff] %v378
  %411 = vst [vmem:[%s3 + $0x78] sm:$0xff] %v379
  // Predicated region
  $region14: #{_lambda_.16} parent=0 // pred_check
    _
  $region15: #{_lambda_.16} parent=0 // pred_check_branch
    %413 = sbr.rel (0) target = $region17
  $region16: #{_lambda_.16} parent=0 // pred_region
    _
  $region17: #{_lambda_.16} parent=0 // pred_fallthru
    _
  // Predicated region
  $region18: #{_lambda_.16} parent=0 // pred_check
    _
  $region19: #{_lambda_.16} parent=0 // pred_check_branch
    %415 = sbr.rel (0) target = $region21
  $region20: #{_lambda_.16} parent=0 // pred_region
    _
  $region21: #{_lambda_.16} parent=0 // pred_fallthru
    _

// kernel: _lambda_.18
$region0: #{_lambda_.18}
  #allocation0 [shape = 'u32[]', space=smem, size = 0x4, offset = 0x4, fixed_abs, tag = 'smem constant byte address 0x4 - core index']
  #allocation1 [shape = 'u32[144,128]{1,0:T(1,128)}', space=vmem, size = 0x12000, scoped, tag = 'internal scratch']
  %s0 = inlined_call_operand.vmem [shape: bf16[128,640], index: 0, kind: input, shape index: {}]
  %s1 = inlined_call_operand.vmem [shape: bf16[640,64], index: 1, kind: input, shape index: {}]
  %s2 = inlined_call_operand.vmem [shape: f32[1,64], index: 2, kind: input, shape index: {}]
  %s3 = inlined_call_operand.vmem [shape: bf16[128,64], index: 3, kind: output, shape index: {}]
  %s4 = sld [smem:[#allocation0]]
  $region22: #{_lambda_.18} parent=0
    _
  %s6 = ssub.s32 1, %s4
  %s7 = scalar_select 0, %s6, %s4
  // Predicated region
  $region2: #{_lambda_.18} parent=0 // pred_check
    _
  $region3: #{_lambda_.18} parent=0 // pred_check_branch
    %9 = sbr.rel (0) target = $region5
  $region4: #{_lambda_.18} parent=0 // pred_region
    _
  $region5: #{_lambda_.18} parent=0 // pred_fallthru
    _
  // Predicated region
  $region6: #{_lambda_.18} parent=0 // pred_check
    _
  $region7: #{_lambda_.18} parent=0 // pred_check_branch
    %11 = sbr.rel (0) target = $region9
  $region8: #{_lambda_.18} parent=0 // pred_region
    _
  $region9: #{_lambda_.18} parent=0 // pred_fallthru
    _
  // Predicated region
  $region10: #{_lambda_.18} parent=0 // pred_check
    _
  $region11: #{_lambda_.18} parent=0 // pred_check_branch
    %13 = sbr.rel (0) target = $region13
  $region12: #{_lambda_.18} parent=0 // pred_region
    _
  $region13: #{_lambda_.18} parent=0 // pred_fallthru
    _
  %v15 = vld [vmem:[%s0] sm:$0xff]
  %v16 = vld [vmem:[%s0 + $0x8] sm:$0xff]
  %v17 = vld [vmem:[%s0 + $0x10] sm:$0xf]
  %v18 = vld [vmem:[%s0 + $0x14] sm:$0xff]
  %v19 = vld [vmem:[%s0 + $0x1c] sm:$0xff]
  %v20 = vld [vmem:[%s0 + $0x24] sm:$0xf]
  %v21 = vld [vmem:[%s0 + $0x28] sm:$0xff]
  %v22 = vld [vmem:[%s0 + $0x30] sm:$0xff]
  %v23 = vld [vmem:[%s0 + $0x38] sm:$0xf]
  %v24 = vld [vmem:[%s0 + $0x3c] sm:$0xff]
  %v25 = vld [vmem:[%s0 + $0x44] sm:$0xff]
  %v26 = vld [vmem:[%s0 + $0x4c] sm:$0xf]
  %v27 = vld [vmem:[%s0 + $0x50] sm:$0xff]
  %v28 = vld [vmem:[%s0 + $0x58] sm:$0xff]
  %v29 = vld [vmem:[%s0 + $0x60] sm:$0xf]
  %v30 = vld [vmem:[%s0 + $0x64] sm:$0xff]
  %v31 = vld [vmem:[%s0 + $0x6c] sm:$0xff]
  %v32 = vld [vmem:[%s0 + $0x74] sm:$0xf]
  %v33 = vld [vmem:[%s0 + $0x78] sm:$0xff]
  %v34 = vld [vmem:[%s0 + $0x80] sm:$0xff]
  %v35 = vld [vmem:[%s0 + $0x88] sm:$0xf]
  %v36 = vld [vmem:[%s0 + $0x8c] sm:$0xff]
  %v37 = vld [vmem:[%s0 + $0x94] sm:$0xff]
  %v38 = vld [vmem:[%s0 + $0x9c] sm:$0xf]
  %v39 = vld [vmem:[%s0 + $0xa0] sm:$0xff]
  %v40 = vld [vmem:[%s0 + $0xa8] sm:$0xff]
  %v41 = vld [vmem:[%s0 + $0xb0] sm:$0xf]
  %v42 = vld [vmem:[%s0 + $0xb4] sm:$0xff]
  %v43 = vld [vmem:[%s0 + $0xbc] sm:$0xff]
  %v44 = vld [vmem:[%s0 + $0xc4] sm:$0xf]
  %v45 = vld [vmem:[%s0 + $0xc8] sm:$0xff]
  %v46 = vld [vmem:[%s0 + $0xd0] sm:$0xff]
  %v47 = vld [vmem:[%s0 + $0xd8] sm:$0xf]
  %v48 = vld [vmem:[%s0 + $0xdc] sm:$0xff]
  %v49 = vld [vmem:[%s0 + $0xe4] sm:$0xff]
  %v50 = vld [vmem:[%s0 + $0xec] sm:$0xf]
  %v51 = vld [vmem:[%s0 + $0xf0] sm:$0xff]
  %v52 = vld [vmem:[%s0 + $0xf8] sm:$0xff]
  %v53 = vld [vmem:[%s0 + $0x100] sm:$0xf]
  %v54 = vld [vmem:[%s0 + $0x104] sm:$0xff]
  %v55 = vld [vmem:[%s0 + $0x10c] sm:$0xff]
  %v56 = vld [vmem:[%s0 + $0x114] sm:$0xf]
  %v57 = vld [vmem:[%s0 + $0x118] sm:$0xff]
  %v58 = vld [vmem:[%s0 + $0x120] sm:$0xff]
  %v59 = vld [vmem:[%s0 + $0x128] sm:$0xf]
  %v60 = vld [vmem:[%s0 + $0x12c] sm:$0xff]
  %v61 = vld [vmem:[%s0 + $0x134] sm:$0xff]
  %v62 = vld [vmem:[%s0 + $0x13c] sm:$0xf]
  %v63 = vld [vmem:[%s1] sm:$0xf]
  %v64 = vld [vmem:[%s1 + $0x4] sm:$0xf]
  %v65 = vld [vmem:[%s1 + $0x8] sm:$0xf]
  %v66 = vld [vmem:[%s1 + $0xc] sm:$0xf]
  %v67 = vld [vmem:[%s1 + $0x10] sm:$0xf]
  %v68 = vld [vmem:[%s1 + $0x14] sm:$0xf]
  %v69 = vld [vmem:[%s1 + $0x18] sm:$0xf]
  %v70 = vld [vmem:[%s1 + $0x1c] sm:$0xf]
  %v71 = vld [vmem:[%s1 + $0x20] sm:$0xf]
  %v72 = vld [vmem:[%s1 + $0x24] sm:$0xf]
  %v73 = vld [vmem:[%s1 + $0x28] sm:$0xf]
  %v74 = vld [vmem:[%s1 + $0x2c] sm:$0xf]
  %v75 = vld [vmem:[%s1 + $0x30] sm:$0xf]
  %v76 = vld [vmem:[%s1 + $0x34] sm:$0xf]
  %v77 = vld [vmem:[%s1 + $0x38] sm:$0xf]
  %v78 = vld [vmem:[%s1 + $0x3c] sm:$0xf]
  %v79 = vld [vmem:[%s1 + $0x40] sm:$0xf]
  %v80 = vld [vmem:[%s1 + $0x44] sm:$0xf]
  %v81 = vld [vmem:[%s1 + $0x48] sm:$0xf]
  %v82 = vld [vmem:[%s1 + $0x4c] sm:$0xf]
  %v83 = vld [vmem:[%s1 + $0x50] sm:$0xf]
  %v84 = vld [vmem:[%s1 + $0x54] sm:$0xf]
  %v85 = vld [vmem:[%s1 + $0x58] sm:$0xf]
  %v86 = vld [vmem:[%s1 + $0x5c] sm:$0xf]
  %v87 = vld [vmem:[%s1 + $0x60] sm:$0xf]
  %v88 = vld [vmem:[%s1 + $0x64] sm:$0xf]
  %v89 = vld [vmem:[%s1 + $0x68] sm:$0xf]
  %v90 = vld [vmem:[%s1 + $0x6c] sm:$0xf]
  %v91 = vld [vmem:[%s1 + $0x70] sm:$0xf]
  %v92 = vld [vmem:[%s1 + $0x74] sm:$0xf]
  %v93 = vld [vmem:[%s1 + $0x78] sm:$0xf]
  %v94 = vld [vmem:[%s1 + $0x7c] sm:$0xf]
  %v95 = vld [vmem:[%s1 + $0x80] sm:$0xf]
  %v96 = vld [vmem:[%s1 + $0x84] sm:$0xf]
  %v97 = vld [vmem:[%s1 + $0x88] sm:$0xf]
  %v98 = vld [vmem:[%s1 + $0x8c] sm:$0xf]
  %v99 = vld [vmem:[%s1 + $0x90] sm:$0xf]
  %v100 = vld [vmem:[%s1 + $0x94] sm:$0xf]
  %v101 = vld [vmem:[%s1 + $0x98] sm:$0xf]
  %v102 = vld [vmem:[%s1 + $0x9c] sm:$0xf]
  %v103 = vld [vmem:[%s1 + $0xa0] sm:$0xf]
  %v104 = vld [vmem:[%s1 + $0xa4] sm:$0xf]
  %v105 = vld [vmem:[%s1 + $0xa8] sm:$0xf]
  %v106 = vld [vmem:[%s1 + $0xac] sm:$0xf]
  %v107 = vld [vmem:[%s1 + $0xb0] sm:$0xf]
  %v108 = vld [vmem:[%s1 + $0xb4] sm:$0xf]
  %v109 = vld [vmem:[%s1 + $0xb8] sm:$0xf]
  %v110 = vld [vmem:[%s1 + $0xbc] sm:$0xf]
  %v111 = vld [vmem:[%s1 + $0xc0] sm:$0xf]
  %v112 = vld [vmem:[%s1 + $0xc4] sm:$0xf]
  %v113 = vld [vmem:[%s1 + $0xc8] sm:$0xf]
  %v114 = vld [vmem:[%s1 + $0xcc] sm:$0xf]
  %v115 = vld [vmem:[%s1 + $0xd0] sm:$0xf]
  %v116 = vld [vmem:[%s1 + $0xd4] sm:$0xf]
  %v117 = vld [vmem:[%s1 + $0xd8] sm:$0xf]
  %v118 = vld [vmem:[%s1 + $0xdc] sm:$0xf]
  %v119 = vld [vmem:[%s1 + $0xe0] sm:$0xf]
  %v120 = vld [vmem:[%s1 + $0xe4] sm:$0xf]
  %v121 = vld [vmem:[%s1 + $0xe8] sm:$0xf]
  %v122 = vld [vmem:[%s1 + $0xec] sm:$0xf]
  %v123 = vld [vmem:[%s1 + $0xf0] sm:$0xf]
  %v124 = vld [vmem:[%s1 + $0xf4] sm:$0xf]
  %v125 = vld [vmem:[%s1 + $0xf8] sm:$0xf]
  %v126 = vld [vmem:[%s1 + $0xfc] sm:$0xf]
  %v127 = vld [vmem:[%s1 + $0x100] sm:$0xf]
  %v128 = vld [vmem:[%s1 + $0x104] sm:$0xf]
  %v129 = vld [vmem:[%s1 + $0x108] sm:$0xf]
  %v130 = vld [vmem:[%s1 + $0x10c] sm:$0xf]
  %v131 = vld [vmem:[%s1 + $0x110] sm:$0xf]
  %v132 = vld [vmem:[%s1 + $0x114] sm:$0xf]
  %v133 = vld [vmem:[%s1 + $0x118] sm:$0xf]
  %v134 = vld [vmem:[%s1 + $0x11c] sm:$0xf]
  %v135 = vld [vmem:[%s1 + $0x120] sm:$0xf]
  %v136 = vld [vmem:[%s1 + $0x124] sm:$0xf]
  %v137 = vld [vmem:[%s1 + $0x128] sm:$0xf]
  %v138 = vld [vmem:[%s1 + $0x12c] sm:$0xf]
  %v139 = vld [vmem:[%s1 + $0x130] sm:$0xf]
  %v140 = vld [vmem:[%s1 + $0x134] sm:$0xf]
  %v141 = vld [vmem:[%s1 + $0x138] sm:$0xf]
  %v142 = vld [vmem:[%s1 + $0x13c] sm:$0xf]
  %v143 = vld [vmem:[%s2] sm:$0x1]
  %v145 = vlaneseq
  %v146 = vshrl.u32 %v145, 7
  %v147 = vsub.s32 0, %v146
  %v148 = vrot.slane %v143, %v147
  %v198 = vunpack.c.l.b16 %v15
  %v199 = vunpack.c.h.b16 %v15
  %v200 = vunpack.c.l.b16 %v16
  %v201 = vunpack.c.h.b16 %v16
  %v202 = vunpack.c.l.b16 %v17
  %v203 = vunpack.c.l.b16 %v18
  %v204 = vunpack.c.h.b16 %v18
  %v205 = vunpack.c.l.b16 %v19
  %v206 = vunpack.c.h.b16 %v19
  %v207 = vunpack.c.l.b16 %v20
  %v208 = vunpack.c.l.b16 %v21
  %v209 = vunpack.c.h.b16 %v21
  %v210 = vunpack.c.l.b16 %v22
  %v211 = vunpack.c.h.b16 %v22
  %v212 = vunpack.c.l.b16 %v23
  %v213 = vunpack.c.l.b16 %v24
  %v214 = vunpack.c.h.b16 %v24
  %v215 = vunpack.c.l.b16 %v25
  %v216 = vunpack.c.h.b16 %v25
  %v217 = vunpack.c.l.b16 %v26
  %v218 = vunpack.c.l.b16 %v27
  %v219 = vunpack.c.h.b16 %v27
  %v220 = vunpack.c.l.b16 %v28
  %v221 = vunpack.c.h.b16 %v28
  %v222 = vunpack.c.l.b16 %v29
  %v223 = vunpack.c.l.b16 %v30
  %v224 = vunpack.c.h.b16 %v30
  %v225 = vunpack.c.l.b16 %v31
  %v226 = vunpack.c.h.b16 %v31
  %v227 = vunpack.c.l.b16 %v32
  %v228 = vunpack.c.l.b16 %v33
  %v229 = vunpack.c.h.b16 %v33
  %v230 = vunpack.c.l.b16 %v34
  %v231 = vunpack.c.h.b16 %v34
  %v232 = vunpack.c.l.b16 %v35
  %v233 = vunpack.c.l.b16 %v36
  %v234 = vunpack.c.h.b16 %v36
  %v235 = vunpack.c.l.b16 %v37
  %v236 = vunpack.c.h.b16 %v37
  %v237 = vunpack.c.l.b16 %v38
  %v238 = vunpack.c.l.b16 %v39
  %v239 = vunpack.c.h.b16 %v39
  %v240 = vunpack.c.l.b16 %v40
  %v241 = vunpack.c.h.b16 %v40
  %v242 = vunpack.c.l.b16 %v41
  %v243 = vunpack.c.l.b16 %v42
  %v244 = vunpack.c.h.b16 %v42
  %v245 = vunpack.c.l.b16 %v43
  %v246 = vunpack.c.h.b16 %v43
  %v247 = vunpack.c.l.b16 %v44
  %v248 = vunpack.c.l.b16 %v45
  %v249 = vunpack.c.h.b16 %v45
  %v250 = vunpack.c.l.b16 %v46
  %v251 = vunpack.c.h.b16 %v46
  %v252 = vunpack.c.l.b16 %v47
  %v253 = vunpack.c.l.b16 %v48
  %v254 = vunpack.c.h.b16 %v48
  %v255 = vunpack.c.l.b16 %v49
  %v256 = vunpack.c.h.b16 %v49
  %v257 = vunpack.c.l.b16 %v50
  %v258 = vunpack.c.l.b16 %v51
  %v259 = vunpack.c.h.b16 %v51
  %v260 = vunpack.c.l.b16 %v52
  %v261 = vunpack.c.h.b16 %v52
  %v262 = vunpack.c.l.b16 %v53
  %v263 = vunpack.c.l.b16 %v54
  %v264 = vunpack.c.h.b16 %v54
  %v265 = vunpack.c.l.b16 %v55
  %v266 = vunpack.c.h.b16 %v55
  %v267 = vunpack.c.l.b16 %v56
  %v268 = vunpack.c.l.b16 %v57
  %v269 = vunpack.c.h.b16 %v57
  %v270 = vunpack.c.l.b16 %v58
  %v271 = vunpack.c.h.b16 %v58
  %v272 = vunpack.c.l.b16 %v59
  %v273 = vunpack.c.l.b16 %v60
  %v274 = vunpack.c.h.b16 %v60
  %v275 = vunpack.c.l.b16 %v61
  %v276 = vunpack.c.h.b16 %v61
  %v277 = vunpack.c.l.b16 %v62
  %v278 = vpack.c.b16 %v203, %v198
  %v279 = vpack.c.b16 %v204, %v199
  %v280 = vpack.c.b16 %v205, %v200
  %v281 = vpack.c.b16 %v206, %v201
  %v282 = vpack.c.b16 %v207, %v202
  %v283 = vpack.c.b16 %v213, %v208
  %v284 = vpack.c.b16 %v214, %v209
  %v285 = vpack.c.b16 %v215, %v210
  %v286 = vpack.c.b16 %v216, %v211
  %v287 = vpack.c.b16 %v217, %v212
  %v288 = vpack.c.b16 %v223, %v218
  %v289 = vpack.c.b16 %v224, %v219
  %v290 = vpack.c.b16 %v225, %v220
  %v291 = vpack.c.b16 %v226, %v221
  %v292 = vpack.c.b16 %v227, %v222
  %v293 = vpack.c.b16 %v233, %v228
  %v294 = vpack.c.b16 %v234, %v229
  %v295 = vpack.c.b16 %v235, %v230
  %v296 = vpack.c.b16 %v236, %v231
  %v297 = vpack.c.b16 %v237, %v232
  %v298 = vpack.c.b16 %v243, %v238
  %v299 = vpack.c.b16 %v244, %v239
  %v300 = vpack.c.b16 %v245, %v240
  %v301 = vpack.c.b16 %v246, %v241
  %v302 = vpack.c.b16 %v247, %v242
  %v303 = vpack.c.b16 %v253, %v248
  %v304 = vpack.c.b16 %v254, %v249
  %v305 = vpack.c.b16 %v255, %v250
  %v306 = vpack.c.b16 %v256, %v251
  %v307 = vpack.c.b16 %v257, %v252
  %v308 = vpack.c.b16 %v263, %v258
  %v309 = vpack.c.b16 %v264, %v259
  %v310 = vpack.c.b16 %v265, %v260
  %v311 = vpack.c.b16 %v266, %v261
  %v312 = vpack.c.b16 %v267, %v262
  %v313 = vpack.c.b16 %v273, %v268
  %v314 = vpack.c.b16 %v274, %v269
  %v315 = vpack.c.b16 %v275, %v270
  %v316 = vpack.c.b16 %v276, %v271
  %v317 = vpack.c.b16 %v277, %v272
  %v438 = vunpack.c.l.b16 %v63
  %v439 = vunpack.c.l.b16 %v64
  %v440 = vunpack.c.l.b16 %v65
  %v441 = vunpack.c.l.b16 %v66
  %v442 = vunpack.c.l.b16 %v67
  %v443 = vunpack.c.l.b16 %v68
  %v444 = vunpack.c.l.b16 %v69
  %v445 = vunpack.c.l.b16 %v70
  %v446 = vunpack.c.l.b16 %v71
  %v447 = vunpack.c.l.b16 %v72
  %v448 = vunpack.c.l.b16 %v73
  %v449 = vunpack.c.l.b16 %v74
  %v450 = vunpack.c.l.b16 %v75
  %v451 = vunpack.c.l.b16 %v76
  %v452 = vunpack.c.l.b16 %v77
  %v453 = vunpack.c.l.b16 %v78
  %v454 = vunpack.c.l.b16 %v79
  %v455 = vunpack.c.l.b16 %v80
  %v456 = vunpack.c.l.b16 %v81
  %v457 = vunpack.c.l.b16 %v82
  %v458 = vunpack.c.l.b16 %v83
  %v459 = vunpack.c.l.b16 %v84
  %v460 = vunpack.c.l.b16 %v85
  %v461 = vunpack.c.l.b16 %v86
  %v462 = vunpack.c.l.b16 %v87
  %v463 = vunpack.c.l.b16 %v88
  %v464 = vunpack.c.l.b16 %v89
  %v465 = vunpack.c.l.b16 %v90
  %v466 = vunpack.c.l.b16 %v91
  %v467 = vunpack.c.l.b16 %v92
  %v468 = vunpack.c.l.b16 %v93
  %v469 = vunpack.c.l.b16 %v94
  %v470 = vunpack.c.l.b16 %v95
  %v471 = vunpack.c.l.b16 %v96
  %v472 = vunpack.c.l.b16 %v97
  %v473 = vunpack.c.l.b16 %v98
  %v474 = vunpack.c.l.b16 %v99
  %v475 = vunpack.c.l.b16 %v100
  %v476 = vunpack.c.l.b16 %v101
  %v477 = vunpack.c.l.b16 %v102
  %v478 = vunpack.c.l.b16 %v103
  %v479 = vunpack.c.l.b16 %v104
  %v480 = vunpack.c.l.b16 %v105
  %v481 = vunpack.c.l.b16 %v106
  %v482 = vunpack.c.l.b16 %v107
  %v483 = vunpack.c.l.b16 %v108
  %v484 = vunpack.c.l.b16 %v109
  %v485 = vunpack.c.l.b16 %v110
  %v486 = vunpack.c.l.b16 %v111
  %v487 = vunpack.c.l.b16 %v112
  %v488 = vunpack.c.l.b16 %v113
  %v489 = vunpack.c.l.b16 %v114
  %v490 = vunpack.c.l.b16 %v115
  %v491 = vunpack.c.l.b16 %v116
  %v492 = vunpack.c.l.b16 %v117
  %v493 = vunpack.c.l.b16 %v118
  %v494 = vunpack.c.l.b16 %v119
  %v495 = vunpack.c.l.b16 %v120
  %v496 = vunpack.c.l.b16 %v121
  %v497 = vunpack.c.l.b16 %v122
  %v498 = vunpack.c.l.b16 %v123
  %v499 = vunpack.c.l.b16 %v124
  %v500 = vunpack.c.l.b16 %v125
  %v501 = vunpack.c.l.b16 %v126
  %v502 = vunpack.c.l.b16 %v127
  %v503 = vunpack.c.l.b16 %v128
  %v504 = vunpack.c.l.b16 %v129
  %v505 = vunpack.c.l.b16 %v130
  %v506 = vunpack.c.l.b16 %v131
  %v507 = vunpack.c.l.b16 %v132
  %v508 = vunpack.c.l.b16 %v133
  %v509 = vunpack.c.l.b16 %v134
  %v510 = vunpack.c.l.b16 %v135
  %v511 = vunpack.c.l.b16 %v136
  %v512 = vunpack.c.l.b16 %v137
  %v513 = vunpack.c.l.b16 %v138
  %v514 = vunpack.c.l.b16 %v139
  %v515 = vunpack.c.l.b16 %v140
  %v516 = vunpack.c.l.b16 %v141
  %v517 = vunpack.c.l.b16 %v142
  %v518 = vpack.c.b16 %v439, %v438
  %v519 = vpack.c.b16 %v441, %v440
  %v520 = vpack.c.b16 %v443, %v442
  %v521 = vpack.c.b16 %v445, %v444
  %v522 = vpack.c.b16 %v447, %v446
  %v523 = vpack.c.b16 %v449, %v448
  %v524 = vpack.c.b16 %v451, %v450
  %v525 = vpack.c.b16 %v453, %v452
  %v526 = vpack.c.b16 %v455, %v454
  %v527 = vpack.c.b16 %v457, %v456
  %v528 = vpack.c.b16 %v459, %v458
  %v529 = vpack.c.b16 %v461, %v460
  %v530 = vpack.c.b16 %v463, %v462
  %v531 = vpack.c.b16 %v465, %v464
  %v532 = vpack.c.b16 %v467, %v466
  %v533 = vpack.c.b16 %v469, %v468
  %v534 = vpack.c.b16 %v471, %v470
  %v535 = vpack.c.b16 %v473, %v472
  %v536 = vpack.c.b16 %v475, %v474
  %v537 = vpack.c.b16 %v477, %v476
  %v538 = vpack.c.b16 %v479, %v478
  %v539 = vpack.c.b16 %v481, %v480
  %v540 = vpack.c.b16 %v483, %v482
  %v541 = vpack.c.b16 %v485, %v484
  %v542 = vpack.c.b16 %v487, %v486
  %v543 = vpack.c.b16 %v489, %v488
  %v544 = vpack.c.b16 %v491, %v490
  %v545 = vpack.c.b16 %v493, %v492
  %v546 = vpack.c.b16 %v495, %v494
  %v547 = vpack.c.b16 %v497, %v496
  %v548 = vpack.c.b16 %v499, %v498
  %v549 = vpack.c.b16 %v501, %v500
  %v550 = vpack.c.b16 %v503, %v502
  %v551 = vpack.c.b16 %v505, %v504
  %v552 = vpack.c.b16 %v507, %v506
  %v553 = vpack.c.b16 %v509, %v508
  %v554 = vpack.c.b16 %v511, %v510
  %v555 = vpack.c.b16 %v513, %v512
  %v556 = vpack.c.b16 %v515, %v514
  %v557 = vpack.c.b16 %v517, %v516
  %598 = vmatprep.subr.bf16.mxu0 0
  %599 = vmatpush1.bf16.msra.mxu0 %v518
  %600 = vmatprep.subr.bf16.mxu0 0
  %601 = vmatpush1.bf16.msra.mxu0 %v519
  %602 = vmatprep.subr.bf16.mxu0 0
  %603 = vmatpush1.bf16.msra.mxu0 %v520
  %604 = vmatprep.subr.bf16.mxu0 0
  %605 = vmatpush1.bf16.msra.mxu0 %v521
  %606 = vmatprep.subr.bf16.mxu0 0
  %607 = vmatpush1.bf16.msra.mxu0 %v522
  %608 = vmatprep.subr.bf16.mxu0 0
  %609 = vmatpush1.bf16.msra.mxu0 %v523
  %610 = vmatprep.subr.bf16.mxu0 0
  %611 = vmatpush1.bf16.msra.mxu0 %v524
  %612 = vmatprep.subr.bf16.mxu0 0
  %613 = vmatpush1.bf16.msra.mxu0 %v525
  %614 = vmatprep.subr.bf16.mxu0 0
  %615 = vmatpush1.bf16.msra.mxu0 %v526
  %616 = vmatprep.subr.bf16.mxu0 0
  %617 = vmatpush1.bf16.msra.mxu0 %v527
  %618 = vmatprep.subr.bf16.mxu0 0
  %619 = vmatpush1.bf16.msra.mxu0 %v528
  %620 = vmatprep.subr.bf16.mxu0 0
  %621 = vmatpush1.bf16.msra.mxu0 %v529
  %622 = vmatprep.subr.bf16.mxu0 0
  %623 = vmatpush1.bf16.msra.mxu0 %v530
  %624 = vmatprep.subr.bf16.mxu0 0
  %625 = vmatpush1.bf16.msra.mxu0 %v531
  %626 = vmatprep.subr.bf16.mxu0 0
  %627 = vmatpush1.bf16.msra.mxu0 %v532
  %628 = vmatprep.subr.bf16.mxu0 0
  %629 = vmatpush1.bf16.msra.mxu0 %v533
  %630 = vmatprep.mubr.bf16.mxu0 %v279
  %631 = vmatmul.mubr.bf16.gmra.mrb[0].mxu0 %v278
  %v632 = vpop.f32.mrb[0].mxu0
  %v633 = vadd.f32 %v148, %v632
  %v634 = vpop.f32.mrb[0].mxu0
  %v635 = vpop.f32.mrb[0].mxu0
  %v636 = vadd.f32 %v148, %v635
  %v637 = vpop.f32.mrb[0].mxu0
  %638 = vmatprep.mubr.bf16.mxu0 %v284
  %639 = vmatmul.mubr.bf16.gmra.mrb[0].mxu0 %v283
  %v640 = vpop.f32.mrb[0].mxu0
  %v641 = vadd.f32 %v148, %v640
  %v642 = vpop.f32.mrb[0].mxu0
  %v643 = vpop.f32.mrb[0].mxu0
  %v644 = vadd.f32 %v148, %v643
  %v645 = vpop.f32.mrb[0].mxu0
  %646 = vmatprep.mubr.bf16.mxu0 %v289
  %647 = vmatmul.mubr.bf16.gmra.mrb[0].mxu0 %v288
  %v648 = vpop.f32.mrb[0].mxu0
  %v649 = vadd.f32 %v148, %v648
  %v650 = vpop.f32.mrb[0].mxu0
  %v651 = vpop.f32.mrb[0].mxu0
  %v652 = vadd.f32 %v148, %v651
  %v653 = vpop.f32.mrb[0].mxu0
  %654 = vmatprep.mubr.bf16.mxu0 %v294
  %655 = vmatmul.mubr.bf16.gmra.mrb[0].mxu0 %v293
  %v656 = vpop.f32.mrb[0].mxu0
  %v657 = vadd.f32 %v148, %v656
  %v658 = vpop.f32.mrb[0].mxu0
  %v659 = vpop.f32.mrb[0].mxu0
  %v660 = vadd.f32 %v148, %v659
  %v661 = vpop.f32.mrb[0].mxu0
  %662 = vmatprep.mubr.bf16.mxu0 %v299
  %663 = vmatmul.mubr.bf16.gmra.mrb[0].mxu0 %v298
  %v664 = vpop.f32.mrb[0].mxu0
  %v665 = vadd.f32 %v148, %v664
  %v666 = vpop.f32.mrb[0].mxu0
  %v667 = vpop.f32.mrb[0].mxu0
  %v668 = vadd.f32 %v148, %v667
  %v669 = vpop.f32.mrb[0].mxu0
  %670 = vmatprep.mubr.bf16.mxu0 %v304
  %671 = vmatmul.mubr.bf16.gmra.mrb[0].mxu0 %v303
  %v672 = vpop.f32.mrb[0].mxu0
  %v673 = vadd.f32 %v148, %v672
  %v674 = vpop.f32.mrb[0].mxu0
  %v675 = vpop.f32.mrb[0].mxu0
  %v676 = vadd.f32 %v148, %v675
  %v677 = vpop.f32.mrb[0].mxu0
  %678 = vmatprep.mubr.bf16.mxu0 %v309
  %679 = vmatmul.mubr.bf16.gmra.mrb[0].mxu0 %v308
  %v680 = vpop.f32.mrb[0].mxu0
  %v681 = vadd.f32 %v148, %v680
  %v682 = vpop.f32.mrb[0].mxu0
  %v683 = vpop.f32.mrb[0].mxu0
  %v684 = vadd.f32 %v148, %v683
  %v685 = vpop.f32.mrb[0].mxu0
  %686 = vmatprep.mubr.bf16.mxu0 %v314
  %687 = vmatmul.mubr.bf16.gmra.mrb[0].mxu0 %v313
  %v688 = vpop.f32.mrb[0].mxu0
  %v689 = vadd.f32 %v148, %v688
  %v690 = vpop.f32.mrb[0].mxu0
  %v691 = vpop.f32.mrb[0].mxu0
  %v692 = vadd.f32 %v148, %v691
  %v693 = vpop.f32.mrb[0].mxu0
  %694 = vdwg.mxu0
  %695 = vmatprep.subr.bf16.mxu0 0
  %696 = vmatpush1.bf16.msra.mxu0 %v534
  %697 = vmatprep.subr.bf16.mxu0 0
  %698 = vmatpush1.bf16.msra.mxu0 %v535
  %699 = vmatprep.subr.bf16.mxu0 0
  %700 = vmatpush1.bf16.msra.mxu0 %v536
  %701 = vmatprep.subr.bf16.mxu0 0
  %702 = vmatpush1.bf16.msra.mxu0 %v537
  %703 = vmatprep.subr.bf16.mxu0 0
  %704 = vmatpush1.bf16.msra.mxu0 %v538
  %705 = vmatprep.subr.bf16.mxu0 0
  %706 = vmatpush1.bf16.msra.mxu0 %v539
  %707 = vmatprep.subr.bf16.mxu0 0
  %708 = vmatpush1.bf16.msra.mxu0 %v540
  %709 = vmatprep.subr.bf16.mxu0 0
  %710 = vmatpush1.bf16.msra.mxu0 %v541
  %711 = vmatprep.subr.bf16.mxu0 0
  %712 = vmatpush1.bf16.msra.mxu0 %v542
  %713 = vmatprep.subr.bf16.mxu0 0
  %714 = vmatpush1.bf16.msra.mxu0 %v543
  %715 = vmatprep.subr.bf16.mxu0 0
  %716 = vmatpush1.bf16.msra.mxu0 %v544
  %717 = vmatprep.subr.bf16.mxu0 0
  %718 = vmatpush1.bf16.msra.mxu0 %v545
  %719 = vmatprep.subr.bf16.mxu0 0
  %720 = vmatpush1.bf16.msra.mxu0 %v546
  %721 = vmatprep.subr.bf16.mxu0 0
  %722 = vmatpush1.bf16.msra.mxu0 %v547
  %723 = vmatprep.subr.bf16.mxu0 0
  %724 = vmatpush1.bf16.msra.mxu0 %v548
  %725 = vmatprep.subr.bf16.mxu0 0
  %726 = vmatpush1.bf16.msra.mxu0 %v549
  %727 = vmatprep.mubr.bf16.mxu0 %v281
  %728 = vmatmul.mubr.bf16.gmra.mrb[0].mxu0 %v280
  %v729 = vpop.f32.mrb[0].mxu0
  %v730 = vadd.f32 %v633, %v729
  %v731 = vpop.f32.mrb[0].mxu0
  %v732 = vpop.f32.mrb[0].mxu0
  %v733 = vadd.f32 %v636, %v732
  %v734 = vpop.f32.mrb[0].mxu0
  %735 = vmatprep.mubr.bf16.mxu0 %v286
  %736 = vmatmul.mubr.bf16.gmra.mrb[0].mxu0 %v285
  %v737 = vpop.f32.mrb[0].mxu0
  %v738 = vadd.f32 %v641, %v737
  %v739 = vpop.f32.mrb[0].mxu0
  %v740 = vpop.f32.mrb[0].mxu0
  %v741 = vadd.f32 %v644, %v740
  %v742 = vpop.f32.mrb[0].mxu0
  %743 = vmatprep.mubr.bf16.mxu0 %v291
  %744 = vmatmul.mubr.bf16.gmra.mrb[0].mxu0 %v290
  %v745 = vpop.f32.mrb[0].mxu0
  %v746 = vadd.f32 %v649, %v745
  %v747 = vpop.f32.mrb[0].mxu0
  %v748 = vpop.f32.mrb[0].mxu0
  %v749 = vadd.f32 %v652, %v748
  %v750 = vpop.f32.mrb[0].mxu0
  %751 = vmatprep.mubr.bf16.mxu0 %v296
  %752 = vmatmul.mubr.bf16.gmra.mrb[0].mxu0 %v295
  %v753 = vpop.f32.mrb[0].mxu0
  %v754 = vadd.f32 %v657, %v753
  %v755 = vpop.f32.mrb[0].mxu0
  %v756 = vpop.f32.mrb[0].mxu0
  %v757 = vadd.f32 %v660, %v756
  %v758 = vpop.f32.mrb[0].mxu0
  %759 = vmatprep.mubr.bf16.mxu0 %v301
  %760 = vmatmul.mubr.bf16.gmra.mrb[0].mxu0 %v300
  %v761 = vpop.f32.mrb[0].mxu0
  %v762 = vadd.f32 %v665, %v761
  %v763 = vpop.f32.mrb[0].mxu0
  %v764 = vpop.f32.mrb[0].mxu0
  %v765 = vadd.f32 %v668, %v764
  %v766 = vpop.f32.mrb[0].mxu0
  %767 = vmatprep.mubr.bf16.mxu0 %v306
  %768 = vmatmul.mubr.bf16.gmra.mrb[0].mxu0 %v305
  %v769 = vpop.f32.mrb[0].mxu0
  %v770 = vadd.f32 %v673, %v769
  %v771 = vpop.f32.mrb[0].mxu0
  %v772 = vpop.f32.mrb[0].mxu0
  %v773 = vadd.f32 %v676, %v772
  %v774 = vpop.f32.mrb[0].mxu0
  %775 = vmatprep.mubr.bf16.mxu0 %v311
  %776 = vmatmul.mubr.bf16.gmra.mrb[0].mxu0 %v310
  %v777 = vpop.f32.mrb[0].mxu0
  %v778 = vadd.f32 %v681, %v777
  %v779 = vpop.f32.mrb[0].mxu0
  %v780 = vpop.f32.mrb[0].mxu0
  %v781 = vadd.f32 %v684, %v780
  %v782 = vpop.f32.mrb[0].mxu0
  %783 = vmatprep.mubr.bf16.mxu0 %v316
  %784 = vmatmul.mubr.bf16.gmra.mrb[0].mxu0 %v315
  %v785 = vpop.f32.mrb[0].mxu0
  %v786 = vadd.f32 %v689, %v785
  %v787 = vpop.f32.mrb[0].mxu0
  %v788 = vpop.f32.mrb[0].mxu0
  %v789 = vadd.f32 %v692, %v788
  %v790 = vpop.f32.mrb[0].mxu0
  %791 = vdwg.mxu0
  %792 = vmatprep.subr.bf16.mxu0 0
  %793 = vmatpush1.bf16.msra.mxu0 %v550
  %794 = vmatprep.subr.bf16.mxu0 0
  %795 = vmatpush1.bf16.msra.mxu0 %v551
  %796 = vmatprep.subr.bf16.mxu0 0
  %797 = vmatpush1.bf16.msra.mxu0 %v552
  %798 = vmatprep.subr.bf16.mxu0 0
  %799 = vmatpush1.bf16.msra.mxu0 %v553
  %800 = vmatprep.subr.bf16.mxu0 0
  %801 = vmatpush1.bf16.msra.mxu0 %v554
  %802 = vmatprep.subr.bf16.mxu0 0
  %803 = vmatpush1.bf16.msra.mxu0 %v555
  %804 = vmatprep.subr.bf16.mxu0 0
  %805 = vmatpush1.bf16.msra.mxu0 %v556
  %806 = vmatprep.subr.bf16.mxu0 0
  %807 = vmatpush1.bf16.msra.mxu0 %v557
  %808 = vmatprep.subr.bf16.mxu0 0
  %809 = vmatpush1.bf16.msra.mxu0 0
  %810 = vmatprep.subr.bf16.mxu0 0
  %811 = vmatpush1.bf16.msra.mxu0 0
  %812 = vmatprep.subr.bf16.mxu0 0
  %813 = vmatpush1.bf16.msra.mxu0 0
  %814 = vmatprep.subr.bf16.mxu0 0
  %815 = vmatpush1.bf16.msra.mxu0 0
  %816 = vmatprep.subr.bf16.mxu0 0
  %817 = vmatpush1.bf16.msra.mxu0 0
  %818 = vmatprep.subr.bf16.mxu0 0
  %819 = vmatpush1.bf16.msra.mxu0 0
  %820 = vmatprep.subr.bf16.mxu0 0
  %821 = vmatpush1.bf16.msra.mxu0 0
  %822 = vmatprep.subr.bf16.mxu0 0
  %823 = vmatpush1.bf16.msra.mxu0 0
  %824 = vmatprep.mubr.bf16.mxu0 0
  %825 = vmatmul.mubr.bf16.gmra.mrb[0].mxu0 %v282
  %v826 = vpop.f32.mrb[0].mxu0
  %v827 = vadd.f32 %v730, %v826
  %v828 = vpop.f32.mrb[0].mxu0
  %v829 = vpop.f32.mrb[0].mxu0
  %v830 = vadd.f32 %v733, %v829
  %v831 = vpop.f32.mrb[0].mxu0
  %832 = vmatprep.mubr.bf16.mxu0 0
  %833 = vmatmul.mubr.bf16.gmra.mrb[0].mxu0 %v287
  %v834 = vpop.f32.mrb[0].mxu0
  %v835 = vadd.f32 %v738, %v834
  %v836 = vpop.f32.mrb[0].mxu0
  %v837 = vpop.f32.mrb[0].mxu0
  %v838 = vadd.f32 %v741, %v837
  %v839 = vpop.f32.mrb[0].mxu0
  %840 = vmatprep.mubr.bf16.mxu0 0
  %841 = vmatmul.mubr.bf16.gmra.mrb[0].mxu0 %v292
  %v842 = vpop.f32.mrb[0].mxu0
  %v843 = vadd.f32 %v746, %v842
  %v844 = vpop.f32.mrb[0].mxu0
  %v845 = vpop.f32.mrb[0].mxu0
  %v846 = vadd.f32 %v749, %v845
  %v847 = vpop.f32.mrb[0].mxu0
  %848 = vmatprep.mubr.bf16.mxu0 0
  %849 = vmatmul.mubr.bf16.gmra.mrb[0].mxu0 %v297
  %v850 = vpop.f32.mrb[0].mxu0
  %v851 = vadd.f32 %v754, %v850
  %v852 = vpop.f32.mrb[0].mxu0
  %v853 = vpop.f32.mrb[0].mxu0
  %v854 = vadd.f32 %v757, %v853
  %v855 = vpop.f32.mrb[0].mxu0
  %856 = vmatprep.mubr.bf16.mxu0 0
  %857 = vmatmul.mubr.bf16.gmra.mrb[0].mxu0 %v302
  %v858 = vpop.f32.mrb[0].mxu0
  %v859 = vadd.f32 %v762, %v858
  %v860 = vpop.f32.mrb[0].mxu0
  %v861 = vpop.f32.mrb[0].mxu0
  %v862 = vadd.f32 %v765, %v861
  %v863 = vpop.f32.mrb[0].mxu0
  %864 = vmatprep.mubr.bf16.mxu0 0
  %865 = vmatmul.mubr.bf16.gmra.mrb[0].mxu0 %v307
  %v866 = vpop.f32.mrb[0].mxu0
  %v867 = vadd.f32 %v770, %v866
  %v868 = vpop.f32.mrb[0].mxu0
  %v869 = vpop.f32.mrb[0].mxu0
  %v870 = vadd.f32 %v773, %v869
  %v871 = vpop.f32.mrb[0].mxu0
  %872 = vmatprep.mubr.bf16.mxu0 0
  %873 = vmatmul.mubr.bf16.gmra.mrb[0].mxu0 %v312
  %v874 = vpop.f32.mrb[0].mxu0
  %v875 = vadd.f32 %v778, %v874
  %v876 = vpop.f32.mrb[0].mxu0
  %v877 = vpop.f32.mrb[0].mxu0
  %v878 = vadd.f32 %v781, %v877
  %v879 = vpop.f32.mrb[0].mxu0
  %880 = vmatprep.mubr.bf16.mxu0 0
  %881 = vmatmul.mubr.bf16.gmra.mrb[0].mxu0 %v317
  %v882 = vpop.f32.mrb[0].mxu0
  %v883 = vadd.f32 %v786, %v882
  %v884 = vpop.f32.mrb[0].mxu0
  %v885 = vpop.f32.mrb[0].mxu0
  %v886 = vadd.f32 %v789, %v885
  %v887 = vpop.f32.mrb[0].mxu0
  %888 = vdwg.mxu0
  %v889 = vmax.f32 %v827, 0.0
  %v890 = vmax.f32 %v830, 0.0
  %v891 = vmax.f32 %v835, 0.0
  %v892 = vmax.f32 %v838, 0.0
  %v893 = vmax.f32 %v843, 0.0
  %v894 = vmax.f32 %v846, 0.0
  %v895 = vmax.f32 %v851, 0.0
  %v896 = vmax.f32 %v854, 0.0
  %v897 = vmax.f32 %v859, 0.0
  %v898 = vmax.f32 %v862, 0.0
  %v899 = vmax.f32 %v867, 0.0
  %v900 = vmax.f32 %v870, 0.0
  %v901 = vmax.f32 %v875, 0.0
  %v902 = vmax.f32 %v878, 0.0
  %v903 = vmax.f32 %v883, 0.0
  %v904 = vmax.f32 %v886, 0.0
  %v905 = vpack.c.bf16 %v890, %v889
  %v906 = vpack.c.bf16 %v892, %v891
  %v907 = vpack.c.bf16 %v894, %v893
  %v908 = vpack.c.bf16 %v896, %v895
  %v909 = vpack.c.bf16 %v898, %v897
  %v910 = vpack.c.bf16 %v900, %v899
  %v911 = vpack.c.bf16 %v902, %v901
  %v912 = vpack.c.bf16 %v904, %v903
  %v921 = vunpack.c.l.b16 %v905
  %v922 = vunpack.c.h.b16 %v905
  %v923 = vunpack.c.l.b16 %v906
  %v924 = vunpack.c.h.b16 %v906
  %v925 = vunpack.c.l.b16 %v907
  %v926 = vunpack.c.h.b16 %v907
  %v927 = vunpack.c.l.b16 %v908
  %v928 = vunpack.c.h.b16 %v908
  %v929 = vunpack.c.l.b16 %v909
  %v930 = vunpack.c.h.b16 %v909
  %v931 = vunpack.c.l.b16 %v910
  %v932 = vunpack.c.h.b16 %v910
  %v933 = vunpack.c.l.b16 %v911
  %v934 = vunpack.c.h.b16 %v911
  %v935 = vunpack.c.l.b16 %v912
  %v936 = vunpack.c.h.b16 %v912
  %v937 = vpack.c.b16 %v921, %v921
  %v938 = vpack.c.b16 %v922, %v922
  %v939 = vpack.c.b16 %v923, %v923
  %v940 = vpack.c.b16 %v924, %v924
  %v941 = vpack.c.b16 %v925, %v925
  %v942 = vpack.c.b16 %v926, %v926
  %v943 = vpack.c.b16 %v927, %v927
  %v944 = vpack.c.b16 %v928, %v928
  %v945 = vpack.c.b16 %v929, %v929
  %v946 = vpack.c.b16 %v930, %v930
  %v947 = vpack.c.b16 %v931, %v931
  %v948 = vpack.c.b16 %v932, %v932
  %v949 = vpack.c.b16 %v933, %v933
  %v950 = vpack.c.b16 %v934, %v934
  %v951 = vpack.c.b16 %v935, %v935
  %v952 = vpack.c.b16 %v936, %v936
  %vm969 = vcmask 519168
  %970 = vst.msk [vmem:[%s3] sm:$0xf] %vm969, %v937
  %971 = vst.msk [vmem:[%s3 + $0x4] sm:$0xf] %vm969, %v938
  %972 = vst.msk [vmem:[%s3 + $0x8] sm:$0xf] %vm969, %v939
  %973 = vst.msk [vmem:[%s3 + $0xc] sm:$0xf] %vm969, %v940
  %974 = vst.msk [vmem:[%s3 + $0x10] sm:$0xf] %vm969, %v941
  %975 = vst.msk [vmem:[%s3 + $0x14] sm:$0xf] %vm969, %v942
  %976 = vst.msk [vmem:[%s3 + $0x18] sm:$0xf] %vm969, %v943
  %977 = vst.msk [vmem:[%s3 + $0x1c] sm:$0xf] %vm969, %v944
  %978 = vst.msk [vmem:[%s3 + $0x20] sm:$0xf] %vm969, %v945
  %979 = vst.msk [vmem:[%s3 + $0x24] sm:$0xf] %vm969, %v946
  %980 = vst.msk [vmem:[%s3 + $0x28] sm:$0xf] %vm969, %v947
  %981 = vst.msk [vmem:[%s3 + $0x2c] sm:$0xf] %vm969, %v948
  %982 = vst.msk [vmem:[%s3 + $0x30] sm:$0xf] %vm969, %v949
  %983 = vst.msk [vmem:[%s3 + $0x34] sm:$0xf] %vm969, %v950
  %984 = vst.msk [vmem:[%s3 + $0x38] sm:$0xf] %vm969, %v951
  %985 = vst.msk [vmem:[%s3 + $0x3c] sm:$0xf] %vm969, %v952
  // Predicated region
  $region14: #{_lambda_.18} parent=0 // pred_check
    _
  $region15: #{_lambda_.18} parent=0 // pred_check_branch
    %987 = sbr.rel (0) target = $region17
  $region16: #{_lambda_.18} parent=0 // pred_region
    _
  $region17: #{_lambda_.18} parent=0 // pred_fallthru
    _
  // Predicated region
  $region18: #{_lambda_.18} parent=0 // pred_check
    _
  $region19: #{_lambda_.18} parent=0 // pred_check_branch
    %989 = sbr.rel (0) target = $region21
  $region20: #{_lambda_.18} parent=0 // pred_region
    _
  $region21: #{_lambda_.18} parent=0 // pred_fallthru
    _

// kernel: _lambda_.19
$region0: #{_lambda_.19}
  #allocation0 [shape = 'u32[]', space=smem, size = 0x4, offset = 0x4, fixed_abs, tag = 'smem constant byte address 0x4 - core index']
  #allocation1 [shape = 'u32[144,128]{1,0:T(1,128)}', space=vmem, size = 0x12000, scoped, tag = 'internal scratch']
  %s0 = inlined_call_operand.vmem [shape: bf16[128,128], index: 0, kind: input, shape index: {}]
  %s1 = inlined_call_operand.vmem [shape: bf16[128,256], index: 1, kind: input, shape index: {}]
  %s2 = inlined_call_operand.vmem [shape: f32[1,256], index: 2, kind: input, shape index: {}]
  %s3 = inlined_call_operand.vmem [shape: bf16[128,256], index: 3, kind: input, shape index: {}]
  %s4 = inlined_call_operand.vmem [shape: bf16[128,256], index: 4, kind: output, shape index: {}]
  %s5 = sld [smem:[#allocation0]]
  $region26: #{_lambda_.19} parent=0
    _
  %s7 = ssub.s32 1, %s5
  %s8 = scalar_select 0, %s7, %s5
  // Predicated region
  $region2: #{_lambda_.19} parent=0 // pred_check
    _
  $region3: #{_lambda_.19} parent=0 // pred_check_branch
    %10 = sbr.rel (0) target = $region5
  $region4: #{_lambda_.19} parent=0 // pred_region
    _
  $region5: #{_lambda_.19} parent=0 // pred_fallthru
    _
  // Predicated region
  $region6: #{_lambda_.19} parent=0 // pred_check
    _
  $region7: #{_lambda_.19} parent=0 // pred_check_branch
    %12 = sbr.rel (0) target = $region9
  $region8: #{_lambda_.19} parent=0 // pred_region
    _
  $region9: #{_lambda_.19} parent=0 // pred_fallthru
    _
  // Predicated region
  $region10: #{_lambda_.19} parent=0 // pred_check
    _
  $region11: #{_lambda_.19} parent=0 // pred_check_branch
    %14 = sbr.rel (0) target = $region13
  $region12: #{_lambda_.19} parent=0 // pred_region
    _
  $region13: #{_lambda_.19} parent=0 // pred_fallthru
    _
  // Predicated region
  $region14: #{_lambda_.19} parent=0 // pred_check
    _
  $region15: #{_lambda_.19} parent=0 // pred_check_branch
    %16 = sbr.rel (0) target = $region17
  $region16: #{_lambda_.19} parent=0 // pred_region
    _
  $region17: #{_lambda_.19} parent=0 // pred_fallthru
    _
  %v18 = vld [vmem:[%s0] sm:$0xf]
  %v19 = vld [vmem:[%s0 + $0x4] sm:$0xf]
  %v20 = vld [vmem:[%s0 + $0x8] sm:$0xf]
  %v21 = vld [vmem:[%s0 + $0xc] sm:$0xf]
  %v22 = vld [vmem:[%s0 + $0x10] sm:$0xf]
  %v23 = vld [vmem:[%s0 + $0x14] sm:$0xf]
  %v24 = vld [vmem:[%s0 + $0x18] sm:$0xf]
  %v25 = vld [vmem:[%s0 + $0x1c] sm:$0xf]
  %v26 = vld [vmem:[%s0 + $0x20] sm:$0xf]
  %v27 = vld [vmem:[%s0 + $0x24] sm:$0xf]
  %v28 = vld [vmem:[%s0 + $0x28] sm:$0xf]
  %v29 = vld [vmem:[%s0 + $0x2c] sm:$0xf]
  %v30 = vld [vmem:[%s0 + $0x30] sm:$0xf]
  %v31 = vld [vmem:[%s0 + $0x34] sm:$0xf]
  %v32 = vld [vmem:[%s0 + $0x38] sm:$0xf]
  %v33 = vld [vmem:[%s0 + $0x3c] sm:$0xf]
  %v34 = vld [vmem:[%s1] sm:$0xff]
  %v35 = vld [vmem:[%s1 + $0x8] sm:$0xff]
  %v36 = vld [vmem:[%s1 + $0x10] sm:$0xff]
  %v37 = vld [vmem:[%s1 + $0x18] sm:$0xff]
  %v38 = vld [vmem:[%s1 + $0x20] sm:$0xff]
  %v39 = vld [vmem:[%s1 + $0x28] sm:$0xff]
  %v40 = vld [vmem:[%s1 + $0x30] sm:$0xff]
  %v41 = vld [vmem:[%s1 + $0x38] sm:$0xff]
  %v42 = vld [vmem:[%s1 + $0x40] sm:$0xff]
  %v43 = vld [vmem:[%s1 + $0x48] sm:$0xff]
  %v44 = vld [vmem:[%s1 + $0x50] sm:$0xff]
  %v45 = vld [vmem:[%s1 + $0x58] sm:$0xff]
  %v46 = vld [vmem:[%s1 + $0x60] sm:$0xff]
  %v47 = vld [vmem:[%s1 + $0x68] sm:$0xff]
  %v48 = vld [vmem:[%s1 + $0x70] sm:$0xff]
  %v49 = vld [vmem:[%s1 + $0x78] sm:$0xff]
  %v50 = vld [vmem:[%s2] sm:$0x3]
  %v52 = vlaneseq
  %v53 = vshrl.u32 %v52, 7
  %v54 = vsub.s32 0, %v53
  %v55 = vrot.slane %v50, %v54
  %v56 = vlaneseq
  %v57 = vshrl.u32 %v56, 7
  %v58 = vsub.s32 1, %v57
  %v59 = vrot.slane %v50, %v58
  %v78 = vunpack.c.l.b16 %v18
  %v79 = vunpack.c.l.b16 %v19
  %v80 = vunpack.c.l.b16 %v20
  %v81 = vunpack.c.l.b16 %v21
  %v82 = vunpack.c.l.b16 %v22
  %v83 = vunpack.c.l.b16 %v23
  %v84 = vunpack.c.l.b16 %v24
  %v85 = vunpack.c.l.b16 %v25
  %v86 = vunpack.c.l.b16 %v26
  %v87 = vunpack.c.l.b16 %v27
  %v88 = vunpack.c.l.b16 %v28
  %v89 = vunpack.c.l.b16 %v29
  %v90 = vunpack.c.l.b16 %v30
  %v91 = vunpack.c.l.b16 %v31
  %v92 = vunpack.c.l.b16 %v32
  %v93 = vunpack.c.l.b16 %v33
  %v94 = vpack.c.b16 %v79, %v78
  %v95 = vpack.c.b16 %v81, %v80
  %v96 = vpack.c.b16 %v83, %v82
  %v97 = vpack.c.b16 %v85, %v84
  %v98 = vpack.c.b16 %v87, %v86
  %v99 = vpack.c.b16 %v89, %v88
  %v100 = vpack.c.b16 %v91, %v90
  %v101 = vpack.c.b16 %v93, %v92
  %v126 = vunpack.c.l.b16 %v34
  %v127 = vunpack.c.h.b16 %v34
  %v128 = vunpack.c.l.b16 %v35
  %v129 = vunpack.c.h.b16 %v35
  %v130 = vunpack.c.l.b16 %v36
  %v131 = vunpack.c.h.b16 %v36
  %v132 = vunpack.c.l.b16 %v37
  %v133 = vunpack.c.h.b16 %v37
  %v134 = vunpack.c.l.b16 %v38
  %v135 = vunpack.c.h.b16 %v38
  %v136 = vunpack.c.l.b16 %v39
  %v137 = vunpack.c.h.b16 %v39
  %v138 = vunpack.c.l.b16 %v40
  %v139 = vunpack.c.h.b16 %v40
  %v140 = vunpack.c.l.b16 %v41
  %v141 = vunpack.c.h.b16 %v41
  %v142 = vunpack.c.l.b16 %v42
  %v143 = vunpack.c.h.b16 %v42
  %v144 = vunpack.c.l.b16 %v43
  %v145 = vunpack.c.h.b16 %v43
  %v146 = vunpack.c.l.b16 %v44
  %v147 = vunpack.c.h.b16 %v44
  %v148 = vunpack.c.l.b16 %v45
  %v149 = vunpack.c.h.b16 %v45
  %v150 = vunpack.c.l.b16 %v46
  %v151 = vunpack.c.h.b16 %v46
  %v152 = vunpack.c.l.b16 %v47
  %v153 = vunpack.c.h.b16 %v47
  %v154 = vunpack.c.l.b16 %v48
  %v155 = vunpack.c.h.b16 %v48
  %v156 = vunpack.c.l.b16 %v49
  %v157 = vunpack.c.h.b16 %v49
  %v158 = vpack.c.b16 %v128, %v126
  %v159 = vpack.c.b16 %v129, %v127
  %v160 = vpack.c.b16 %v132, %v130
  %v161 = vpack.c.b16 %v133, %v131
  %v162 = vpack.c.b16 %v136, %v134
  %v163 = vpack.c.b16 %v137, %v135
  %v164 = vpack.c.b16 %v140, %v138
  %v165 = vpack.c.b16 %v141, %v139
  %v166 = vpack.c.b16 %v144, %v142
  %v167 = vpack.c.b16 %v145, %v143
  %v168 = vpack.c.b16 %v148, %v146
  %v169 = vpack.c.b16 %v149, %v147
  %v170 = vpack.c.b16 %v152, %v150
  %v171 = vpack.c.b16 %v153, %v151
  %v172 = vpack.c.b16 %v156, %v154
  %v173 = vpack.c.b16 %v157, %v155
  %190 = vmatprep.subr.bf16.mxu0 %v159
  %191 = vmatpush1.bf16.msra.mxu0 %v158
  %192 = vmatprep.subr.bf16.mxu0 %v161
  %193 = vmatpush1.bf16.msra.mxu0 %v160
  %194 = vmatprep.subr.bf16.mxu0 %v163
  %195 = vmatpush1.bf16.msra.mxu0 %v162
  %196 = vmatprep.subr.bf16.mxu0 %v165
  %197 = vmatpush1.bf16.msra.mxu0 %v164
  %198 = vmatprep.subr.bf16.mxu0 %v167
  %199 = vmatpush1.bf16.msra.mxu0 %v166
  %200 = vmatprep.subr.bf16.mxu0 %v169
  %201 = vmatpush1.bf16.msra.mxu0 %v168
  %202 = vmatprep.subr.bf16.mxu0 %v171
  %203 = vmatpush1.bf16.msra.mxu0 %v170
  %204 = vmatprep.subr.bf16.mxu0 %v173
  %205 = vmatpush1.bf16.msra.mxu0 %v172
  %206 = vmatprep.subr.bf16.mxu0 0
  %207 = vmatpush1.bf16.msra.mxu0 0
  %208 = vmatprep.subr.bf16.mxu0 0
  %209 = vmatpush1.bf16.msra.mxu0 0
  %210 = vmatprep.subr.bf16.mxu0 0
  %211 = vmatpush1.bf16.msra.mxu0 0
  %212 = vmatprep.subr.bf16.mxu0 0
  %213 = vmatpush1.bf16.msra.mxu0 0
  %214 = vmatprep.subr.bf16.mxu0 0
  %215 = vmatpush1.bf16.msra.mxu0 0
  %216 = vmatprep.subr.bf16.mxu0 0
  %217 = vmatpush1.bf16.msra.mxu0 0
  %218 = vmatprep.subr.bf16.mxu0 0
  %219 = vmatpush1.bf16.msra.mxu0 0
  %220 = vmatprep.subr.bf16.mxu0 0
  %221 = vmatpush1.bf16.msra.mxu0 0
  %222 = vmatprep.mubr.bf16.mxu0 0
  %223 = vmatmul.mubr.bf16.gmra.mrb[0].mxu0 %v94
  %v224 = vpop.f32.mrb[0].mxu0
  %v225 = vadd.f32 %v55, %v224
  %v226 = vpop.f32.mrb[0].mxu0
  %v227 = vadd.f32 %v59, %v226
  %v228 = vpop.f32.mrb[0].mxu0
  %v229 = vadd.f32 %v55, %v228
  %v230 = vpop.f32.mrb[0].mxu0
  %v231 = vadd.f32 %v59, %v230
  %232 = vmatprep.mubr.bf16.mxu0 0
  %233 = vmatmul.mubr.bf16.gmra.mrb[0].mxu0 %v95
  %v234 = vpop.f32.mrb[0].mxu0
  %v235 = vadd.f32 %v55, %v234
  %v236 = vpop.f32.mrb[0].mxu0
  %v237 = vadd.f32 %v59, %v236
  %v238 = vpop.f32.mrb[0].mxu0
  %v239 = vadd.f32 %v55, %v238
  %v240 = vpop.f32.mrb[0].mxu0
  %v241 = vadd.f32 %v59, %v240
  %242 = vmatprep.mubr.bf16.mxu0 0
  %243 = vmatmul.mubr.bf16.gmra.mrb[0].mxu0 %v96
  %v244 = vpop.f32.mrb[0].mxu0
  %v245 = vadd.f32 %v55, %v244
  %v246 = vpop.f32.mrb[0].mxu0
  %v247 = vadd.f32 %v59, %v246
  %v248 = vpop.f32.mrb[0].mxu0
  %v249 = vadd.f32 %v55, %v248
  %v250 = vpop.f32.mrb[0].mxu0
  %v251 = vadd.f32 %v59, %v250
  %252 = vmatprep.mubr.bf16.mxu0 0
  %253 = vmatmul.mubr.bf16.gmra.mrb[0].mxu0 %v97
  %v254 = vpop.f32.mrb[0].mxu0
  %v255 = vadd.f32 %v55, %v254
  %v256 = vpop.f32.mrb[0].mxu0
  %v257 = vadd.f32 %v59, %v256
  %v258 = vpop.f32.mrb[0].mxu0
  %v259 = vadd.f32 %v55, %v258
  %v260 = vpop.f32.mrb[0].mxu0
  %v261 = vadd.f32 %v59, %v260
  %262 = vmatprep.mubr.bf16.mxu0 0
  %263 = vmatmul.mubr.bf16.gmra.mrb[0].mxu0 %v98
  %v264 = vpop.f32.mrb[0].mxu0
  %v265 = vadd.f32 %v55, %v264
  %v266 = vpop.f32.mrb[0].mxu0
  %v267 = vadd.f32 %v59, %v266
  %v268 = vpop.f32.mrb[0].mxu0
  %v269 = vadd.f32 %v55, %v268
  %v270 = vpop.f32.mrb[0].mxu0
  %v271 = vadd.f32 %v59, %v270
  %272 = vmatprep.mubr.bf16.mxu0 0
  %273 = vmatmul.mubr.bf16.gmra.mrb[0].mxu0 %v99
  %v274 = vpop.f32.mrb[0].mxu0
  %v275 = vadd.f32 %v55, %v274
  %v276 = vpop.f32.mrb[0].mxu0
  %v277 = vadd.f32 %v59, %v276
  %v278 = vpop.f32.mrb[0].mxu0
  %v279 = vadd.f32 %v55, %v278
  %v280 = vpop.f32.mrb[0].mxu0
  %v281 = vadd.f32 %v59, %v280
  %282 = vmatprep.mubr.bf16.mxu0 0
  %283 = vmatmul.mubr.bf16.gmra.mrb[0].mxu0 %v100
  %v284 = vpop.f32.mrb[0].mxu0
  %v285 = vadd.f32 %v55, %v284
  %v286 = vpop.f32.mrb[0].mxu0
  %v287 = vadd.f32 %v59, %v286
  %v288 = vpop.f32.mrb[0].mxu0
  %v289 = vadd.f32 %v55, %v288
  %v290 = vpop.f32.mrb[0].mxu0
  %v291 = vadd.f32 %v59, %v290
  %292 = vmatprep.mubr.bf16.mxu0 0
  %293 = vmatmul.mubr.bf16.gmra.mrb[0].mxu0 %v101
  %v294 = vpop.f32.mrb[0].mxu0
  %v295 = vadd.f32 %v55, %v294
  %v296 = vpop.f32.mrb[0].mxu0
  %v297 = vadd.f32 %v59, %v296
  %v298 = vpop.f32.mrb[0].mxu0
  %v299 = vadd.f32 %v55, %v298
  %v300 = vpop.f32.mrb[0].mxu0
  %v301 = vadd.f32 %v59, %v300
  %302 = vdwg.mxu0
  %v303 = vld [vmem:[%s3] sm:$0xff]
  %v304 = vld [vmem:[%s3 + $0x8] sm:$0xff]
  %v305 = vld [vmem:[%s3 + $0x10] sm:$0xff]
  %v306 = vld [vmem:[%s3 + $0x18] sm:$0xff]
  %v307 = vld [vmem:[%s3 + $0x20] sm:$0xff]
  %v308 = vld [vmem:[%s3 + $0x28] sm:$0xff]
  %v309 = vld [vmem:[%s3 + $0x30] sm:$0xff]
  %v310 = vld [vmem:[%s3 + $0x38] sm:$0xff]
  %v311 = vld [vmem:[%s3 + $0x40] sm:$0xff]
  %v312 = vld [vmem:[%s3 + $0x48] sm:$0xff]
  %v313 = vld [vmem:[%s3 + $0x50] sm:$0xff]
  %v314 = vld [vmem:[%s3 + $0x58] sm:$0xff]
  %v315 = vld [vmem:[%s3 + $0x60] sm:$0xff]
  %v316 = vld [vmem:[%s3 + $0x68] sm:$0xff]
  %v317 = vld [vmem:[%s3 + $0x70] sm:$0xff]
  %v318 = vld [vmem:[%s3 + $0x78] sm:$0xff]
  %v319 = vunpack.c.l.bf16 %v303
  %v320 = vunpack.c.h.bf16 %v303
  %v321 = vunpack.c.l.bf16 %v304
  %v322 = vunpack.c.h.bf16 %v304
  %v323 = vunpack.c.l.bf16 %v305
  %v324 = vunpack.c.h.bf16 %v305
  %v325 = vunpack.c.l.bf16 %v306
  %v326 = vunpack.c.h.bf16 %v306
  %v327 = vunpack.c.l.bf16 %v307
  %v328 = vunpack.c.h.bf16 %v307
  %v329 = vunpack.c.l.bf16 %v308
  %v330 = vunpack.c.h.bf16 %v308
  %v331 = vunpack.c.l.bf16 %v309
  %v332 = vunpack.c.h.bf16 %v309
  %v333 = vunpack.c.l.bf16 %v310
  %v334 = vunpack.c.h.bf16 %v310
  %v335 = vunpack.c.l.bf16 %v311
  %v336 = vunpack.c.h.bf16 %v311
  %v337 = vunpack.c.l.bf16 %v312
  %v338 = vunpack.c.h.bf16 %v312
  %v339 = vunpack.c.l.bf16 %v313
  %v340 = vunpack.c.h.bf16 %v313
  %v341 = vunpack.c.l.bf16 %v314
  %v342 = vunpack.c.h.bf16 %v314
  %v343 = vunpack.c.l.bf16 %v315
  %v344 = vunpack.c.h.bf16 %v315
  %v345 = vunpack.c.l.bf16 %v316
  %v346 = vunpack.c.h.bf16 %v316
  %v347 = vunpack.c.l.bf16 %v317
  %v348 = vunpack.c.h.bf16 %v317
  %v349 = vunpack.c.l.bf16 %v318
  %v350 = vunpack.c.h.bf16 %v318
  %v351 = vadd.f32 %v225, %v319
  %v352 = vadd.f32 %v227, %v320
  %v353 = vadd.f32 %v229, %v321
  %v354 = vadd.f32 %v231, %v322
  %v355 = vadd.f32 %v235, %v323
  %v356 = vadd.f32 %v237, %v324
  %v357 = vadd.f32 %v239, %v325
  %v358 = vadd.f32 %v241, %v326
  %v359 = vadd.f32 %v245, %v327
  %v360 = vadd.f32 %v247, %v328
  %v361 = vadd.f32 %v249, %v329
  %v362 = vadd.f32 %v251, %v330
  %v363 = vadd.f32 %v255, %v331
  %v364 = vadd.f32 %v257, %v332
  %v365 = vadd.f32 %v259, %v333
  %v366 = vadd.f32 %v261, %v334
  %v367 = vadd.f32 %v265, %v335
  %v368 = vadd.f32 %v267, %v336
  %v369 = vadd.f32 %v269, %v337
  %v370 = vadd.f32 %v271, %v338
  %v371 = vadd.f32 %v275, %v339
  %v372 = vadd.f32 %v277, %v340
  %v373 = vadd.f32 %v279, %v341
  %v374 = vadd.f32 %v281, %v342
  %v375 = vadd.f32 %v285, %v343
  %v376 = vadd.f32 %v287, %v344
  %v377 = vadd.f32 %v289, %v345
  %v378 = vadd.f32 %v291, %v346
  %v379 = vadd.f32 %v295, %v347
  %v380 = vadd.f32 %v297, %v348
  %v381 = vadd.f32 %v299, %v349
  %v382 = vadd.f32 %v301, %v350
  %v383 = vmax.f32 %v351, 0.0
  %v384 = vmax.f32 %v352, 0.0
  %v385 = vmax.f32 %v353, 0.0
  %v386 = vmax.f32 %v354, 0.0
  %v387 = vmax.f32 %v355, 0.0
  %v388 = vmax.f32 %v356, 0.0
  %v389 = vmax.f32 %v357, 0.0
  %v390 = vmax.f32 %v358, 0.0
  %v391 = vmax.f32 %v359, 0.0
  %v392 = vmax.f32 %v360, 0.0
  %v393 = vmax.f32 %v361, 0.0
  %v394 = vmax.f32 %v362, 0.0
  %v395 = vmax.f32 %v363, 0.0
  %v396 = vmax.f32 %v364, 0.0
  %v397 = vmax.f32 %v365, 0.0
  %v398 = vmax.f32 %v366, 0.0
  %v399 = vmax.f32 %v367, 0.0
  %v400 = vmax.f32 %v368, 0.0
  %v401 = vmax.f32 %v369, 0.0
  %v402 = vmax.f32 %v370, 0.0
  %v403 = vmax.f32 %v371, 0.0
  %v404 = vmax.f32 %v372, 0.0
  %v405 = vmax.f32 %v373, 0.0
  %v406 = vmax.f32 %v374, 0.0
  %v407 = vmax.f32 %v375, 0.0
  %v408 = vmax.f32 %v376, 0.0
  %v409 = vmax.f32 %v377, 0.0
  %v410 = vmax.f32 %v378, 0.0
  %v411 = vmax.f32 %v379, 0.0
  %v412 = vmax.f32 %v380, 0.0
  %v413 = vmax.f32 %v381, 0.0
  %v414 = vmax.f32 %v382, 0.0
  %v415 = vpack.c.bf16 %v385, %v383
  %v416 = vpack.c.bf16 %v386, %v384
  %v417 = vpack.c.bf16 %v389, %v387
  %v418 = vpack.c.bf16 %v390, %v388
  %v419 = vpack.c.bf16 %v393, %v391
  %v420 = vpack.c.bf16 %v394, %v392
  %v421 = vpack.c.bf16 %v397, %v395
  %v422 = vpack.c.bf16 %v398, %v396
  %v423 = vpack.c.bf16 %v401, %v399
  %v424 = vpack.c.bf16 %v402, %v400
  %v425 = vpack.c.bf16 %v405, %v403
  %v426 = vpack.c.bf16 %v406, %v404
  %v427 = vpack.c.bf16 %v409, %v407
  %v428 = vpack.c.bf16 %v410, %v408
  %v429 = vpack.c.bf16 %v413, %v411
  %v430 = vpack.c.bf16 %v414, %v412
  %v447 = vunpack.c.l.b16 %v415
  %v448 = vunpack.c.l.b16 %v416
  %v449 = vunpack.c.h.b16 %v415
  %v450 = vunpack.c.h.b16 %v416
  %v451 = vunpack.c.l.b16 %v417
  %v452 = vunpack.c.l.b16 %v418
  %v453 = vunpack.c.h.b16 %v417
  %v454 = vunpack.c.h.b16 %v418
  %v455 = vunpack.c.l.b16 %v419
  %v456 = vunpack.c.l.b16 %v420
  %v457 = vunpack.c.h.b16 %v419
  %v458 = vunpack.c.h.b16 %v420
  %v459 = vunpack.c.l.b16 %v421
  %v460 = vunpack.c.l.b16 %v422
  %v461 = vunpack.c.h.b16 %v421
  %v462 = vunpack.c.h.b16 %v422
  %v463 = vunpack.c.l.b16 %v423
  %v464 = vunpack.c.l.b16 %v424
  %v465 = vunpack.c.h.b16 %v423
  %v466 = vunpack.c.h.b16 %v424
  %v467 = vunpack.c.l.b16 %v425
  %v468 = vunpack.c.l.b16 %v426
  %v469 = vunpack.c.h.b16 %v425
  %v470 = vunpack.c.h.b16 %v426
  %v471 = vunpack.c.l.b16 %v427
  %v472 = vunpack.c.l.b16 %v428
  %v473 = vunpack.c.h.b16 %v427
  %v474 = vunpack.c.h.b16 %v428
  %v475 = vunpack.c.l.b16 %v429
  %v476 = vunpack.c.l.b16 %v430
  %v477 = vunpack.c.h.b16 %v429
  %v478 = vunpack.c.h.b16 %v430
  %v479 = vpack.c.b16 %v448, %v447
  %v480 = vpack.c.b16 %v450, %v449
  %v481 = vpack.c.b16 %v452, %v451
  %v482 = vpack.c.b16 %v454, %v453
  %v483 = vpack.c.b16 %v456, %v455
  %v484 = vpack.c.b16 %v458, %v457
  %v485 = vpack.c.b16 %v460, %v459
  %v486 = vpack.c.b16 %v462, %v461
  %v487 = vpack.c.b16 %v464, %v463
  %v488 = vpack.c.b16 %v466, %v465
  %v489 = vpack.c.b16 %v468, %v467
  %v490 = vpack.c.b16 %v470, %v469
  %v491 = vpack.c.b16 %v472, %v471
  %v492 = vpack.c.b16 %v474, %v473
  %v493 = vpack.c.b16 %v476, %v475
  %v494 = vpack.c.b16 %v478, %v477
  %511 = vst [vmem:[%s4] sm:$0xff] %v479
  %512 = vst [vmem:[%s4 + $0x8] sm:$0xff] %v480
  %513 = vst [vmem:[%s4 + $0x10] sm:$0xff] %v481
  %514 = vst [vmem:[%s4 + $0x18] sm:$0xff] %v482
  %515 = vst [vmem:[%s4 + $0x20] sm:$0xff] %v483
  %516 = vst [vmem:[%s4 + $0x28] sm:$0xff] %v484
  %517 = vst [vmem:[%s4 + $0x30] sm:$0xff] %v485
  %518 = vst [vmem:[%s4 + $0x38] sm:$0xff] %v486
  %519 = vst [vmem:[%s4 + $0x40] sm:$0xff] %v487
  %520 = vst [vmem:[%s4 + $0x48] sm:$0xff] %v488
  %521 = vst [vmem:[%s4 + $0x50] sm:$0xff] %v489
  %522 = vst [vmem:[%s4 + $0x58] sm:$0xff] %v490
  %523 = vst [vmem:[%s4 + $0x60] sm:$0xff] %v491
  %524 = vst [vmem:[%s4 + $0x68] sm:$0xff] %v492
  %525 = vst [vmem:[%s4 + $0x70] sm:$0xff] %v493
  %526 = vst [vmem:[%s4 + $0x78] sm:$0xff] %v494
  // Predicated region
  $region18: #{_lambda_.19} parent=0 // pred_check
    _
  $region19: #{_lambda_.19} parent=0 // pred_check_branch
    %528 = sbr.rel (0) target = $region21
  $region20: #{_lambda_.19} parent=0 // pred_region
    _
  $region21: #{_lambda_.19} parent=0 // pred_fallthru
    _
  // Predicated region
  $region22: #{_lambda_.19} parent=0 // pred_check
    _
  $region23: #{_lambda_.19} parent=0 // pred_check_branch
    %530 = sbr.rel (0) target = $region25
  $region24: #{_lambda_.19} parent=0 // pred_region
    _
  $region25: #{_lambda_.19} parent=0 // pred_fallthru
    _

// kernel: _lambda_.20
$region0: #{_lambda_.20}
  #allocation0 [shape = 'u32[]', space=smem, size = 0x4, offset = 0x4, fixed_abs, tag = 'smem constant byte address 0x4 - core index']
  #allocation1 [shape = 'u32[144,128]{1,0:T(1,128)}', space=vmem, size = 0x12000, scoped, tag = 'internal scratch']
  %s0 = inlined_call_operand.vmem [shape: bf16[128,256], index: 0, kind: input, shape index: {}]
  %s1 = inlined_call_operand.vmem [shape: bf16[256,64], index: 1, kind: input, shape index: {}]
  %s2 = inlined_call_operand.vmem [shape: f32[1,64], index: 2, kind: input, shape index: {}]
  %s3 = inlined_call_operand.vmem [shape: bf16[128,64], index: 3, kind: output, shape index: {}]
  %s4 = sld [smem:[#allocation0]]
  $region22: #{_lambda_.20} parent=0
    _
  %s6 = ssub.s32 1, %s4
  %s7 = scalar_select 0, %s6, %s4
  // Predicated region
  $region2: #{_lambda_.20} parent=0 // pred_check
    _
  $region3: #{_lambda_.20} parent=0 // pred_check_branch
    %9 = sbr.rel (0) target = $region5
  $region4: #{_lambda_.20} parent=0 // pred_region
    _
  $region5: #{_lambda_.20} parent=0 // pred_fallthru
    _
  // Predicated region
  $region6: #{_lambda_.20} parent=0 // pred_check
    _
  $region7: #{_lambda_.20} parent=0 // pred_check_branch
    %11 = sbr.rel (0) target = $region9
  $region8: #{_lambda_.20} parent=0 // pred_region
    _
  $region9: #{_lambda_.20} parent=0 // pred_fallthru
    _
  // Predicated region
  $region10: #{_lambda_.20} parent=0 // pred_check
    _
  $region11: #{_lambda_.20} parent=0 // pred_check_branch
    %13 = sbr.rel (0) target = $region13
  $region12: #{_lambda_.20} parent=0 // pred_region
    _
  $region13: #{_lambda_.20} parent=0 // pred_fallthru
    _
  %v15 = vld [vmem:[%s0] sm:$0xff]
  %v16 = vld [vmem:[%s0 + $0x8] sm:$0xff]
  %v17 = vld [vmem:[%s0 + $0x10] sm:$0xff]
  %v18 = vld [vmem:[%s0 + $0x18] sm:$0xff]
  %v19 = vld [vmem:[%s0 + $0x20] sm:$0xff]
  %v20 = vld [vmem:[%s0 + $0x28] sm:$0xff]
  %v21 = vld [vmem:[%s0 + $0x30] sm:$0xff]
  %v22 = vld [vmem:[%s0 + $0x38] sm:$0xff]
  %v23 = vld [vmem:[%s0 + $0x40] sm:$0xff]
  %v24 = vld [vmem:[%s0 + $0x48] sm:$0xff]
  %v25 = vld [vmem:[%s0 + $0x50] sm:$0xff]
  %v26 = vld [vmem:[%s0 + $0x58] sm:$0xff]
  %v27 = vld [vmem:[%s0 + $0x60] sm:$0xff]
  %v28 = vld [vmem:[%s0 + $0x68] sm:$0xff]
  %v29 = vld [vmem:[%s0 + $0x70] sm:$0xff]
  %v30 = vld [vmem:[%s0 + $0x78] sm:$0xff]
  %v31 = vld [vmem:[%s1] sm:$0xf]
  %v32 = vld [vmem:[%s1 + $0x4] sm:$0xf]
  %v33 = vld [vmem:[%s1 + $0x8] sm:$0xf]
  %v34 = vld [vmem:[%s1 + $0xc] sm:$0xf]
  %v35 = vld [vmem:[%s1 + $0x10] sm:$0xf]
  %v36 = vld [vmem:[%s1 + $0x14] sm:$0xf]
  %v37 = vld [vmem:[%s1 + $0x18] sm:$0xf]
  %v38 = vld [vmem:[%s1 + $0x1c] sm:$0xf]
  %v39 = vld [vmem:[%s1 + $0x20] sm:$0xf]
  %v40 = vld [vmem:[%s1 + $0x24] sm:$0xf]
  %v41 = vld [vmem:[%s1 + $0x28] sm:$0xf]
  %v42 = vld [vmem:[%s1 + $0x2c] sm:$0xf]
  %v43 = vld [vmem:[%s1 + $0x30] sm:$0xf]
  %v44 = vld [vmem:[%s1 + $0x34] sm:$0xf]
  %v45 = vld [vmem:[%s1 + $0x38] sm:$0xf]
  %v46 = vld [vmem:[%s1 + $0x3c] sm:$0xf]
  %v47 = vld [vmem:[%s1 + $0x40] sm:$0xf]
  %v48 = vld [vmem:[%s1 + $0x44] sm:$0xf]
  %v49 = vld [vmem:[%s1 + $0x48] sm:$0xf]
  %v50 = vld [vmem:[%s1 + $0x4c] sm:$0xf]
  %v51 = vld [vmem:[%s1 + $0x50] sm:$0xf]
  %v52 = vld [vmem:[%s1 + $0x54] sm:$0xf]
  %v53 = vld [vmem:[%s1 + $0x58] sm:$0xf]
  %v54 = vld [vmem:[%s1 + $0x5c] sm:$0xf]
  %v55 = vld [vmem:[%s1 + $0x60] sm:$0xf]
  %v56 = vld [vmem:[%s1 + $0x64] sm:$0xf]
  %v57 = vld [vmem:[%s1 + $0x68] sm:$0xf]
  %v58 = vld [vmem:[%s1 + $0x6c] sm:$0xf]
  %v59 = vld [vmem:[%s1 + $0x70] sm:$0xf]
  %v60 = vld [vmem:[%s1 + $0x74] sm:$0xf]
  %v61 = vld [vmem:[%s1 + $0x78] sm:$0xf]
  %v62 = vld [vmem:[%s1 + $0x7c] sm:$0xf]
  %v63 = vld [vmem:[%s2] sm:$0x1]
  %v65 = vlaneseq
  %v66 = vshrl.u32 %v65, 7
  %v67 = vsub.s32 0, %v66
  %v68 = vrot.slane %v63, %v67
  %v86 = vunpack.c.l.b16 %v15
  %v87 = vunpack.c.h.b16 %v15
  %v88 = vunpack.c.l.b16 %v16
  %v89 = vunpack.c.h.b16 %v16
  %v90 = vunpack.c.l.b16 %v17
  %v91 = vunpack.c.h.b16 %v17
  %v92 = vunpack.c.l.b16 %v18
  %v93 = vunpack.c.h.b16 %v18
  %v94 = vunpack.c.l.b16 %v19
  %v95 = vunpack.c.h.b16 %v19
  %v96 = vunpack.c.l.b16 %v20
  %v97 = vunpack.c.h.b16 %v20
  %v98 = vunpack.c.l.b16 %v21
  %v99 = vunpack.c.h.b16 %v21
  %v100 = vunpack.c.l.b16 %v22
  %v101 = vunpack.c.h.b16 %v22
  %v102 = vunpack.c.l.b16 %v23
  %v103 = vunpack.c.h.b16 %v23
  %v104 = vunpack.c.l.b16 %v24
  %v105 = vunpack.c.h.b16 %v24
  %v106 = vunpack.c.l.b16 %v25
  %v107 = vunpack.c.h.b16 %v25
  %v108 = vunpack.c.l.b16 %v26
  %v109 = vunpack.c.h.b16 %v26
  %v110 = vunpack.c.l.b16 %v27
  %v111 = vunpack.c.h.b16 %v27
  %v112 = vunpack.c.l.b16 %v28
  %v113 = vunpack.c.h.b16 %v28
  %v114 = vunpack.c.l.b16 %v29
  %v115 = vunpack.c.h.b16 %v29
  %v116 = vunpack.c.l.b16 %v30
  %v117 = vunpack.c.h.b16 %v30
  %v118 = vpack.c.b16 %v88, %v86
  %v119 = vpack.c.b16 %v89, %v87
  %v120 = vpack.c.b16 %v92, %v90
  %v121 = vpack.c.b16 %v93, %v91
  %v122 = vpack.c.b16 %v96, %v94
  %v123 = vpack.c.b16 %v97, %v95
  %v124 = vpack.c.b16 %v100, %v98
  %v125 = vpack.c.b16 %v101, %v99
  %v126 = vpack.c.b16 %v104, %v102
  %v127 = vpack.c.b16 %v105, %v103
  %v128 = vpack.c.b16 %v108, %v106
  %v129 = vpack.c.b16 %v109, %v107
  %v130 = vpack.c.b16 %v112, %v110
  %v131 = vpack.c.b16 %v113, %v111
  %v132 = vpack.c.b16 %v116, %v114
  %v133 = vpack.c.b16 %v117, %v115
  %v182 = vunpack.c.l.b16 %v31
  %v183 = vunpack.c.l.b16 %v32
  %v184 = vunpack.c.l.b16 %v33
  %v185 = vunpack.c.l.b16 %v34
  %v186 = vunpack.c.l.b16 %v35
  %v187 = vunpack.c.l.b16 %v36
  %v188 = vunpack.c.l.b16 %v37
  %v189 = vunpack.c.l.b16 %v38
  %v190 = vunpack.c.l.b16 %v39
  %v191 = vunpack.c.l.b16 %v40
  %v192 = vunpack.c.l.b16 %v41
  %v193 = vunpack.c.l.b16 %v42
  %v194 = vunpack.c.l.b16 %v43
  %v195 = vunpack.c.l.b16 %v44
  %v196 = vunpack.c.l.b16 %v45
  %v197 = vunpack.c.l.b16 %v46
  %v198 = vunpack.c.l.b16 %v47
  %v199 = vunpack.c.l.b16 %v48
  %v200 = vunpack.c.l.b16 %v49
  %v201 = vunpack.c.l.b16 %v50
  %v202 = vunpack.c.l.b16 %v51
  %v203 = vunpack.c.l.b16 %v52
  %v204 = vunpack.c.l.b16 %v53
  %v205 = vunpack.c.l.b16 %v54
  %v206 = vunpack.c.l.b16 %v55
  %v207 = vunpack.c.l.b16 %v56
  %v208 = vunpack.c.l.b16 %v57
  %v209 = vunpack.c.l.b16 %v58
  %v210 = vunpack.c.l.b16 %v59
  %v211 = vunpack.c.l.b16 %v60
  %v212 = vunpack.c.l.b16 %v61
  %v213 = vunpack.c.l.b16 %v62
  %v214 = vpack.c.b16 %v183, %v182
  %v215 = vpack.c.b16 %v185, %v184
  %v216 = vpack.c.b16 %v187, %v186
  %v217 = vpack.c.b16 %v189, %v188
  %v218 = vpack.c.b16 %v191, %v190
  %v219 = vpack.c.b16 %v193, %v192
  %v220 = vpack.c.b16 %v195, %v194
  %v221 = vpack.c.b16 %v197, %v196
  %v222 = vpack.c.b16 %v199, %v198
  %v223 = vpack.c.b16 %v201, %v200
  %v224 = vpack.c.b16 %v203, %v202
  %v225 = vpack.c.b16 %v205, %v204
  %v226 = vpack.c.b16 %v207, %v206
  %v227 = vpack.c.b16 %v209, %v208
  %v228 = vpack.c.b16 %v211, %v210
  %v229 = vpack.c.b16 %v213, %v212
  %246 = vmatprep.subr.bf16.mxu0 0
  %247 = vmatpush1.bf16.msra.mxu0 %v214
  %248 = vmatprep.subr.bf16.mxu0 0
  %249 = vmatpush1.bf16.msra.mxu0 %v215
  %250 = vmatprep.subr.bf16.mxu0 0
  %251 = vmatpush1.bf16.msra.mxu0 %v216
  %252 = vmatprep.subr.bf16.mxu0 0
  %253 = vmatpush1.bf16.msra.mxu0 %v217
  %254 = vmatprep.subr.bf16.mxu0 0
  %255 = vmatpush1.bf16.msra.mxu0 %v218
  %256 = vmatprep.subr.bf16.mxu0 0
  %257 = vmatpush1.bf16.msra.mxu0 %v219
  %258 = vmatprep.subr.bf16.mxu0 0
  %259 = vmatpush1.bf16.msra.mxu0 %v220
  %260 = vmatprep.subr.bf16.mxu0 0
  %261 = vmatpush1.bf16.msra.mxu0 %v221
  %262 = vmatprep.subr.bf16.mxu0 0
  %263 = vmatpush1.bf16.msra.mxu0 %v222
  %264 = vmatprep.subr.bf16.mxu0 0
  %265 = vmatpush1.bf16.msra.mxu0 %v223
  %266 = vmatprep.subr.bf16.mxu0 0
  %267 = vmatpush1.bf16.msra.mxu0 %v224
  %268 = vmatprep.subr.bf16.mxu0 0
  %269 = vmatpush1.bf16.msra.mxu0 %v225
  %270 = vmatprep.subr.bf16.mxu0 0
  %271 = vmatpush1.bf16.msra.mxu0 %v226
  %272 = vmatprep.subr.bf16.mxu0 0
  %273 = vmatpush1.bf16.msra.mxu0 %v227
  %274 = vmatprep.subr.bf16.mxu0 0
  %275 = vmatpush1.bf16.msra.mxu0 %v228
  %276 = vmatprep.subr.bf16.mxu0 0
  %277 = vmatpush1.bf16.msra.mxu0 %v229
  %278 = vmatprep.mubr.bf16.mxu0 %v119
  %279 = vmatmul.mubr.bf16.gmra.mrb[0].mxu0 %v118
  %v280 = vpop.f32.mrb[0].mxu0
  %v281 = vadd.f32 %v68, %v280
  %v282 = vpop.f32.mrb[0].mxu0
  %v283 = vpop.f32.mrb[0].mxu0
  %v284 = vadd.f32 %v68, %v283
  %v285 = vpop.f32.mrb[0].mxu0
  %286 = vmatprep.mubr.bf16.mxu0 %v121
  %287 = vmatmul.mubr.bf16.gmra.mrb[0].mxu0 %v120
  %v288 = vpop.f32.mrb[0].mxu0
  %v289 = vadd.f32 %v68, %v288
  %v290 = vpop.f32.mrb[0].mxu0
  %v291 = vpop.f32.mrb[0].mxu0
  %v292 = vadd.f32 %v68, %v291
  %v293 = vpop.f32.mrb[0].mxu0
  %294 = vmatprep.mubr.bf16.mxu0 %v123
  %295 = vmatmul.mubr.bf16.gmra.mrb[0].mxu0 %v122
  %v296 = vpop.f32.mrb[0].mxu0
  %v297 = vadd.f32 %v68, %v296
  %v298 = vpop.f32.mrb[0].mxu0
  %v299 = vpop.f32.mrb[0].mxu0
  %v300 = vadd.f32 %v68, %v299
  %v301 = vpop.f32.mrb[0].mxu0
  %302 = vmatprep.mubr.bf16.mxu0 %v125
  %303 = vmatmul.mubr.bf16.gmra.mrb[0].mxu0 %v124
  %v304 = vpop.f32.mrb[0].mxu0
  %v305 = vadd.f32 %v68, %v304
  %v306 = vpop.f32.mrb[0].mxu0
  %v307 = vpop.f32.mrb[0].mxu0
  %v308 = vadd.f32 %v68, %v307
  %v309 = vpop.f32.mrb[0].mxu0
  %310 = vmatprep.mubr.bf16.mxu0 %v127
  %311 = vmatmul.mubr.bf16.gmra.mrb[0].mxu0 %v126
  %v312 = vpop.f32.mrb[0].mxu0
  %v313 = vadd.f32 %v68, %v312
  %v314 = vpop.f32.mrb[0].mxu0
  %v315 = vpop.f32.mrb[0].mxu0
  %v316 = vadd.f32 %v68, %v315
  %v317 = vpop.f32.mrb[0].mxu0
  %318 = vmatprep.mubr.bf16.mxu0 %v129
  %319 = vmatmul.mubr.bf16.gmra.mrb[0].mxu0 %v128
  %v320 = vpop.f32.mrb[0].mxu0
  %v321 = vadd.f32 %v68, %v320
  %v322 = vpop.f32.mrb[0].mxu0
  %v323 = vpop.f32.mrb[0].mxu0
  %v324 = vadd.f32 %v68, %v323
  %v325 = vpop.f32.mrb[0].mxu0
  %326 = vmatprep.mubr.bf16.mxu0 %v131
  %327 = vmatmul.mubr.bf16.gmra.mrb[0].mxu0 %v130
  %v328 = vpop.f32.mrb[0].mxu0
  %v329 = vadd.f32 %v68, %v328
  %v330 = vpop.f32.mrb[0].mxu0
  %v331 = vpop.f32.mrb[0].mxu0
  %v332 = vadd.f32 %v68, %v331
  %v333 = vpop.f32.mrb[0].mxu0
  %334 = vmatprep.mubr.bf16.mxu0 %v133
  %335 = vmatmul.mubr.bf16.gmra.mrb[0].mxu0 %v132
  %v336 = vpop.f32.mrb[0].mxu0
  %v337 = vadd.f32 %v68, %v336
  %v338 = vpop.f32.mrb[0].mxu0
  %v339 = vpop.f32.mrb[0].mxu0
  %v340 = vadd.f32 %v68, %v339
  %v341 = vpop.f32.mrb[0].mxu0
  %342 = vdwg.mxu0
  %v343 = vmax.f32 %v281, 0.0
  %v344 = vmax.f32 %v284, 0.0
  %v345 = vmax.f32 %v289, 0.0
  %v346 = vmax.f32 %v292, 0.0
  %v347 = vmax.f32 %v297, 0.0
  %v348 = vmax.f32 %v300, 0.0
  %v349 = vmax.f32 %v305, 0.0
  %v350 = vmax.f32 %v308, 0.0
  %v351 = vmax.f32 %v313, 0.0
  %v352 = vmax.f32 %v316, 0.0
  %v353 = vmax.f32 %v321, 0.0
  %v354 = vmax.f32 %v324, 0.0
  %v355 = vmax.f32 %v329, 0.0
  %v356 = vmax.f32 %v332, 0.0
  %v357 = vmax.f32 %v337, 0.0
  %v358 = vmax.f32 %v340, 0.0
  %v359 = vpack.c.bf16 %v344, %v343
  %v360 = vpack.c.bf16 %v346, %v345
  %v361 = vpack.c.bf16 %v348, %v347
  %v362 = vpack.c.bf16 %v350, %v349
  %v363 = vpack.c.bf16 %v352, %v351
  %v364 = vpack.c.bf16 %v354, %v353
  %v365 = vpack.c.bf16 %v356, %v355
  %v366 = vpack.c.bf16 %v358, %v357
  %v375 = vunpack.c.l.b16 %v359
  %v376 = vunpack.c.h.b16 %v359
  %v377 = vunpack.c.l.b16 %v360
  %v378 = vunpack.c.h.b16 %v360
  %v379 = vunpack.c.l.b16 %v361
  %v380 = vunpack.c.h.b16 %v361
  %v381 = vunpack.c.l.b16 %v362
  %v382 = vunpack.c.h.b16 %v362
  %v383 = vunpack.c.l.b16 %v363
  %v384 = vunpack.c.h.b16 %v363
  %v385 = vunpack.c.l.b16 %v364
  %v386 = vunpack.c.h.b16 %v364
  %v387 = vunpack.c.l.b16 %v365
  %v388 = vunpack.c.h.b16 %v365
  %v389 = vunpack.c.l.b16 %v366
  %v390 = vunpack.c.h.b16 %v366
  %v391 = vpack.c.b16 %v375, %v375
  %v392 = vpack.c.b16 %v376, %v376
  %v393 = vpack.c.b16 %v377, %v377
  %v394 = vpack.c.b16 %v378, %v378
  %v395 = vpack.c.b16 %v379, %v379
  %v396 = vpack.c.b16 %v380, %v380
  %v397 = vpack.c.b16 %v381, %v381
  %v398 = vpack.c.b16 %v382, %v382
  %v399 = vpack.c.b16 %v383, %v383
  %v400 = vpack.c.b16 %v384, %v384
  %v401 = vpack.c.b16 %v385, %v385
  %v402 = vpack.c.b16 %v386, %v386
  %v403 = vpack.c.b16 %v387, %v387
  %v404 = vpack.c.b16 %v388, %v388
  %v405 = vpack.c.b16 %v389, %v389
  %v406 = vpack.c.b16 %v390, %v390
  %vm423 = vcmask 519168
  %424 = vst.msk [vmem:[%s3] sm:$0xf] %vm423, %v391
  %425 = vst.msk [vmem:[%s3 + $0x4] sm:$0xf] %vm423, %v392
  %426 = vst.msk [vmem:[%s3 + $0x8] sm:$0xf] %vm423, %v393
  %427 = vst.msk [vmem:[%s3 + $0xc] sm:$0xf] %vm423, %v394
  %428 = vst.msk [vmem:[%s3 + $0x10] sm:$0xf] %vm423, %v395
  %429 = vst.msk [vmem:[%s3 + $0x14] sm:$0xf] %vm423, %v396
  %430 = vst.msk [vmem:[%s3 + $0x18] sm:$0xf] %vm423, %v397
  %431 = vst.msk [vmem:[%s3 + $0x1c] sm:$0xf] %vm423, %v398
  %432 = vst.msk [vmem:[%s3 + $0x20] sm:$0xf] %vm423, %v399
  %433 = vst.msk [vmem:[%s3 + $0x24] sm:$0xf] %vm423, %v400
  %434 = vst.msk [vmem:[%s3 + $0x28] sm:$0xf] %vm423, %v401
  %435 = vst.msk [vmem:[%s3 + $0x2c] sm:$0xf] %vm423, %v402
  %436 = vst.msk [vmem:[%s3 + $0x30] sm:$0xf] %vm423, %v403
  %437 = vst.msk [vmem:[%s3 + $0x34] sm:$0xf] %vm423, %v404
  %438 = vst.msk [vmem:[%s3 + $0x38] sm:$0xf] %vm423, %v405
  %439 = vst.msk [vmem:[%s3 + $0x3c] sm:$0xf] %vm423, %v406
  // Predicated region
  $region14: #{_lambda_.20} parent=0 // pred_check
    _
  $region15: #{_lambda_.20} parent=0 // pred_check_branch
    %441 = sbr.rel (0) target = $region17
  $region16: #{_lambda_.20} parent=0 // pred_region
    _
  $region17: #{_lambda_.20} parent=0 // pred_fallthru
    _
  // Predicated region
  $region18: #{_lambda_.20} parent=0 // pred_check
    _
  $region19: #{_lambda_.20} parent=0 // pred_check_branch
    %443 = sbr.rel (0) target = $region21
  $region20: #{_lambda_.20} parent=0 // pred_region
    _
  $region21: #{_lambda_.20} parent=0 // pred_fallthru
    _

// kernel: _lambda_.24
$region0: #{_lambda_.24}
  #allocation0 [shape = 'u32[]', space=smem, size = 0x4, offset = 0x4, fixed_abs, tag = 'smem constant byte address 0x4 - core index']
  #allocation1 [shape = 'u32[144,128]{1,0:T(1,128)}', space=vmem, size = 0x12000, scoped, tag = 'internal scratch']
  %s0 = inlined_call_operand.vmem [shape: bf16[128,256], index: 0, kind: input, shape index: {}]
  %s1 = inlined_call_operand.vmem [shape: bf16[256,128], index: 1, kind: input, shape index: {}]
  %s2 = inlined_call_operand.vmem [shape: f32[1,128], index: 2, kind: input, shape index: {}]
  %s3 = inlined_call_operand.vmem [shape: bf16[128,128], index: 3, kind: output, shape index: {}]
  %s4 = sld [smem:[#allocation0]]
  $region22: #{_lambda_.24} parent=0
    _
  %s6 = ssub.s32 1, %s4
  %s7 = scalar_select 0, %s6, %s4
  // Predicated region
  $region2: #{_lambda_.24} parent=0 // pred_check
    _
  $region3: #{_lambda_.24} parent=0 // pred_check_branch
    %9 = sbr.rel (0) target = $region5
  $region4: #{_lambda_.24} parent=0 // pred_region
    _
  $region5: #{_lambda_.24} parent=0 // pred_fallthru
    _
  // Predicated region
  $region6: #{_lambda_.24} parent=0 // pred_check
    _
  $region7: #{_lambda_.24} parent=0 // pred_check_branch
    %11 = sbr.rel (0) target = $region9
  $region8: #{_lambda_.24} parent=0 // pred_region
    _
  $region9: #{_lambda_.24} parent=0 // pred_fallthru
    _
  // Predicated region
  $region10: #{_lambda_.24} parent=0 // pred_check
    _
  $region11: #{_lambda_.24} parent=0 // pred_check_branch
    %13 = sbr.rel (0) target = $region13
  $region12: #{_lambda_.24} parent=0 // pred_region
    _
  $region13: #{_lambda_.24} parent=0 // pred_fallthru
    _
  %v15 = vld [vmem:[%s0] sm:$0xff]
  %v16 = vld [vmem:[%s0 + $0x8] sm:$0xff]
  %v17 = vld [vmem:[%s0 + $0x10] sm:$0xff]
  %v18 = vld [vmem:[%s0 + $0x18] sm:$0xff]
  %v19 = vld [vmem:[%s0 + $0x20] sm:$0xff]
  %v20 = vld [vmem:[%s0 + $0x28] sm:$0xff]
  %v21 = vld [vmem:[%s0 + $0x30] sm:$0xff]
  %v22 = vld [vmem:[%s0 + $0x38] sm:$0xff]
  %v23 = vld [vmem:[%s0 + $0x40] sm:$0xff]
  %v24 = vld [vmem:[%s0 + $0x48] sm:$0xff]
  %v25 = vld [vmem:[%s0 + $0x50] sm:$0xff]
  %v26 = vld [vmem:[%s0 + $0x58] sm:$0xff]
  %v27 = vld [vmem:[%s0 + $0x60] sm:$0xff]
  %v28 = vld [vmem:[%s0 + $0x68] sm:$0xff]
  %v29 = vld [vmem:[%s0 + $0x70] sm:$0xff]
  %v30 = vld [vmem:[%s0 + $0x78] sm:$0xff]
  %v31 = vld [vmem:[%s1] sm:$0xf]
  %v32 = vld [vmem:[%s1 + $0x4] sm:$0xf]
  %v33 = vld [vmem:[%s1 + $0x8] sm:$0xf]
  %v34 = vld [vmem:[%s1 + $0xc] sm:$0xf]
  %v35 = vld [vmem:[%s1 + $0x10] sm:$0xf]
  %v36 = vld [vmem:[%s1 + $0x14] sm:$0xf]
  %v37 = vld [vmem:[%s1 + $0x18] sm:$0xf]
  %v38 = vld [vmem:[%s1 + $0x1c] sm:$0xf]
  %v39 = vld [vmem:[%s1 + $0x20] sm:$0xf]
  %v40 = vld [vmem:[%s1 + $0x24] sm:$0xf]
  %v41 = vld [vmem:[%s1 + $0x28] sm:$0xf]
  %v42 = vld [vmem:[%s1 + $0x2c] sm:$0xf]
  %v43 = vld [vmem:[%s1 + $0x30] sm:$0xf]
  %v44 = vld [vmem:[%s1 + $0x34] sm:$0xf]
  %v45 = vld [vmem:[%s1 + $0x38] sm:$0xf]
  %v46 = vld [vmem:[%s1 + $0x3c] sm:$0xf]
  %v47 = vld [vmem:[%s1 + $0x40] sm:$0xf]
  %v48 = vld [vmem:[%s1 + $0x44] sm:$0xf]
  %v49 = vld [vmem:[%s1 + $0x48] sm:$0xf]
  %v50 = vld [vmem:[%s1 + $0x4c] sm:$0xf]
  %v51 = vld [vmem:[%s1 + $0x50] sm:$0xf]
  %v52 = vld [vmem:[%s1 + $0x54] sm:$0xf]
  %v53 = vld [vmem:[%s1 + $0x58] sm:$0xf]
  %v54 = vld [vmem:[%s1 + $0x5c] sm:$0xf]
  %v55 = vld [vmem:[%s1 + $0x60] sm:$0xf]
  %v56 = vld [vmem:[%s1 + $0x64] sm:$0xf]
  %v57 = vld [vmem:[%s1 + $0x68] sm:$0xf]
  %v58 = vld [vmem:[%s1 + $0x6c] sm:$0xf]
  %v59 = vld [vmem:[%s1 + $0x70] sm:$0xf]
  %v60 = vld [vmem:[%s1 + $0x74] sm:$0xf]
  %v61 = vld [vmem:[%s1 + $0x78] sm:$0xf]
  %v62 = vld [vmem:[%s1 + $0x7c] sm:$0xf]
  %v63 = vld [vmem:[%s2] sm:$0x1]
  %v65 = vlaneseq
  %v66 = vshrl.u32 %v65, 7
  %v67 = vsub.s32 0, %v66
  %v68 = vrot.slane %v63, %v67
  %v86 = vunpack.c.l.b16 %v15
  %v87 = vunpack.c.h.b16 %v15
  %v88 = vunpack.c.l.b16 %v16
  %v89 = vunpack.c.h.b16 %v16
  %v90 = vunpack.c.l.b16 %v17
  %v91 = vunpack.c.h.b16 %v17
  %v92 = vunpack.c.l.b16 %v18
  %v93 = vunpack.c.h.b16 %v18
  %v94 = vunpack.c.l.b16 %v19
  %v95 = vunpack.c.h.b16 %v19
  %v96 = vunpack.c.l.b16 %v20
  %v97 = vunpack.c.h.b16 %v20
  %v98 = vunpack.c.l.b16 %v21
  %v99 = vunpack.c.h.b16 %v21
  %v100 = vunpack.c.l.b16 %v22
  %v101 = vunpack.c.h.b16 %v22
  %v102 = vunpack.c.l.b16 %v23
  %v103 = vunpack.c.h.b16 %v23
  %v104 = vunpack.c.l.b16 %v24
  %v105 = vunpack.c.h.b16 %v24
  %v106 = vunpack.c.l.b16 %v25
  %v107 = vunpack.c.h.b16 %v25
  %v108 = vunpack.c.l.b16 %v26
  %v109 = vunpack.c.h.b16 %v26
  %v110 = vunpack.c.l.b16 %v27
  %v111 = vunpack.c.h.b16 %v27
  %v112 = vunpack.c.l.b16 %v28
  %v113 = vunpack.c.h.b16 %v28
  %v114 = vunpack.c.l.b16 %v29
  %v115 = vunpack.c.h.b16 %v29
  %v116 = vunpack.c.l.b16 %v30
  %v117 = vunpack.c.h.b16 %v30
  %v118 = vpack.c.b16 %v88, %v86
  %v119 = vpack.c.b16 %v89, %v87
  %v120 = vpack.c.b16 %v92, %v90
  %v121 = vpack.c.b16 %v93, %v91
  %v122 = vpack.c.b16 %v96, %v94
  %v123 = vpack.c.b16 %v97, %v95
  %v124 = vpack.c.b16 %v100, %v98
  %v125 = vpack.c.b16 %v101, %v99
  %v126 = vpack.c.b16 %v104, %v102
  %v127 = vpack.c.b16 %v105, %v103
  %v128 = vpack.c.b16 %v108, %v106
  %v129 = vpack.c.b16 %v109, %v107
  %v130 = vpack.c.b16 %v112, %v110
  %v131 = vpack.c.b16 %v113, %v111
  %v132 = vpack.c.b16 %v116, %v114
  %v133 = vpack.c.b16 %v117, %v115
  %v182 = vunpack.c.l.b16 %v31
  %v183 = vunpack.c.l.b16 %v32
  %v184 = vunpack.c.l.b16 %v33
  %v185 = vunpack.c.l.b16 %v34
  %v186 = vunpack.c.l.b16 %v35
  %v187 = vunpack.c.l.b16 %v36
  %v188 = vunpack.c.l.b16 %v37
  %v189 = vunpack.c.l.b16 %v38
  %v190 = vunpack.c.l.b16 %v39
  %v191 = vunpack.c.l.b16 %v40
  %v192 = vunpack.c.l.b16 %v41
  %v193 = vunpack.c.l.b16 %v42
  %v194 = vunpack.c.l.b16 %v43
  %v195 = vunpack.c.l.b16 %v44
  %v196 = vunpack.c.l.b16 %v45
  %v197 = vunpack.c.l.b16 %v46
  %v198 = vunpack.c.l.b16 %v47
  %v199 = vunpack.c.l.b16 %v48
  %v200 = vunpack.c.l.b16 %v49
  %v201 = vunpack.c.l.b16 %v50
  %v202 = vunpack.c.l.b16 %v51
  %v203 = vunpack.c.l.b16 %v52
  %v204 = vunpack.c.l.b16 %v53
  %v205 = vunpack.c.l.b16 %v54
  %v206 = vunpack.c.l.b16 %v55
  %v207 = vunpack.c.l.b16 %v56
  %v208 = vunpack.c.l.b16 %v57
  %v209 = vunpack.c.l.b16 %v58
  %v210 = vunpack.c.l.b16 %v59
  %v211 = vunpack.c.l.b16 %v60
  %v212 = vunpack.c.l.b16 %v61
  %v213 = vunpack.c.l.b16 %v62
  %v214 = vpack.c.b16 %v183, %v182
  %v215 = vpack.c.b16 %v185, %v184
  %v216 = vpack.c.b16 %v187, %v186
  %v217 = vpack.c.b16 %v189, %v188
  %v218 = vpack.c.b16 %v191, %v190
  %v219 = vpack.c.b16 %v193, %v192
  %v220 = vpack.c.b16 %v195, %v194
  %v221 = vpack.c.b16 %v197, %v196
  %v222 = vpack.c.b16 %v199, %v198
  %v223 = vpack.c.b16 %v201, %v200
  %v224 = vpack.c.b16 %v203, %v202
  %v225 = vpack.c.b16 %v205, %v204
  %v226 = vpack.c.b16 %v207, %v206
  %v227 = vpack.c.b16 %v209, %v208
  %v228 = vpack.c.b16 %v211, %v210
  %v229 = vpack.c.b16 %v213, %v212
  %246 = vmatprep.subr.bf16.mxu0 0
  %247 = vmatpush1.bf16.msra.mxu0 %v214
  %248 = vmatprep.subr.bf16.mxu0 0
  %249 = vmatpush1.bf16.msra.mxu0 %v215
  %250 = vmatprep.subr.bf16.mxu0 0
  %251 = vmatpush1.bf16.msra.mxu0 %v216
  %252 = vmatprep.subr.bf16.mxu0 0
  %253 = vmatpush1.bf16.msra.mxu0 %v217
  %254 = vmatprep.subr.bf16.mxu0 0
  %255 = vmatpush1.bf16.msra.mxu0 %v218
  %256 = vmatprep.subr.bf16.mxu0 0
  %257 = vmatpush1.bf16.msra.mxu0 %v219
  %258 = vmatprep.subr.bf16.mxu0 0
  %259 = vmatpush1.bf16.msra.mxu0 %v220
  %260 = vmatprep.subr.bf16.mxu0 0
  %261 = vmatpush1.bf16.msra.mxu0 %v221
  %262 = vmatprep.subr.bf16.mxu0 0
  %263 = vmatpush1.bf16.msra.mxu0 %v222
  %264 = vmatprep.subr.bf16.mxu0 0
  %265 = vmatpush1.bf16.msra.mxu0 %v223
  %266 = vmatprep.subr.bf16.mxu0 0
  %267 = vmatpush1.bf16.msra.mxu0 %v224
  %268 = vmatprep.subr.bf16.mxu0 0
  %269 = vmatpush1.bf16.msra.mxu0 %v225
  %270 = vmatprep.subr.bf16.mxu0 0
  %271 = vmatpush1.bf16.msra.mxu0 %v226
  %272 = vmatprep.subr.bf16.mxu0 0
  %273 = vmatpush1.bf16.msra.mxu0 %v227
  %274 = vmatprep.subr.bf16.mxu0 0
  %275 = vmatpush1.bf16.msra.mxu0 %v228
  %276 = vmatprep.subr.bf16.mxu0 0
  %277 = vmatpush1.bf16.msra.mxu0 %v229
  %278 = vmatprep.mubr.bf16.mxu0 %v119
  %279 = vmatmul.mubr.bf16.gmra.mrb[0].mxu0 %v118
  %v280 = vpop.f32.mrb[0].mxu0
  %v281 = vadd.f32 %v68, %v280
  %v282 = vpop.f32.mrb[0].mxu0
  %v283 = vpop.f32.mrb[0].mxu0
  %v284 = vadd.f32 %v68, %v283
  %v285 = vpop.f32.mrb[0].mxu0
  %286 = vmatprep.mubr.bf16.mxu0 %v121
  %287 = vmatmul.mubr.bf16.gmra.mrb[0].mxu0 %v120
  %v288 = vpop.f32.mrb[0].mxu0
  %v289 = vadd.f32 %v68, %v288
  %v290 = vpop.f32.mrb[0].mxu0
  %v291 = vpop.f32.mrb[0].mxu0
  %v292 = vadd.f32 %v68, %v291
  %v293 = vpop.f32.mrb[0].mxu0
  %294 = vmatprep.mubr.bf16.mxu0 %v123
  %295 = vmatmul.mubr.bf16.gmra.mrb[0].mxu0 %v122
  %v296 = vpop.f32.mrb[0].mxu0
  %v297 = vadd.f32 %v68, %v296
  %v298 = vpop.f32.mrb[0].mxu0
  %v299 = vpop.f32.mrb[0].mxu0
  %v300 = vadd.f32 %v68, %v299
  %v301 = vpop.f32.mrb[0].mxu0
  %302 = vmatprep.mubr.bf16.mxu0 %v125
  %303 = vmatmul.mubr.bf16.gmra.mrb[0].mxu0 %v124
  %v304 = vpop.f32.mrb[0].mxu0
  %v305 = vadd.f32 %v68, %v304
  %v306 = vpop.f32.mrb[0].mxu0
  %v307 = vpop.f32.mrb[0].mxu0
  %v308 = vadd.f32 %v68, %v307
  %v309 = vpop.f32.mrb[0].mxu0
  %310 = vmatprep.mubr.bf16.mxu0 %v127
  %311 = vmatmul.mubr.bf16.gmra.mrb[0].mxu0 %v126
  %v312 = vpop.f32.mrb[0].mxu0
  %v313 = vadd.f32 %v68, %v312
  %v314 = vpop.f32.mrb[0].mxu0
  %v315 = vpop.f32.mrb[0].mxu0
  %v316 = vadd.f32 %v68, %v315
  %v317 = vpop.f32.mrb[0].mxu0
  %318 = vmatprep.mubr.bf16.mxu0 %v129
  %319 = vmatmul.mubr.bf16.gmra.mrb[0].mxu0 %v128
  %v320 = vpop.f32.mrb[0].mxu0
  %v321 = vadd.f32 %v68, %v320
  %v322 = vpop.f32.mrb[0].mxu0
  %v323 = vpop.f32.mrb[0].mxu0
  %v324 = vadd.f32 %v68, %v323
  %v325 = vpop.f32.mrb[0].mxu0
  %326 = vmatprep.mubr.bf16.mxu0 %v131
  %327 = vmatmul.mubr.bf16.gmra.mrb[0].mxu0 %v130
  %v328 = vpop.f32.mrb[0].mxu0
  %v329 = vadd.f32 %v68, %v328
  %v330 = vpop.f32.mrb[0].mxu0
  %v331 = vpop.f32.mrb[0].mxu0
  %v332 = vadd.f32 %v68, %v331
  %v333 = vpop.f32.mrb[0].mxu0
  %334 = vmatprep.mubr.bf16.mxu0 %v133
  %335 = vmatmul.mubr.bf16.gmra.mrb[0].mxu0 %v132
  %v336 = vpop.f32.mrb[0].mxu0
  %v337 = vadd.f32 %v68, %v336
  %v338 = vpop.f32.mrb[0].mxu0
  %v339 = vpop.f32.mrb[0].mxu0
  %v340 = vadd.f32 %v68, %v339
  %v341 = vpop.f32.mrb[0].mxu0
  %342 = vdwg.mxu0
  %v343 = vmax.f32 %v281, 0.0
  %v344 = vmax.f32 %v284, 0.0
  %v345 = vmax.f32 %v289, 0.0
  %v346 = vmax.f32 %v292, 0.0
  %v347 = vmax.f32 %v297, 0.0
  %v348 = vmax.f32 %v300, 0.0
  %v349 = vmax.f32 %v305, 0.0
  %v350 = vmax.f32 %v308, 0.0
  %v351 = vmax.f32 %v313, 0.0
  %v352 = vmax.f32 %v316, 0.0
  %v353 = vmax.f32 %v321, 0.0
  %v354 = vmax.f32 %v324, 0.0
  %v355 = vmax.f32 %v329, 0.0
  %v356 = vmax.f32 %v332, 0.0
  %v357 = vmax.f32 %v337, 0.0
  %v358 = vmax.f32 %v340, 0.0
  %v359 = vpack.c.bf16 %v344, %v343
  %v360 = vpack.c.bf16 %v346, %v345
  %v361 = vpack.c.bf16 %v348, %v347
  %v362 = vpack.c.bf16 %v350, %v349
  %v363 = vpack.c.bf16 %v352, %v351
  %v364 = vpack.c.bf16 %v354, %v353
  %v365 = vpack.c.bf16 %v356, %v355
  %v366 = vpack.c.bf16 %v358, %v357
  %v375 = vunpack.c.l.b16 %v359
  %v376 = vunpack.c.h.b16 %v359
  %v377 = vunpack.c.l.b16 %v360
  %v378 = vunpack.c.h.b16 %v360
  %v379 = vunpack.c.l.b16 %v361
  %v380 = vunpack.c.h.b16 %v361
  %v381 = vunpack.c.l.b16 %v362
  %v382 = vunpack.c.h.b16 %v362
  %v383 = vunpack.c.l.b16 %v363
  %v384 = vunpack.c.h.b16 %v363
  %v385 = vunpack.c.l.b16 %v364
  %v386 = vunpack.c.h.b16 %v364
  %v387 = vunpack.c.l.b16 %v365
  %v388 = vunpack.c.h.b16 %v365
  %v389 = vunpack.c.l.b16 %v366
  %v390 = vunpack.c.h.b16 %v366
  %v391 = vpack.c.b16 %v375, %v375
  %v392 = vpack.c.b16 %v376, %v376
  %v393 = vpack.c.b16 %v377, %v377
  %v394 = vpack.c.b16 %v378, %v378
  %v395 = vpack.c.b16 %v379, %v379
  %v396 = vpack.c.b16 %v380, %v380
  %v397 = vpack.c.b16 %v381, %v381
  %v398 = vpack.c.b16 %v382, %v382
  %v399 = vpack.c.b16 %v383, %v383
  %v400 = vpack.c.b16 %v384, %v384
  %v401 = vpack.c.b16 %v385, %v385
  %v402 = vpack.c.b16 %v386, %v386
  %v403 = vpack.c.b16 %v387, %v387
  %v404 = vpack.c.b16 %v388, %v388
  %v405 = vpack.c.b16 %v389, %v389
  %v406 = vpack.c.b16 %v390, %v390
  %423 = vst [vmem:[%s3] sm:$0xf] %v391
  %424 = vst [vmem:[%s3 + $0x4] sm:$0xf] %v392
  %425 = vst [vmem:[%s3 + $0x8] sm:$0xf] %v393
  %426 = vst [vmem:[%s3 + $0xc] sm:$0xf] %v394
  %427 = vst [vmem:[%s3 + $0x10] sm:$0xf] %v395
  %428 = vst [vmem:[%s3 + $0x14] sm:$0xf] %v396
  %429 = vst [vmem:[%s3 + $0x18] sm:$0xf] %v397
  %430 = vst [vmem:[%s3 + $0x1c] sm:$0xf] %v398
  %431 = vst [vmem:[%s3 + $0x20] sm:$0xf] %v399
  %432 = vst [vmem:[%s3 + $0x24] sm:$0xf] %v400
  %433 = vst [vmem:[%s3 + $0x28] sm:$0xf] %v401
  %434 = vst [vmem:[%s3 + $0x2c] sm:$0xf] %v402
  %435 = vst [vmem:[%s3 + $0x30] sm:$0xf] %v403
  %436 = vst [vmem:[%s3 + $0x34] sm:$0xf] %v404
  %437 = vst [vmem:[%s3 + $0x38] sm:$0xf] %v405
  %438 = vst [vmem:[%s3 + $0x3c] sm:$0xf] %v406
  // Predicated region
  $region14: #{_lambda_.24} parent=0 // pred_check
    _
  $region15: #{_lambda_.24} parent=0 // pred_check_branch
    %440 = sbr.rel (0) target = $region17
  $region16: #{_lambda_.24} parent=0 // pred_region
    _
  $region17: #{_lambda_.24} parent=0 // pred_fallthru
    _
  // Predicated region
  $region18: #{_lambda_.24} parent=0 // pred_check
    _
  $region19: #{_lambda_.24} parent=0 // pred_check_branch
    %442 = sbr.rel (0) target = $region21
  $region20: #{_lambda_.24} parent=0 // pred_region
    _
  $region21: #{_lambda_.24} parent=0 // pred_fallthru
    _

// kernel: _lambda_.23
$region0: #{_lambda_.23}
  #allocation0 [shape = 'u32[]', space=smem, size = 0x4, offset = 0x4, fixed_abs, tag = 'smem constant byte address 0x4 - core index']
  #allocation1 [shape = 'u32[144,128]{1,0:T(1,128)}', space=vmem, size = 0x12000, scoped, tag = 'internal scratch']
  %s0 = inlined_call_operand.vmem [shape: bf16[32,256], index: 0, kind: input, shape index: {}]
  %s1 = inlined_call_operand.vmem [shape: bf16[256,512], index: 1, kind: input, shape index: {}]
  %s2 = inlined_call_operand.vmem [shape: f32[1,512], index: 2, kind: input, shape index: {}]
  %s3 = inlined_call_operand.vmem [shape: bf16[32,512], index: 3, kind: output, shape index: {}]
  %s4 = sld [smem:[#allocation0]]
  $region22: #{_lambda_.23} parent=0
    _
  %s6 = ssub.s32 1, %s4
  %s7 = scalar_select 0, %s6, %s4
  // Predicated region
  $region2: #{_lambda_.23} parent=0 // pred_check
    _
  $region3: #{_lambda_.23} parent=0 // pred_check_branch
    %9 = sbr.rel (0) target = $region5
  $region4: #{_lambda_.23} parent=0 // pred_region
    _
  $region5: #{_lambda_.23} parent=0 // pred_fallthru
    _
  // Predicated region
  $region6: #{_lambda_.23} parent=0 // pred_check
    _
  $region7: #{_lambda_.23} parent=0 // pred_check_branch
    %11 = sbr.rel (0) target = $region9
  $region8: #{_lambda_.23} parent=0 // pred_region
    _
  $region9: #{_lambda_.23} parent=0 // pred_fallthru
    _
  // Predicated region
  $region10: #{_lambda_.23} parent=0 // pred_check
    _
  $region11: #{_lambda_.23} parent=0 // pred_check_branch
    %13 = sbr.rel (0) target = $region13
  $region12: #{_lambda_.23} parent=0 // pred_region
    _
  $region13: #{_lambda_.23} parent=0 // pred_fallthru
    _
  %v14 = vld [vmem:[%s0] sm:$0xff]
  %v15 = vld [vmem:[%s0 + $0x8] sm:$0xff]
  %v16 = vld [vmem:[%s0 + $0x10] sm:$0xff]
  %v17 = vld [vmem:[%s0 + $0x18] sm:$0xff]
  %v18 = vld [vmem:[%s1] sm:$0xff]
  %v19 = vld [vmem:[%s1 + $0x8] sm:$0xff]
  %v20 = vld [vmem:[%s1 + $0x10] sm:$0xff]
  %v21 = vld [vmem:[%s1 + $0x18] sm:$0xff]
  %v22 = vld [vmem:[%s1 + $0x20] sm:$0xff]
  %v23 = vld [vmem:[%s1 + $0x28] sm:$0xff]
  %v24 = vld [vmem:[%s1 + $0x30] sm:$0xff]
  %v25 = vld [vmem:[%s1 + $0x38] sm:$0xff]
  %v26 = vld [vmem:[%s1 + $0x40] sm:$0xff]
  %v27 = vld [vmem:[%s1 + $0x48] sm:$0xff]
  %v28 = vld [vmem:[%s1 + $0x50] sm:$0xff]
  %v29 = vld [vmem:[%s1 + $0x58] sm:$0xff]
  %v30 = vld [vmem:[%s1 + $0x60] sm:$0xff]
  %v31 = vld [vmem:[%s1 + $0x68] sm:$0xff]
  %v32 = vld [vmem:[%s1 + $0x70] sm:$0xff]
  %v33 = vld [vmem:[%s1 + $0x78] sm:$0xff]
  %v34 = vld [vmem:[%s1 + $0x80] sm:$0xff]
  %v35 = vld [vmem:[%s1 + $0x88] sm:$0xff]
  %v36 = vld [vmem:[%s1 + $0x90] sm:$0xff]
  %v37 = vld [vmem:[%s1 + $0x98] sm:$0xff]
  %v38 = vld [vmem:[%s1 + $0xa0] sm:$0xff]
  %v39 = vld [vmem:[%s1 + $0xa8] sm:$0xff]
  %v40 = vld [vmem:[%s1 + $0xb0] sm:$0xff]
  %v41 = vld [vmem:[%s1 + $0xb8] sm:$0xff]
  %v42 = vld [vmem:[%s1 + $0xc0] sm:$0xff]
  %v43 = vld [vmem:[%s1 + $0xc8] sm:$0xff]
  %v44 = vld [vmem:[%s1 + $0xd0] sm:$0xff]
  %v45 = vld [vmem:[%s1 + $0xd8] sm:$0xff]
  %v46 = vld [vmem:[%s1 + $0xe0] sm:$0xff]
  %v47 = vld [vmem:[%s1 + $0xe8] sm:$0xff]
  %v48 = vld [vmem:[%s1 + $0xf0] sm:$0xff]
  %v49 = vld [vmem:[%s1 + $0xf8] sm:$0xff]
  %v50 = vld [vmem:[%s1 + $0x100] sm:$0xff]
  %v51 = vld [vmem:[%s1 + $0x108] sm:$0xff]
  %v52 = vld [vmem:[%s1 + $0x110] sm:$0xff]
  %v53 = vld [vmem:[%s1 + $0x118] sm:$0xff]
  %v54 = vld [vmem:[%s1 + $0x120] sm:$0xff]
  %v55 = vld [vmem:[%s1 + $0x128] sm:$0xff]
  %v56 = vld [vmem:[%s1 + $0x130] sm:$0xff]
  %v57 = vld [vmem:[%s1 + $0x138] sm:$0xff]
  %v58 = vld [vmem:[%s1 + $0x140] sm:$0xff]
  %v59 = vld [vmem:[%s1 + $0x148] sm:$0xff]
  %v60 = vld [vmem:[%s1 + $0x150] sm:$0xff]
  %v61 = vld [vmem:[%s1 + $0x158] sm:$0xff]
  %v62 = vld [vmem:[%s1 + $0x160] sm:$0xff]
  %v63 = vld [vmem:[%s1 + $0x168] sm:$0xff]
  %v64 = vld [vmem:[%s1 + $0x170] sm:$0xff]
  %v65 = vld [vmem:[%s1 + $0x178] sm:$0xff]
  %v66 = vld [vmem:[%s1 + $0x180] sm:$0xff]
  %v67 = vld [vmem:[%s1 + $0x188] sm:$0xff]
  %v68 = vld [vmem:[%s1 + $0x190] sm:$0xff]
  %v69 = vld [vmem:[%s1 + $0x198] sm:$0xff]
  %v70 = vld [vmem:[%s1 + $0x1a0] sm:$0xff]
  %v71 = vld [vmem:[%s1 + $0x1a8] sm:$0xff]
  %v72 = vld [vmem:[%s1 + $0x1b0] sm:$0xff]
  %v73 = vld [vmem:[%s1 + $0x1b8] sm:$0xff]
  %v74 = vld [vmem:[%s1 + $0x1c0] sm:$0xff]
  %v75 = vld [vmem:[%s1 + $0x1c8] sm:$0xff]
  %v76 = vld [vmem:[%s1 + $0x1d0] sm:$0xff]
  %v77 = vld [vmem:[%s1 + $0x1d8] sm:$0xff]
  %v78 = vld [vmem:[%s1 + $0x1e0] sm:$0xff]
  %v79 = vld [vmem:[%s1 + $0x1e8] sm:$0xff]
  %v80 = vld [vmem:[%s1 + $0x1f0] sm:$0xff]
  %v81 = vld [vmem:[%s1 + $0x1f8] sm:$0xff]
  %v82 = vld [vmem:[%s2] sm:$0xf]
  %v84 = vlaneseq
  %v85 = vshrl.u32 %v84, 7
  %v86 = vsub.s32 0, %v85
  %v87 = vrot.slane %v82, %v86
  %v88 = vlaneseq
  %v89 = vshrl.u32 %v88, 7
  %v90 = vsub.s32 1, %v89
  %v91 = vrot.slane %v82, %v90
  %v92 = vlaneseq
  %v93 = vshrl.u32 %v92, 7
  %v94 = vsub.s32 2, %v93
  %v95 = vrot.slane %v82, %v94
  %v96 = vlaneseq
  %v97 = vshrl.u32 %v96, 7
  %v98 = vsub.s32 3, %v97
  %v99 = vrot.slane %v82, %v98
  %v108 = vunpack.c.l.b16 %v14
  %v109 = vunpack.c.h.b16 %v14
  %v110 = vunpack.c.l.b16 %v15
  %v111 = vunpack.c.h.b16 %v15
  %v112 = vunpack.c.l.b16 %v16
  %v113 = vunpack.c.h.b16 %v16
  %v114 = vunpack.c.l.b16 %v17
  %v115 = vunpack.c.h.b16 %v17
  %v116 = vpack.c.b16 %v110, %v108
  %v117 = vpack.c.b16 %v111, %v109
  %v118 = vpack.c.b16 %v114, %v112
  %v119 = vpack.c.b16 %v115, %v113
  %v188 = vunpack.c.l.b16 %v18
  %v189 = vunpack.c.h.b16 %v18
  %v190 = vunpack.c.l.b16 %v19
  %v191 = vunpack.c.h.b16 %v19
  %v192 = vunpack.c.l.b16 %v20
  %v193 = vunpack.c.h.b16 %v20
  %v194 = vunpack.c.l.b16 %v21
  %v195 = vunpack.c.h.b16 %v21
  %v196 = vunpack.c.l.b16 %v22
  %v197 = vunpack.c.h.b16 %v22
  %v198 = vunpack.c.l.b16 %v23
  %v199 = vunpack.c.h.b16 %v23
  %v200 = vunpack.c.l.b16 %v24
  %v201 = vunpack.c.h.b16 %v24
  %v202 = vunpack.c.l.b16 %v25
  %v203 = vunpack.c.h.b16 %v25
  %v204 = vunpack.c.l.b16 %v26
  %v205 = vunpack.c.h.b16 %v26
  %v206 = vunpack.c.l.b16 %v27
  %v207 = vunpack.c.h.b16 %v27
  %v208 = vunpack.c.l.b16 %v28
  %v209 = vunpack.c.h.b16 %v28
  %v210 = vunpack.c.l.b16 %v29
  %v211 = vunpack.c.h.b16 %v29
  %v212 = vunpack.c.l.b16 %v30
  %v213 = vunpack.c.h.b16 %v30
  %v214 = vunpack.c.l.b16 %v31
  %v215 = vunpack.c.h.b16 %v31
  %v216 = vunpack.c.l.b16 %v32
  %v217 = vunpack.c.h.b16 %v32
  %v218 = vunpack.c.l.b16 %v33
  %v219 = vunpack.c.h.b16 %v33
  %v220 = vunpack.c.l.b16 %v34
  %v221 = vunpack.c.h.b16 %v34
  %v222 = vunpack.c.l.b16 %v35
  %v223 = vunpack.c.h.b16 %v35
  %v224 = vunpack.c.l.b16 %v36
  %v225 = vunpack.c.h.b16 %v36
  %v226 = vunpack.c.l.b16 %v37
  %v227 = vunpack.c.h.b16 %v37
  %v228 = vunpack.c.l.b16 %v38
  %v229 = vunpack.c.h.b16 %v38
  %v230 = vunpack.c.l.b16 %v39
  %v231 = vunpack.c.h.b16 %v39
  %v232 = vunpack.c.l.b16 %v40
  %v233 = vunpack.c.h.b16 %v40
  %v234 = vunpack.c.l.b16 %v41
  %v235 = vunpack.c.h.b16 %v41
  %v236 = vunpack.c.l.b16 %v42
  %v237 = vunpack.c.h.b16 %v42
  %v238 = vunpack.c.l.b16 %v43
  %v239 = vunpack.c.h.b16 %v43
  %v240 = vunpack.c.l.b16 %v44
  %v241 = vunpack.c.h.b16 %v44
  %v242 = vunpack.c.l.b16 %v45
  %v243 = vunpack.c.h.b16 %v45
  %v244 = vunpack.c.l.b16 %v46
  %v245 = vunpack.c.h.b16 %v46
  %v246 = vunpack.c.l.b16 %v47
  %v247 = vunpack.c.h.b16 %v47
  %v248 = vunpack.c.l.b16 %v48
  %v249 = vunpack.c.h.b16 %v48
  %v250 = vunpack.c.l.b16 %v49
  %v251 = vunpack.c.h.b16 %v49
  %v252 = vunpack.c.l.b16 %v50
  %v253 = vunpack.c.h.b16 %v50
  %v254 = vunpack.c.l.b16 %v51
  %v255 = vunpack.c.h.b16 %v51
  %v256 = vunpack.c.l.b16 %v52
  %v257 = vunpack.c.h.b16 %v52
  %v258 = vunpack.c.l.b16 %v53
  %v259 = vunpack.c.h.b16 %v53
  %v260 = vunpack.c.l.b16 %v54
  %v261 = vunpack.c.h.b16 %v54
  %v262 = vunpack.c.l.b16 %v55
  %v263 = vunpack.c.h.b16 %v55
  %v264 = vunpack.c.l.b16 %v56
  %v265 = vunpack.c.h.b16 %v56
  %v266 = vunpack.c.l.b16 %v57
  %v267 = vunpack.c.h.b16 %v57
  %v268 = vunpack.c.l.b16 %v58
  %v269 = vunpack.c.h.b16 %v58
  %v270 = vunpack.c.l.b16 %v59
  %v271 = vunpack.c.h.b16 %v59
  %v272 = vunpack.c.l.b16 %v60
  %v273 = vunpack.c.h.b16 %v60
  %v274 = vunpack.c.l.b16 %v61
  %v275 = vunpack.c.h.b16 %v61
  %v276 = vunpack.c.l.b16 %v62
  %v277 = vunpack.c.h.b16 %v62
  %v278 = vunpack.c.l.b16 %v63
  %v279 = vunpack.c.h.b16 %v63
  %v280 = vunpack.c.l.b16 %v64
  %v281 = vunpack.c.h.b16 %v64
  %v282 = vunpack.c.l.b16 %v65
  %v283 = vunpack.c.h.b16 %v65
  %v284 = vunpack.c.l.b16 %v66
  %v285 = vunpack.c.h.b16 %v66
  %v286 = vunpack.c.l.b16 %v67
  %v287 = vunpack.c.h.b16 %v67
  %v288 = vunpack.c.l.b16 %v68
  %v289 = vunpack.c.h.b16 %v68
  %v290 = vunpack.c.l.b16 %v69
  %v291 = vunpack.c.h.b16 %v69
  %v292 = vunpack.c.l.b16 %v70
  %v293 = vunpack.c.h.b16 %v70
  %v294 = vunpack.c.l.b16 %v71
  %v295 = vunpack.c.h.b16 %v71
  %v296 = vunpack.c.l.b16 %v72
  %v297 = vunpack.c.h.b16 %v72
  %v298 = vunpack.c.l.b16 %v73
  %v299 = vunpack.c.h.b16 %v73
  %v300 = vunpack.c.l.b16 %v74
  %v301 = vunpack.c.h.b16 %v74
  %v302 = vunpack.c.l.b16 %v75
  %v303 = vunpack.c.h.b16 %v75
  %v304 = vunpack.c.l.b16 %v76
  %v305 = vunpack.c.h.b16 %v76
  %v306 = vunpack.c.l.b16 %v77
  %v307 = vunpack.c.h.b16 %v77
  %v308 = vunpack.c.l.b16 %v78
  %v309 = vunpack.c.h.b16 %v78
  %v310 = vunpack.c.l.b16 %v79
  %v311 = vunpack.c.h.b16 %v79
  %v312 = vunpack.c.l.b16 %v80
  %v313 = vunpack.c.h.b16 %v80
  %v314 = vunpack.c.l.b16 %v81
  %v315 = vunpack.c.h.b16 %v81
  %v316 = vpack.c.b16 %v192, %v188
  %v317 = vpack.c.b16 %v193, %v189
  %v318 = vpack.c.b16 %v194, %v190
  %v319 = vpack.c.b16 %v195, %v191
  %v320 = vpack.c.b16 %v200, %v196
  %v321 = vpack.c.b16 %v201, %v197
  %v322 = vpack.c.b16 %v202, %v198
  %v323 = vpack.c.b16 %v203, %v199
  %v324 = vpack.c.b16 %v208, %v204
  %v325 = vpack.c.b16 %v209, %v205
  %v326 = vpack.c.b16 %v210, %v206
  %v327 = vpack.c.b16 %v211, %v207
  %v328 = vpack.c.b16 %v216, %v212
  %v329 = vpack.c.b16 %v217, %v213
  %v330 = vpack.c.b16 %v218, %v214
  %v331 = vpack.c.b16 %v219, %v215
  %v332 = vpack.c.b16 %v224, %v220
  %v333 = vpack.c.b16 %v225, %v221
  %v334 = vpack.c.b16 %v226, %v222
  %v335 = vpack.c.b16 %v227, %v223
  %v336 = vpack.c.b16 %v232, %v228
  %v337 = vpack.c.b16 %v233, %v229
  %v338 = vpack.c.b16 %v234, %v230
  %v339 = vpack.c.b16 %v235, %v231
  %v340 = vpack.c.b16 %v240, %v236
  %v341 = vpack.c.b16 %v241, %v237
  %v342 = vpack.c.b16 %v242, %v238
  %v343 = vpack.c.b16 %v243, %v239
  %v344 = vpack.c.b16 %v248, %v244
  %v345 = vpack.c.b16 %v249, %v245
  %v346 = vpack.c.b16 %v250, %v246
  %v347 = vpack.c.b16 %v251, %v247
  %v348 = vpack.c.b16 %v256, %v252
  %v349 = vpack.c.b16 %v257, %v253
  %v350 = vpack.c.b16 %v258, %v254
  %v351 = vpack.c.b16 %v259, %v255
  %v352 = vpack.c.b16 %v264, %v260
  %v353 = vpack.c.b16 %v265, %v261
  %v354 = vpack.c.b16 %v266, %v262
  %v355 = vpack.c.b16 %v267, %v263
  %v356 = vpack.c.b16 %v272, %v268
  %v357 = vpack.c.b16 %v273, %v269
  %v358 = vpack.c.b16 %v274, %v270
  %v359 = vpack.c.b16 %v275, %v271
  %v360 = vpack.c.b16 %v280, %v276
  %v361 = vpack.c.b16 %v281, %v277
  %v362 = vpack.c.b16 %v282, %v278
  %v363 = vpack.c.b16 %v283, %v279
  %v364 = vpack.c.b16 %v288, %v284
  %v365 = vpack.c.b16 %v289, %v285
  %v366 = vpack.c.b16 %v290, %v286
  %v367 = vpack.c.b16 %v291, %v287
  %v368 = vpack.c.b16 %v296, %v292
  %v369 = vpack.c.b16 %v297, %v293
  %v370 = vpack.c.b16 %v298, %v294
  %v371 = vpack.c.b16 %v299, %v295
  %v372 = vpack.c.b16 %v304, %v300
  %v373 = vpack.c.b16 %v305, %v301
  %v374 = vpack.c.b16 %v306, %v302
  %v375 = vpack.c.b16 %v307, %v303
  %v376 = vpack.c.b16 %v312, %v308
  %v377 = vpack.c.b16 %v313, %v309
  %v378 = vpack.c.b16 %v314, %v310
  %v379 = vpack.c.b16 %v315, %v311
  %444 = vmatprep.subr.bf16.mxu0 %v317
  %445 = vmatpush1.bf16.msra.mxu0 %v316
  %446 = vmatprep.subr.bf16.mxu0 %v321
  %447 = vmatpush1.bf16.msra.mxu0 %v320
  %448 = vmatprep.subr.bf16.mxu0 %v325
  %449 = vmatpush1.bf16.msra.mxu0 %v324
  %450 = vmatprep.subr.bf16.mxu0 %v329
  %451 = vmatpush1.bf16.msra.mxu0 %v328
  %452 = vmatprep.subr.bf16.mxu0 %v333
  %453 = vmatpush1.bf16.msra.mxu0 %v332
  %454 = vmatprep.subr.bf16.mxu0 %v337
  %455 = vmatpush1.bf16.msra.mxu0 %v336
  %456 = vmatprep.subr.bf16.mxu0 %v341
  %457 = vmatpush1.bf16.msra.mxu0 %v340
  %458 = vmatprep.subr.bf16.mxu0 %v345
  %459 = vmatpush1.bf16.msra.mxu0 %v344
  %460 = vmatprep.subr.bf16.mxu0 %v349
  %461 = vmatpush1.bf16.msra.mxu0 %v348
  %462 = vmatprep.subr.bf16.mxu0 %v353
  %463 = vmatpush1.bf16.msra.mxu0 %v352
  %464 = vmatprep.subr.bf16.mxu0 %v357
  %465 = vmatpush1.bf16.msra.mxu0 %v356
  %466 = vmatprep.subr.bf16.mxu0 %v361
  %467 = vmatpush1.bf16.msra.mxu0 %v360
  %468 = vmatprep.subr.bf16.mxu0 %v365
  %469 = vmatpush1.bf16.msra.mxu0 %v364
  %470 = vmatprep.subr.bf16.mxu0 %v369
  %471 = vmatpush1.bf16.msra.mxu0 %v368
  %472 = vmatprep.subr.bf16.mxu0 %v373
  %473 = vmatpush1.bf16.msra.mxu0 %v372
  %474 = vmatprep.subr.bf16.mxu0 %v377
  %475 = vmatpush1.bf16.msra.mxu0 %v376
  %476 = vmatprep.mubr.bf16.mxu0 %v117
  %477 = vmatmul.mubr.bf16.gmra.mrb[0].mxu0 %v116
  %v478 = vpop.f32.mrb[0].mxu0
  %v479 = vadd.f32 %v87, %v478
  %v480 = vpop.f32.mrb[0].mxu0
  %v481 = vadd.f32 %v91, %v480
  %v482 = vpop.f32.mrb[0].mxu0
  %v483 = vadd.f32 %v87, %v482
  %v484 = vpop.f32.mrb[0].mxu0
  %v485 = vadd.f32 %v91, %v484
  %486 = vmatprep.mubr.bf16.mxu0 %v119
  %487 = vmatmul.mubr.bf16.gmra.mrb[0].mxu0 %v118
  %v488 = vpop.f32.mrb[0].mxu0
  %v489 = vadd.f32 %v87, %v488
  %v490 = vpop.f32.mrb[0].mxu0
  %v491 = vadd.f32 %v91, %v490
  %v492 = vpop.f32.mrb[0].mxu0
  %v493 = vadd.f32 %v87, %v492
  %v494 = vpop.f32.mrb[0].mxu0
  %v495 = vadd.f32 %v91, %v494
  %496 = vdwg.mxu0
  %497 = vmatprep.subr.bf16.mxu0 %v319
  %498 = vmatpush1.bf16.msra.mxu0 %v318
  %499 = vmatprep.subr.bf16.mxu0 %v323
  %500 = vmatpush1.bf16.msra.mxu0 %v322
  %501 = vmatprep.subr.bf16.mxu0 %v327
  %502 = vmatpush1.bf16.msra.mxu0 %v326
  %503 = vmatprep.subr.bf16.mxu0 %v331
  %504 = vmatpush1.bf16.msra.mxu0 %v330
  %505 = vmatprep.subr.bf16.mxu0 %v335
  %506 = vmatpush1.bf16.msra.mxu0 %v334
  %507 = vmatprep.subr.bf16.mxu0 %v339
  %508 = vmatpush1.bf16.msra.mxu0 %v338
  %509 = vmatprep.subr.bf16.mxu0 %v343
  %510 = vmatpush1.bf16.msra.mxu0 %v342
  %511 = vmatprep.subr.bf16.mxu0 %v347
  %512 = vmatpush1.bf16.msra.mxu0 %v346
  %513 = vmatprep.subr.bf16.mxu0 %v351
  %514 = vmatpush1.bf16.msra.mxu0 %v350
  %515 = vmatprep.subr.bf16.mxu0 %v355
  %516 = vmatpush1.bf16.msra.mxu0 %v354
  %517 = vmatprep.subr.bf16.mxu0 %v359
  %518 = vmatpush1.bf16.msra.mxu0 %v358
  %519 = vmatprep.subr.bf16.mxu0 %v363
  %520 = vmatpush1.bf16.msra.mxu0 %v362
  %521 = vmatprep.subr.bf16.mxu0 %v367
  %522 = vmatpush1.bf16.msra.mxu0 %v366
  %523 = vmatprep.subr.bf16.mxu0 %v371
  %524 = vmatpush1.bf16.msra.mxu0 %v370
  %525 = vmatprep.subr.bf16.mxu0 %v375
  %526 = vmatpush1.bf16.msra.mxu0 %v374
  %527 = vmatprep.subr.bf16.mxu0 %v379
  %528 = vmatpush1.bf16.msra.mxu0 %v378
  %529 = vmatprep.mubr.bf16.mxu0 %v117
  %530 = vmatmul.mubr.bf16.gmra.mrb[0].mxu0 %v116
  %v531 = vpop.f32.mrb[0].mxu0
  %v532 = vadd.f32 %v95, %v531
  %v533 = vpop.f32.mrb[0].mxu0
  %v534 = vadd.f32 %v99, %v533
  %v535 = vpop.f32.mrb[0].mxu0
  %v536 = vadd.f32 %v95, %v535
  %v537 = vpop.f32.mrb[0].mxu0
  %v538 = vadd.f32 %v99, %v537
  %539 = vmatprep.mubr.bf16.mxu0 %v119
  %540 = vmatmul.mubr.bf16.gmra.mrb[0].mxu0 %v118
  %v541 = vpop.f32.mrb[0].mxu0
  %v542 = vadd.f32 %v95, %v541
  %v543 = vpop.f32.mrb[0].mxu0
  %v544 = vadd.f32 %v99, %v543
  %v545 = vpop.f32.mrb[0].mxu0
  %v546 = vadd.f32 %v95, %v545
  %v547 = vpop.f32.mrb[0].mxu0
  %v548 = vadd.f32 %v99, %v547
  %549 = vdwg.mxu0
  %v550 = vpack.c.bf16 %v483, %v479
  %v551 = vpack.c.bf16 %v485, %v481
  %v552 = vpack.c.bf16 %v536, %v532
  %v553 = vpack.c.bf16 %v538, %v534
  %v554 = vpack.c.bf16 %v493, %v489
  %v555 = vpack.c.bf16 %v495, %v491
  %v556 = vpack.c.bf16 %v546, %v542
  %v557 = vpack.c.bf16 %v548, %v544
  %v566 = vunpack.c.l.b16 %v550
  %v567 = vunpack.c.l.b16 %v551
  %v568 = vunpack.c.l.b16 %v552
  %v569 = vunpack.c.l.b16 %v553
  %v570 = vunpack.c.h.b16 %v550
  %v571 = vunpack.c.h.b16 %v551
  %v572 = vunpack.c.h.b16 %v552
  %v573 = vunpack.c.h.b16 %v553
  %v574 = vunpack.c.l.b16 %v554
  %v575 = vunpack.c.l.b16 %v555
  %v576 = vunpack.c.l.b16 %v556
  %v577 = vunpack.c.l.b16 %v557
  %v578 = vunpack.c.h.b16 %v554
  %v579 = vunpack.c.h.b16 %v555
  %v580 = vunpack.c.h.b16 %v556
  %v581 = vunpack.c.h.b16 %v557
  %v582 = vpack.c.b16 %v567, %v566
  %v583 = vpack.c.b16 %v569, %v568
  %v584 = vpack.c.b16 %v571, %v570
  %v585 = vpack.c.b16 %v573, %v572
  %v586 = vpack.c.b16 %v575, %v574
  %v587 = vpack.c.b16 %v577, %v576
  %v588 = vpack.c.b16 %v579, %v578
  %v589 = vpack.c.b16 %v581, %v580
  %598 = vst [vmem:[%s3] sm:$0xff] %v582
  %599 = vst [vmem:[%s3 + $0x8] sm:$0xff] %v583
  %600 = vst [vmem:[%s3 + $0x10] sm:$0xff] %v584
  %601 = vst [vmem:[%s3 + $0x18] sm:$0xff] %v585
  %602 = vst [vmem:[%s3 + $0x20] sm:$0xff] %v586
  %603 = vst [vmem:[%s3 + $0x28] sm:$0xff] %v587
  %604 = vst [vmem:[%s3 + $0x30] sm:$0xff] %v588
  %605 = vst [vmem:[%s3 + $0x38] sm:$0xff] %v589
  // Predicated region
  $region14: #{_lambda_.23} parent=0 // pred_check
    _
  $region15: #{_lambda_.23} parent=0 // pred_check_branch
    %607 = sbr.rel (0) target = $region17
  $region16: #{_lambda_.23} parent=0 // pred_region
    _
  $region17: #{_lambda_.23} parent=0 // pred_fallthru
    _
  // Predicated region
  $region18: #{_lambda_.23} parent=0 // pred_check
    _
  $region19: #{_lambda_.23} parent=0 // pred_check_branch
    %609 = sbr.rel (0) target = $region21
  $region20: #{_lambda_.23} parent=0 // pred_region
    _
  $region21: #{_lambda_.23} parent=0 // pred_fallthru
    _

// kernel: _lambda_.25
$region0: #{_lambda_.25}
  #allocation0 [shape = 'u32[]', space=smem, size = 0x4, offset = 0x4, fixed_abs, tag = 'smem constant byte address 0x4 - core index']
  #allocation1 [shape = 'u32[144,128]{1,0:T(1,128)}', space=vmem, size = 0x12000, scoped, tag = 'internal scratch']
  %s0 = inlined_call_operand.vmem [shape: bf16[32,1152], index: 0, kind: input, shape index: {}]
  %s1 = inlined_call_operand.vmem [shape: bf16[1152,128], index: 1, kind: input, shape index: {}]
  %s2 = inlined_call_operand.vmem [shape: f32[1,128], index: 2, kind: input, shape index: {}]
  %s3 = inlined_call_operand.vmem [shape: bf16[32,128], index: 3, kind: output, shape index: {}]
  %s4 = sld [smem:[#allocation0]]
  $region22: #{_lambda_.25} parent=0
    _
  %s6 = ssub.s32 1, %s4
  %s7 = scalar_select 0, %s6, %s4
  // Predicated region
  $region2: #{_lambda_.25} parent=0 // pred_check
    _
  $region3: #{_lambda_.25} parent=0 // pred_check_branch
    %9 = sbr.rel (0) target = $region5
  $region4: #{_lambda_.25} parent=0 // pred_region
    _
  $region5: #{_lambda_.25} parent=0 // pred_fallthru
    _
  // Predicated region
  $region6: #{_lambda_.25} parent=0 // pred_check
    _
  $region7: #{_lambda_.25} parent=0 // pred_check_branch
    %11 = sbr.rel (0) target = $region9
  $region8: #{_lambda_.25} parent=0 // pred_region
    _
  $region9: #{_lambda_.25} parent=0 // pred_fallthru
    _
  // Predicated region
  $region10: #{_lambda_.25} parent=0 // pred_check
    _
  $region11: #{_lambda_.25} parent=0 // pred_check_branch
    %13 = sbr.rel (0) target = $region13
  $region12: #{_lambda_.25} parent=0 // pred_region
    _
  $region13: #{_lambda_.25} parent=0 // pred_fallthru
    _
  %v15 = vld [vmem:[%s0] sm:$0xff]
  %v16 = vld [vmem:[%s0 + $0x8] sm:$0xff]
  %v17 = vld [vmem:[%s0 + $0x10] sm:$0xff]
  %v18 = vld [vmem:[%s0 + $0x18] sm:$0xff]
  %v19 = vld [vmem:[%s0 + $0x20] sm:$0xf]
  %v20 = vld [vmem:[%s0 + $0x24] sm:$0xff]
  %v21 = vld [vmem:[%s0 + $0x2c] sm:$0xff]
  %v22 = vld [vmem:[%s0 + $0x34] sm:$0xff]
  %v23 = vld [vmem:[%s0 + $0x3c] sm:$0xff]
  %v24 = vld [vmem:[%s0 + $0x44] sm:$0xf]
  %v25 = vld [vmem:[%s0 + $0x48] sm:$0xff]
  %v26 = vld [vmem:[%s0 + $0x50] sm:$0xff]
  %v27 = vld [vmem:[%s0 + $0x58] sm:$0xff]
  %v28 = vld [vmem:[%s0 + $0x60] sm:$0xff]
  %v29 = vld [vmem:[%s0 + $0x68] sm:$0xf]
  %v30 = vld [vmem:[%s0 + $0x6c] sm:$0xff]
  %v31 = vld [vmem:[%s0 + $0x74] sm:$0xff]
  %v32 = vld [vmem:[%s0 + $0x7c] sm:$0xff]
  %v33 = vld [vmem:[%s0 + $0x84] sm:$0xff]
  %v34 = vld [vmem:[%s0 + $0x8c] sm:$0xf]
  %v35 = vld [vmem:[%s1] sm:$0xf]
  %v36 = vld [vmem:[%s1 + $0x4] sm:$0xf]
  %v37 = vld [vmem:[%s1 + $0x8] sm:$0xf]
  %v38 = vld [vmem:[%s1 + $0xc] sm:$0xf]
  %v39 = vld [vmem:[%s1 + $0x10] sm:$0xf]
  %v40 = vld [vmem:[%s1 + $0x14] sm:$0xf]
  %v41 = vld [vmem:[%s1 + $0x18] sm:$0xf]
  %v42 = vld [vmem:[%s1 + $0x1c] sm:$0xf]
  %v43 = vld [vmem:[%s1 + $0x20] sm:$0xf]
  %v44 = vld [vmem:[%s1 + $0x24] sm:$0xf]
  %v45 = vld [vmem:[%s1 + $0x28] sm:$0xf]
  %v46 = vld [vmem:[%s1 + $0x2c] sm:$0xf]
  %v47 = vld [vmem:[%s1 + $0x30] sm:$0xf]
  %v48 = vld [vmem:[%s1 + $0x34] sm:$0xf]
  %v49 = vld [vmem:[%s1 + $0x38] sm:$0xf]
  %v50 = vld [vmem:[%s1 + $0x3c] sm:$0xf]
  %v51 = vld [vmem:[%s1 + $0x40] sm:$0xf]
  %v52 = vld [vmem:[%s1 + $0x44] sm:$0xf]
  %v53 = vld [vmem:[%s1 + $0x48] sm:$0xf]
  %v54 = vld [vmem:[%s1 + $0x4c] sm:$0xf]
  %v55 = vld [vmem:[%s1 + $0x50] sm:$0xf]
  %v56 = vld [vmem:[%s1 + $0x54] sm:$0xf]
  %v57 = vld [vmem:[%s1 + $0x58] sm:$0xf]
  %v58 = vld [vmem:[%s1 + $0x5c] sm:$0xf]
  %v59 = vld [vmem:[%s1 + $0x60] sm:$0xf]
  %v60 = vld [vmem:[%s1 + $0x64] sm:$0xf]
  %v61 = vld [vmem:[%s1 + $0x68] sm:$0xf]
  %v62 = vld [vmem:[%s1 + $0x6c] sm:$0xf]
  %v63 = vld [vmem:[%s1 + $0x70] sm:$0xf]
  %v64 = vld [vmem:[%s1 + $0x74] sm:$0xf]
  %v65 = vld [vmem:[%s1 + $0x78] sm:$0xf]
  %v66 = vld [vmem:[%s1 + $0x7c] sm:$0xf]
  %v67 = vld [vmem:[%s1 + $0x80] sm:$0xf]
  %v68 = vld [vmem:[%s1 + $0x84] sm:$0xf]
  %v69 = vld [vmem:[%s1 + $0x88] sm:$0xf]
  %v70 = vld [vmem:[%s1 + $0x8c] sm:$0xf]
  %v71 = vld [vmem:[%s1 + $0x90] sm:$0xf]
  %v72 = vld [vmem:[%s1 + $0x94] sm:$0xf]
  %v73 = vld [vmem:[%s1 + $0x98] sm:$0xf]
  %v74 = vld [vmem:[%s1 + $0x9c] sm:$0xf]
  %v75 = vld [vmem:[%s1 + $0xa0] sm:$0xf]
  %v76 = vld [vmem:[%s1 + $0xa4] sm:$0xf]
  %v77 = vld [vmem:[%s1 + $0xa8] sm:$0xf]
  %v78 = vld [vmem:[%s1 + $0xac] sm:$0xf]
  %v79 = vld [vmem:[%s1 + $0xb0] sm:$0xf]
  %v80 = vld [vmem:[%s1 + $0xb4] sm:$0xf]
  %v81 = vld [vmem:[%s1 + $0xb8] sm:$0xf]
  %v82 = vld [vmem:[%s1 + $0xbc] sm:$0xf]
  %v83 = vld [vmem:[%s1 + $0xc0] sm:$0xf]
  %v84 = vld [vmem:[%s1 + $0xc4] sm:$0xf]
  %v85 = vld [vmem:[%s1 + $0xc8] sm:$0xf]
  %v86 = vld [vmem:[%s1 + $0xcc] sm:$0xf]
  %v87 = vld [vmem:[%s1 + $0xd0] sm:$0xf]
  %v88 = vld [vmem:[%s1 + $0xd4] sm:$0xf]
  %v89 = vld [vmem:[%s1 + $0xd8] sm:$0xf]
  %v90 = vld [vmem:[%s1 + $0xdc] sm:$0xf]
  %v91 = vld [vmem:[%s1 + $0xe0] sm:$0xf]
  %v92 = vld [vmem:[%s1 + $0xe4] sm:$0xf]
  %v93 = vld [vmem:[%s1 + $0xe8] sm:$0xf]
  %v94 = vld [vmem:[%s1 + $0xec] sm:$0xf]
  %v95 = vld [vmem:[%s1 + $0xf0] sm:$0xf]
  %v96 = vld [vmem:[%s1 + $0xf4] sm:$0xf]
  %v97 = vld [vmem:[%s1 + $0xf8] sm:$0xf]
  %v98 = vld [vmem:[%s1 + $0xfc] sm:$0xf]
  %v99 = vld [vmem:[%s1 + $0x100] sm:$0xf]
  %v100 = vld [vmem:[%s1 + $0x104] sm:$0xf]
  %v101 = vld [vmem:[%s1 + $0x108] sm:$0xf]
  %v102 = vld [vmem:[%s1 + $0x10c] sm:$0xf]
  %v103 = vld [vmem:[%s1 + $0x110] sm:$0xf]
  %v104 = vld [vmem:[%s1 + $0x114] sm:$0xf]
  %v105 = vld [vmem:[%s1 + $0x118] sm:$0xf]
  %v106 = vld [vmem:[%s1 + $0x11c] sm:$0xf]
  %v107 = vld [vmem:[%s1 + $0x120] sm:$0xf]
  %v108 = vld [vmem:[%s1 + $0x124] sm:$0xf]
  %v109 = vld [vmem:[%s1 + $0x128] sm:$0xf]
  %v110 = vld [vmem:[%s1 + $0x12c] sm:$0xf]
  %v111 = vld [vmem:[%s1 + $0x130] sm:$0xf]
  %v112 = vld [vmem:[%s1 + $0x134] sm:$0xf]
  %v113 = vld [vmem:[%s1 + $0x138] sm:$0xf]
  %v114 = vld [vmem:[%s1 + $0x13c] sm:$0xf]
  %v115 = vld [vmem:[%s1 + $0x140] sm:$0xf]
  %v116 = vld [vmem:[%s1 + $0x144] sm:$0xf]
  %v117 = vld [vmem:[%s1 + $0x148] sm:$0xf]
  %v118 = vld [vmem:[%s1 + $0x14c] sm:$0xf]
  %v119 = vld [vmem:[%s1 + $0x150] sm:$0xf]
  %v120 = vld [vmem:[%s1 + $0x154] sm:$0xf]
  %v121 = vld [vmem:[%s1 + $0x158] sm:$0xf]
  %v122 = vld [vmem:[%s1 + $0x15c] sm:$0xf]
  %v123 = vld [vmem:[%s1 + $0x160] sm:$0xf]
  %v124 = vld [vmem:[%s1 + $0x164] sm:$0xf]
  %v125 = vld [vmem:[%s1 + $0x168] sm:$0xf]
  %v126 = vld [vmem:[%s1 + $0x16c] sm:$0xf]
  %v127 = vld [vmem:[%s1 + $0x170] sm:$0xf]
  %v128 = vld [vmem:[%s1 + $0x174] sm:$0xf]
  %v129 = vld [vmem:[%s1 + $0x178] sm:$0xf]
  %v130 = vld [vmem:[%s1 + $0x17c] sm:$0xf]
  %v131 = vld [vmem:[%s1 + $0x180] sm:$0xf]
  %v132 = vld [vmem:[%s1 + $0x184] sm:$0xf]
  %v133 = vld [vmem:[%s1 + $0x188] sm:$0xf]
  %v134 = vld [vmem:[%s1 + $0x18c] sm:$0xf]
  %v135 = vld [vmem:[%s1 + $0x190] sm:$0xf]
  %v136 = vld [vmem:[%s1 + $0x194] sm:$0xf]
  %v137 = vld [vmem:[%s1 + $0x198] sm:$0xf]
  %v138 = vld [vmem:[%s1 + $0x19c] sm:$0xf]
  %v139 = vld [vmem:[%s1 + $0x1a0] sm:$0xf]
  %v140 = vld [vmem:[%s1 + $0x1a4] sm:$0xf]
  %v141 = vld [vmem:[%s1 + $0x1a8] sm:$0xf]
  %v142 = vld [vmem:[%s1 + $0x1ac] sm:$0xf]
  %v143 = vld [vmem:[%s1 + $0x1b0] sm:$0xf]
  %v144 = vld [vmem:[%s1 + $0x1b4] sm:$0xf]
  %v145 = vld [vmem:[%s1 + $0x1b8] sm:$0xf]
  %v146 = vld [vmem:[%s1 + $0x1bc] sm:$0xf]
  %v147 = vld [vmem:[%s1 + $0x1c0] sm:$0xf]
  %v148 = vld [vmem:[%s1 + $0x1c4] sm:$0xf]
  %v149 = vld [vmem:[%s1 + $0x1c8] sm:$0xf]
  %v150 = vld [vmem:[%s1 + $0x1cc] sm:$0xf]
  %v151 = vld [vmem:[%s1 + $0x1d0] sm:$0xf]
  %v152 = vld [vmem:[%s1 + $0x1d4] sm:$0xf]
  %v153 = vld [vmem:[%s1 + $0x1d8] sm:$0xf]
  %v154 = vld [vmem:[%s1 + $0x1dc] sm:$0xf]
  %v155 = vld [vmem:[%s1 + $0x1e0] sm:$0xf]
  %v156 = vld [vmem:[%s1 + $0x1e4] sm:$0xf]
  %v157 = vld [vmem:[%s1 + $0x1e8] sm:$0xf]
  %v158 = vld [vmem:[%s1 + $0x1ec] sm:$0xf]
  %v159 = vld [vmem:[%s1 + $0x1f0] sm:$0xf]
  %v160 = vld [vmem:[%s1 + $0x1f4] sm:$0xf]
  %v161 = vld [vmem:[%s1 + $0x1f8] sm:$0xf]
  %v162 = vld [vmem:[%s1 + $0x1fc] sm:$0xf]
  %v163 = vld [vmem:[%s1 + $0x200] sm:$0xf]
  %v164 = vld [vmem:[%s1 + $0x204] sm:$0xf]
  %v165 = vld [vmem:[%s1 + $0x208] sm:$0xf]
  %v166 = vld [vmem:[%s1 + $0x20c] sm:$0xf]
  %v167 = vld [vmem:[%s1 + $0x210] sm:$0xf]
  %v168 = vld [vmem:[%s1 + $0x214] sm:$0xf]
  %v169 = vld [vmem:[%s1 + $0x218] sm:$0xf]
  %v170 = vld [vmem:[%s1 + $0x21c] sm:$0xf]
  %v171 = vld [vmem:[%s1 + $0x220] sm:$0xf]
  %v172 = vld [vmem:[%s1 + $0x224] sm:$0xf]
  %v173 = vld [vmem:[%s1 + $0x228] sm:$0xf]
  %v174 = vld [vmem:[%s1 + $0x22c] sm:$0xf]
  %v175 = vld [vmem:[%s1 + $0x230] sm:$0xf]
  %v176 = vld [vmem:[%s1 + $0x234] sm:$0xf]
  %v177 = vld [vmem:[%s1 + $0x238] sm:$0xf]
  %v178 = vld [vmem:[%s1 + $0x23c] sm:$0xf]
  %v179 = vld [vmem:[%s2] sm:$0x1]
  %v181 = vlaneseq
  %v182 = vshrl.u32 %v181, 7
  %v183 = vsub.s32 0, %v182
  %v184 = vrot.slane %v179, %v183
  %v206 = vunpack.c.l.b16 %v15
  %v207 = vunpack.c.h.b16 %v15
  %v208 = vunpack.c.l.b16 %v16
  %v209 = vunpack.c.h.b16 %v16
  %v210 = vunpack.c.l.b16 %v17
  %v211 = vunpack.c.h.b16 %v17
  %v212 = vunpack.c.l.b16 %v18
  %v213 = vunpack.c.h.b16 %v18
  %v214 = vunpack.c.l.b16 %v19
  %v215 = vunpack.c.l.b16 %v20
  %v216 = vunpack.c.h.b16 %v20
  %v217 = vunpack.c.l.b16 %v21
  %v218 = vunpack.c.h.b16 %v21
  %v219 = vunpack.c.l.b16 %v22
  %v220 = vunpack.c.h.b16 %v22
  %v221 = vunpack.c.l.b16 %v23
  %v222 = vunpack.c.h.b16 %v23
  %v223 = vunpack.c.l.b16 %v24
  %v224 = vunpack.c.l.b16 %v25
  %v225 = vunpack.c.h.b16 %v25
  %v226 = vunpack.c.l.b16 %v26
  %v227 = vunpack.c.h.b16 %v26
  %v228 = vunpack.c.l.b16 %v27
  %v229 = vunpack.c.h.b16 %v27
  %v230 = vunpack.c.l.b16 %v28
  %v231 = vunpack.c.h.b16 %v28
  %v232 = vunpack.c.l.b16 %v29
  %v233 = vunpack.c.l.b16 %v30
  %v234 = vunpack.c.h.b16 %v30
  %v235 = vunpack.c.l.b16 %v31
  %v236 = vunpack.c.h.b16 %v31
  %v237 = vunpack.c.l.b16 %v32
  %v238 = vunpack.c.h.b16 %v32
  %v239 = vunpack.c.l.b16 %v33
  %v240 = vunpack.c.h.b16 %v33
  %v241 = vunpack.c.l.b16 %v34
  %v242 = vpack.c.b16 %v215, %v206
  %v243 = vpack.c.b16 %v216, %v207
  %v244 = vpack.c.b16 %v217, %v208
  %v245 = vpack.c.b16 %v218, %v209
  %v246 = vpack.c.b16 %v219, %v210
  %v247 = vpack.c.b16 %v220, %v211
  %v248 = vpack.c.b16 %v221, %v212
  %v249 = vpack.c.b16 %v222, %v213
  %v250 = vpack.c.b16 %v223, %v214
  %v251 = vpack.c.b16 %v233, %v224
  %v252 = vpack.c.b16 %v234, %v225
  %v253 = vpack.c.b16 %v235, %v226
  %v254 = vpack.c.b16 %v236, %v227
  %v255 = vpack.c.b16 %v237, %v228
  %v256 = vpack.c.b16 %v238, %v229
  %v257 = vpack.c.b16 %v239, %v230
  %v258 = vpack.c.b16 %v240, %v231
  %v259 = vpack.c.b16 %v241, %v232
  %v422 = vunpack.c.l.b16 %v35
  %v423 = vunpack.c.l.b16 %v36
  %v424 = vunpack.c.l.b16 %v37
  %v425 = vunpack.c.l.b16 %v38
  %v426 = vunpack.c.l.b16 %v39
  %v427 = vunpack.c.l.b16 %v40
  %v428 = vunpack.c.l.b16 %v41
  %v429 = vunpack.c.l.b16 %v42
  %v430 = vunpack.c.l.b16 %v43
  %v431 = vunpack.c.l.b16 %v44
  %v432 = vunpack.c.l.b16 %v45
  %v433 = vunpack.c.l.b16 %v46
  %v434 = vunpack.c.l.b16 %v47
  %v435 = vunpack.c.l.b16 %v48
  %v436 = vunpack.c.l.b16 %v49
  %v437 = vunpack.c.l.b16 %v50
  %v438 = vunpack.c.l.b16 %v51
  %v439 = vunpack.c.l.b16 %v52
  %v440 = vunpack.c.l.b16 %v53
  %v441 = vunpack.c.l.b16 %v54
  %v442 = vunpack.c.l.b16 %v55
  %v443 = vunpack.c.l.b16 %v56
  %v444 = vunpack.c.l.b16 %v57
  %v445 = vunpack.c.l.b16 %v58
  %v446 = vunpack.c.l.b16 %v59
  %v447 = vunpack.c.l.b16 %v60
  %v448 = vunpack.c.l.b16 %v61
  %v449 = vunpack.c.l.b16 %v62
  %v450 = vunpack.c.l.b16 %v63
  %v451 = vunpack.c.l.b16 %v64
  %v452 = vunpack.c.l.b16 %v65
  %v453 = vunpack.c.l.b16 %v66
  %v454 = vunpack.c.l.b16 %v67
  %v455 = vunpack.c.l.b16 %v68
  %v456 = vunpack.c.l.b16 %v69
  %v457 = vunpack.c.l.b16 %v70
  %v458 = vunpack.c.l.b16 %v71
  %v459 = vunpack.c.l.b16 %v72
  %v460 = vunpack.c.l.b16 %v73
  %v461 = vunpack.c.l.b16 %v74
  %v462 = vunpack.c.l.b16 %v75
  %v463 = vunpack.c.l.b16 %v76
  %v464 = vunpack.c.l.b16 %v77
  %v465 = vunpack.c.l.b16 %v78
  %v466 = vunpack.c.l.b16 %v79
  %v467 = vunpack.c.l.b16 %v80
  %v468 = vunpack.c.l.b16 %v81
  %v469 = vunpack.c.l.b16 %v82
  %v470 = vunpack.c.l.b16 %v83
  %v471 = vunpack.c.l.b16 %v84
  %v472 = vunpack.c.l.b16 %v85
  %v473 = vunpack.c.l.b16 %v86
  %v474 = vunpack.c.l.b16 %v87
  %v475 = vunpack.c.l.b16 %v88
  %v476 = vunpack.c.l.b16 %v89
  %v477 = vunpack.c.l.b16 %v90
  %v478 = vunpack.c.l.b16 %v91
  %v479 = vunpack.c.l.b16 %v92
  %v480 = vunpack.c.l.b16 %v93
  %v481 = vunpack.c.l.b16 %v94
  %v482 = vunpack.c.l.b16 %v95
  %v483 = vunpack.c.l.b16 %v96
  %v484 = vunpack.c.l.b16 %v97
  %v485 = vunpack.c.l.b16 %v98
  %v486 = vunpack.c.l.b16 %v99
  %v487 = vunpack.c.l.b16 %v100
  %v488 = vunpack.c.l.b16 %v101
  %v489 = vunpack.c.l.b16 %v102
  %v490 = vunpack.c.l.b16 %v103
  %v491 = vunpack.c.l.b16 %v104
  %v492 = vunpack.c.l.b16 %v105
  %v493 = vunpack.c.l.b16 %v106
  %v494 = vunpack.c.l.b16 %v107
  %v495 = vunpack.c.l.b16 %v108
  %v496 = vunpack.c.l.b16 %v109
  %v497 = vunpack.c.l.b16 %v110
  %v498 = vunpack.c.l.b16 %v111
  %v499 = vunpack.c.l.b16 %v112
  %v500 = vunpack.c.l.b16 %v113
  %v501 = vunpack.c.l.b16 %v114
  %v502 = vunpack.c.l.b16 %v115
  %v503 = vunpack.c.l.b16 %v116
  %v504 = vunpack.c.l.b16 %v117
  %v505 = vunpack.c.l.b16 %v118
  %v506 = vunpack.c.l.b16 %v119
  %v507 = vunpack.c.l.b16 %v120
  %v508 = vunpack.c.l.b16 %v121
  %v509 = vunpack.c.l.b16 %v122
  %v510 = vunpack.c.l.b16 %v123
  %v511 = vunpack.c.l.b16 %v124
  %v512 = vunpack.c.l.b16 %v125
  %v513 = vunpack.c.l.b16 %v126
  %v514 = vunpack.c.l.b16 %v127
  %v515 = vunpack.c.l.b16 %v128
  %v516 = vunpack.c.l.b16 %v129
  %v517 = vunpack.c.l.b16 %v130
  %v518 = vunpack.c.l.b16 %v131
  %v519 = vunpack.c.l.b16 %v132
  %v520 = vunpack.c.l.b16 %v133
  %v521 = vunpack.c.l.b16 %v134
  %v522 = vunpack.c.l.b16 %v135
  %v523 = vunpack.c.l.b16 %v136
  %v524 = vunpack.c.l.b16 %v137
  %v525 = vunpack.c.l.b16 %v138
  %v526 = vunpack.c.l.b16 %v139
  %v527 = vunpack.c.l.b16 %v140
  %v528 = vunpack.c.l.b16 %v141
  %v529 = vunpack.c.l.b16 %v142
  %v530 = vunpack.c.l.b16 %v143
  %v531 = vunpack.c.l.b16 %v144
  %v532 = vunpack.c.l.b16 %v145
  %v533 = vunpack.c.l.b16 %v146
  %v534 = vunpack.c.l.b16 %v147
  %v535 = vunpack.c.l.b16 %v148
  %v536 = vunpack.c.l.b16 %v149
  %v537 = vunpack.c.l.b16 %v150
  %v538 = vunpack.c.l.b16 %v151
  %v539 = vunpack.c.l.b16 %v152
  %v540 = vunpack.c.l.b16 %v153
  %v541 = vunpack.c.l.b16 %v154
  %v542 = vunpack.c.l.b16 %v155
  %v543 = vunpack.c.l.b16 %v156
  %v544 = vunpack.c.l.b16 %v157
  %v545 = vunpack.c.l.b16 %v158
  %v546 = vunpack.c.l.b16 %v159
  %v547 = vunpack.c.l.b16 %v160
  %v548 = vunpack.c.l.b16 %v161
  %v549 = vunpack.c.l.b16 %v162
  %v550 = vunpack.c.l.b16 %v163
  %v551 = vunpack.c.l.b16 %v164
  %v552 = vunpack.c.l.b16 %v165
  %v553 = vunpack.c.l.b16 %v166
  %v554 = vunpack.c.l.b16 %v167
  %v555 = vunpack.c.l.b16 %v168
  %v556 = vunpack.c.l.b16 %v169
  %v557 = vunpack.c.l.b16 %v170
  %v558 = vunpack.c.l.b16 %v171
  %v559 = vunpack.c.l.b16 %v172
  %v560 = vunpack.c.l.b16 %v173
  %v561 = vunpack.c.l.b16 %v174
  %v562 = vunpack.c.l.b16 %v175
  %v563 = vunpack.c.l.b16 %v176
  %v564 = vunpack.c.l.b16 %v177
  %v565 = vunpack.c.l.b16 %v178
  %v566 = vpack.c.b16 %v423, %v422
  %v567 = vpack.c.b16 %v425, %v424
  %v568 = vpack.c.b16 %v427, %v426
  %v569 = vpack.c.b16 %v429, %v428
  %v570 = vpack.c.b16 %v431, %v430
  %v571 = vpack.c.b16 %v433, %v432
  %v572 = vpack.c.b16 %v435, %v434
  %v573 = vpack.c.b16 %v437, %v436
  %v574 = vpack.c.b16 %v439, %v438
  %v575 = vpack.c.b16 %v441, %v440
  %v576 = vpack.c.b16 %v443, %v442
  %v577 = vpack.c.b16 %v445, %v444
  %v578 = vpack.c.b16 %v447, %v446
  %v579 = vpack.c.b16 %v449, %v448
  %v580 = vpack.c.b16 %v451, %v450
  %v581 = vpack.c.b16 %v453, %v452
  %v582 = vpack.c.b16 %v455, %v454
  %v583 = vpack.c.b16 %v457, %v456
  %v584 = vpack.c.b16 %v459, %v458
  %v585 = vpack.c.b16 %v461, %v460
  %v586 = vpack.c.b16 %v463, %v462
  %v587 = vpack.c.b16 %v465, %v464
  %v588 = vpack.c.b16 %v467, %v466
  %v589 = vpack.c.b16 %v469, %v468
  %v590 = vpack.c.b16 %v471, %v470
  %v591 = vpack.c.b16 %v473, %v472
  %v592 = vpack.c.b16 %v475, %v474
  %v593 = vpack.c.b16 %v477, %v476
  %v594 = vpack.c.b16 %v479, %v478
  %v595 = vpack.c.b16 %v481, %v480
  %v596 = vpack.c.b16 %v483, %v482
  %v597 = vpack.c.b16 %v485, %v484
  %v598 = vpack.c.b16 %v487, %v486
  %v599 = vpack.c.b16 %v489, %v488
  %v600 = vpack.c.b16 %v491, %v490
  %v601 = vpack.c.b16 %v493, %v492
  %v602 = vpack.c.b16 %v495, %v494
  %v603 = vpack.c.b16 %v497, %v496
  %v604 = vpack.c.b16 %v499, %v498
  %v605 = vpack.c.b16 %v501, %v500
  %v606 = vpack.c.b16 %v503, %v502
  %v607 = vpack.c.b16 %v505, %v504
  %v608 = vpack.c.b16 %v507, %v506
  %v609 = vpack.c.b16 %v509, %v508
  %v610 = vpack.c.b16 %v511, %v510
  %v611 = vpack.c.b16 %v513, %v512
  %v612 = vpack.c.b16 %v515, %v514
  %v613 = vpack.c.b16 %v517, %v516
  %v614 = vpack.c.b16 %v519, %v518
  %v615 = vpack.c.b16 %v521, %v520
  %v616 = vpack.c.b16 %v523, %v522
  %v617 = vpack.c.b16 %v525, %v524
  %v618 = vpack.c.b16 %v527, %v526
  %v619 = vpack.c.b16 %v529, %v528
  %v620 = vpack.c.b16 %v531, %v530
  %v621 = vpack.c.b16 %v533, %v532
  %v622 = vpack.c.b16 %v535, %v534
  %v623 = vpack.c.b16 %v537, %v536
  %v624 = vpack.c.b16 %v539, %v538
  %v625 = vpack.c.b16 %v541, %v540
  %v626 = vpack.c.b16 %v543, %v542
  %v627 = vpack.c.b16 %v545, %v544
  %v628 = vpack.c.b16 %v547, %v546
  %v629 = vpack.c.b16 %v549, %v548
  %v630 = vpack.c.b16 %v551, %v550
  %v631 = vpack.c.b16 %v553, %v552
  %v632 = vpack.c.b16 %v555, %v554
  %v633 = vpack.c.b16 %v557, %v556
  %v634 = vpack.c.b16 %v559, %v558
  %v635 = vpack.c.b16 %v561, %v560
  %v636 = vpack.c.b16 %v563, %v562
  %v637 = vpack.c.b16 %v565, %v564
  %710 = vmatprep.subr.bf16.mxu0 0
  %711 = vmatpush1.bf16.msra.mxu0 %v566
  %712 = vmatprep.subr.bf16.mxu0 0
  %713 = vmatpush1.bf16.msra.mxu0 %v567
  %714 = vmatprep.subr.bf16.mxu0 0
  %715 = vmatpush1.bf16.msra.mxu0 %v568
  %716 = vmatprep.subr.bf16.mxu0 0
  %717 = vmatpush1.bf16.msra.mxu0 %v569
  %718 = vmatprep.subr.bf16.mxu0 0
  %719 = vmatpush1.bf16.msra.mxu0 %v570
  %720 = vmatprep.subr.bf16.mxu0 0
  %721 = vmatpush1.bf16.msra.mxu0 %v571
  %722 = vmatprep.subr.bf16.mxu0 0
  %723 = vmatpush1.bf16.msra.mxu0 %v572
  %724 = vmatprep.subr.bf16.mxu0 0
  %725 = vmatpush1.bf16.msra.mxu0 %v573
  %726 = vmatprep.subr.bf16.mxu0 0
  %727 = vmatpush1.bf16.msra.mxu0 %v574
  %728 = vmatprep.subr.bf16.mxu0 0
  %729 = vmatpush1.bf16.msra.mxu0 %v575
  %730 = vmatprep.subr.bf16.mxu0 0
  %731 = vmatpush1.bf16.msra.mxu0 %v576
  %732 = vmatprep.subr.bf16.mxu0 0
  %733 = vmatpush1.bf16.msra.mxu0 %v577
  %734 = vmatprep.subr.bf16.mxu0 0
  %735 = vmatpush1.bf16.msra.mxu0 %v578
  %736 = vmatprep.subr.bf16.mxu0 0
  %737 = vmatpush1.bf16.msra.mxu0 %v579
  %738 = vmatprep.subr.bf16.mxu0 0
  %739 = vmatpush1.bf16.msra.mxu0 %v580
  %740 = vmatprep.subr.bf16.mxu0 0
  %741 = vmatpush1.bf16.msra.mxu0 %v581
  %742 = vmatprep.mubr.bf16.mxu0 %v243
  %743 = vmatmul.mubr.bf16.gmra.mrb[0].mxu0 %v242
  %v744 = vpop.f32.mrb[0].mxu0
  %v745 = vadd.f32 %v184, %v744
  %v746 = vpop.f32.mrb[0].mxu0
  %v747 = vpop.f32.mrb[0].mxu0
  %v748 = vadd.f32 %v184, %v747
  %v749 = vpop.f32.mrb[0].mxu0
  %750 = vmatprep.mubr.bf16.mxu0 %v252
  %751 = vmatmul.mubr.bf16.gmra.mrb[0].mxu0 %v251
  %v752 = vpop.f32.mrb[0].mxu0
  %v753 = vadd.f32 %v184, %v752
  %v754 = vpop.f32.mrb[0].mxu0
  %v755 = vpop.f32.mrb[0].mxu0
  %v756 = vadd.f32 %v184, %v755
  %v757 = vpop.f32.mrb[0].mxu0
  %758 = vdwg.mxu0
  %759 = vmatprep.subr.bf16.mxu0 0
  %760 = vmatpush1.bf16.msra.mxu0 %v582
  %761 = vmatprep.subr.bf16.mxu0 0
  %762 = vmatpush1.bf16.msra.mxu0 %v583
  %763 = vmatprep.subr.bf16.mxu0 0
  %764 = vmatpush1.bf16.msra.mxu0 %v584
  %765 = vmatprep.subr.bf16.mxu0 0
  %766 = vmatpush1.bf16.msra.mxu0 %v585
  %767 = vmatprep.subr.bf16.mxu0 0
  %768 = vmatpush1.bf16.msra.mxu0 %v586
  %769 = vmatprep.subr.bf16.mxu0 0
  %770 = vmatpush1.bf16.msra.mxu0 %v587
  %771 = vmatprep.subr.bf16.mxu0 0
  %772 = vmatpush1.bf16.msra.mxu0 %v588
  %773 = vmatprep.subr.bf16.mxu0 0
  %774 = vmatpush1.bf16.msra.mxu0 %v589
  %775 = vmatprep.subr.bf16.mxu0 0
  %776 = vmatpush1.bf16.msra.mxu0 %v590
  %777 = vmatprep.subr.bf16.mxu0 0
  %778 = vmatpush1.bf16.msra.mxu0 %v591
  %779 = vmatprep.subr.bf16.mxu0 0
  %780 = vmatpush1.bf16.msra.mxu0 %v592
  %781 = vmatprep.subr.bf16.mxu0 0
  %782 = vmatpush1.bf16.msra.mxu0 %v593
  %783 = vmatprep.subr.bf16.mxu0 0
  %784 = vmatpush1.bf16.msra.mxu0 %v594
  %785 = vmatprep.subr.bf16.mxu0 0
  %786 = vmatpush1.bf16.msra.mxu0 %v595
  %787 = vmatprep.subr.bf16.mxu0 0
  %788 = vmatpush1.bf16.msra.mxu0 %v596
  %789 = vmatprep.subr.bf16.mxu0 0
  %790 = vmatpush1.bf16.msra.mxu0 %v597
  %791 = vmatprep.mubr.bf16.mxu0 %v245
  %792 = vmatmul.mubr.bf16.gmra.mrb[0].mxu0 %v244
  %v793 = vpop.f32.mrb[0].mxu0
  %v794 = vadd.f32 %v745, %v793
  %v795 = vpop.f32.mrb[0].mxu0
  %v796 = vpop.f32.mrb[0].mxu0
  %v797 = vadd.f32 %v748, %v796
  %v798 = vpop.f32.mrb[0].mxu0
  %799 = vmatprep.mubr.bf16.mxu0 %v254
  %800 = vmatmul.mubr.bf16.gmra.mrb[0].mxu0 %v253
  %v801 = vpop.f32.mrb[0].mxu0
  %v802 = vadd.f32 %v753, %v801
  %v803 = vpop.f32.mrb[0].mxu0
  %v804 = vpop.f32.mrb[0].mxu0
  %v805 = vadd.f32 %v756, %v804
  %v806 = vpop.f32.mrb[0].mxu0
  %807 = vdwg.mxu0
  %808 = vmatprep.subr.bf16.mxu0 0
  %809 = vmatpush1.bf16.msra.mxu0 %v598
  %810 = vmatprep.subr.bf16.mxu0 0
  %811 = vmatpush1.bf16.msra.mxu0 %v599
  %812 = vmatprep.subr.bf16.mxu0 0
  %813 = vmatpush1.bf16.msra.mxu0 %v600
  %814 = vmatprep.subr.bf16.mxu0 0
  %815 = vmatpush1.bf16.msra.mxu0 %v601
  %816 = vmatprep.subr.bf16.mxu0 0
  %817 = vmatpush1.bf16.msra.mxu0 %v602
  %818 = vmatprep.subr.bf16.mxu0 0
  %819 = vmatpush1.bf16.msra.mxu0 %v603
  %820 = vmatprep.subr.bf16.mxu0 0
  %821 = vmatpush1.bf16.msra.mxu0 %v604
  %822 = vmatprep.subr.bf16.mxu0 0
  %823 = vmatpush1.bf16.msra.mxu0 %v605
  %824 = vmatprep.subr.bf16.mxu0 0
  %825 = vmatpush1.bf16.msra.mxu0 %v606
  %826 = vmatprep.subr.bf16.mxu0 0
  %827 = vmatpush1.bf16.msra.mxu0 %v607
  %828 = vmatprep.subr.bf16.mxu0 0
  %829 = vmatpush1.bf16.msra.mxu0 %v608
  %830 = vmatprep.subr.bf16.mxu0 0
  %831 = vmatpush1.bf16.msra.mxu0 %v609
  %832 = vmatprep.subr.bf16.mxu0 0
  %833 = vmatpush1.bf16.msra.mxu0 %v610
  %834 = vmatprep.subr.bf16.mxu0 0
  %835 = vmatpush1.bf16.msra.mxu0 %v611
  %836 = vmatprep.subr.bf16.mxu0 0
  %837 = vmatpush1.bf16.msra.mxu0 %v612
  %838 = vmatprep.subr.bf16.mxu0 0
  %839 = vmatpush1.bf16.msra.mxu0 %v613
  %840 = vmatprep.mubr.bf16.mxu0 %v247
  %841 = vmatmul.mubr.bf16.gmra.mrb[0].mxu0 %v246
  %v842 = vpop.f32.mrb[0].mxu0
  %v843 = vadd.f32 %v794, %v842
  %v844 = vpop.f32.mrb[0].mxu0
  %v845 = vpop.f32.mrb[0].mxu0
  %v846 = vadd.f32 %v797, %v845
  %v847 = vpop.f32.mrb[0].mxu0
  %848 = vmatprep.mubr.bf16.mxu0 %v256
  %849 = vmatmul.mubr.bf16.gmra.mrb[0].mxu0 %v255
  %v850 = vpop.f32.mrb[0].mxu0
  %v851 = vadd.f32 %v802, %v850
  %v852 = vpop.f32.mrb[0].mxu0
  %v853 = vpop.f32.mrb[0].mxu0
  %v854 = vadd.f32 %v805, %v853
  %v855 = vpop.f32.mrb[0].mxu0
  %856 = vdwg.mxu0
  %857 = vmatprep.subr.bf16.mxu0 0
  %858 = vmatpush1.bf16.msra.mxu0 %v614
  %859 = vmatprep.subr.bf16.mxu0 0
  %860 = vmatpush1.bf16.msra.mxu0 %v615
  %861 = vmatprep.subr.bf16.mxu0 0
  %862 = vmatpush1.bf16.msra.mxu0 %v616
  %863 = vmatprep.subr.bf16.mxu0 0
  %864 = vmatpush1.bf16.msra.mxu0 %v617
  %865 = vmatprep.subr.bf16.mxu0 0
  %866 = vmatpush1.bf16.msra.mxu0 %v618
  %867 = vmatprep.subr.bf16.mxu0 0
  %868 = vmatpush1.bf16.msra.mxu0 %v619
  %869 = vmatprep.subr.bf16.mxu0 0
  %870 = vmatpush1.bf16.msra.mxu0 %v620
  %871 = vmatprep.subr.bf16.mxu0 0
  %872 = vmatpush1.bf16.msra.mxu0 %v621
  %873 = vmatprep.subr.bf16.mxu0 0
  %874 = vmatpush1.bf16.msra.mxu0 %v622
  %875 = vmatprep.subr.bf16.mxu0 0
  %876 = vmatpush1.bf16.msra.mxu0 %v623
  %877 = vmatprep.subr.bf16.mxu0 0
  %878 = vmatpush1.bf16.msra.mxu0 %v624
  %879 = vmatprep.subr.bf16.mxu0 0
  %880 = vmatpush1.bf16.msra.mxu0 %v625
  %881 = vmatprep.subr.bf16.mxu0 0
  %882 = vmatpush1.bf16.msra.mxu0 %v626
  %883 = vmatprep.subr.bf16.mxu0 0
  %884 = vmatpush1.bf16.msra.mxu0 %v627
  %885 = vmatprep.subr.bf16.mxu0 0
  %886 = vmatpush1.bf16.msra.mxu0 %v628
  %887 = vmatprep.subr.bf16.mxu0 0
  %888 = vmatpush1.bf16.msra.mxu0 %v629
  %889 = vmatprep.mubr.bf16.mxu0 %v249
  %890 = vmatmul.mubr.bf16.gmra.mrb[0].mxu0 %v248
  %v891 = vpop.f32.mrb[0].mxu0
  %v892 = vadd.f32 %v843, %v891
  %v893 = vpop.f32.mrb[0].mxu0
  %v894 = vpop.f32.mrb[0].mxu0
  %v895 = vadd.f32 %v846, %v894
  %v896 = vpop.f32.mrb[0].mxu0
  %897 = vmatprep.mubr.bf16.mxu0 %v258
  %898 = vmatmul.mubr.bf16.gmra.mrb[0].mxu0 %v257
  %v899 = vpop.f32.mrb[0].mxu0
  %v900 = vadd.f32 %v851, %v899
  %v901 = vpop.f32.mrb[0].mxu0
  %v902 = vpop.f32.mrb[0].mxu0
  %v903 = vadd.f32 %v854, %v902
  %v904 = vpop.f32.mrb[0].mxu0
  %905 = vdwg.mxu0
  %906 = vmatprep.subr.bf16.mxu0 0
  %907 = vmatpush1.bf16.msra.mxu0 %v630
  %908 = vmatprep.subr.bf16.mxu0 0
  %909 = vmatpush1.bf16.msra.mxu0 %v631
  %910 = vmatprep.subr.bf16.mxu0 0
  %911 = vmatpush1.bf16.msra.mxu0 %v632
  %912 = vmatprep.subr.bf16.mxu0 0
  %913 = vmatpush1.bf16.msra.mxu0 %v633
  %914 = vmatprep.subr.bf16.mxu0 0
  %915 = vmatpush1.bf16.msra.mxu0 %v634
  %916 = vmatprep.subr.bf16.mxu0 0
  %917 = vmatpush1.bf16.msra.mxu0 %v635
  %918 = vmatprep.subr.bf16.mxu0 0
  %919 = vmatpush1.bf16.msra.mxu0 %v636
  %920 = vmatprep.subr.bf16.mxu0 0
  %921 = vmatpush1.bf16.msra.mxu0 %v637
  %922 = vmatprep.subr.bf16.mxu0 0
  %923 = vmatpush1.bf16.msra.mxu0 0
  %924 = vmatprep.subr.bf16.mxu0 0
  %925 = vmatpush1.bf16.msra.mxu0 0
  %926 = vmatprep.subr.bf16.mxu0 0
  %927 = vmatpush1.bf16.msra.mxu0 0
  %928 = vmatprep.subr.bf16.mxu0 0
  %929 = vmatpush1.bf16.msra.mxu0 0
  %930 = vmatprep.subr.bf16.mxu0 0
  %931 = vmatpush1.bf16.msra.mxu0 0
  %932 = vmatprep.subr.bf16.mxu0 0
  %933 = vmatpush1.bf16.msra.mxu0 0
  %934 = vmatprep.subr.bf16.mxu0 0
  %935 = vmatpush1.bf16.msra.mxu0 0
  %936 = vmatprep.subr.bf16.mxu0 0
  %937 = vmatpush1.bf16.msra.mxu0 0
  %938 = vmatprep.mubr.bf16.mxu0 0
  %939 = vmatmul.mubr.bf16.gmra.mrb[0].mxu0 %v250
  %v940 = vpop.f32.mrb[0].mxu0
  %v941 = vadd.f32 %v892, %v940
  %v942 = vpop.f32.mrb[0].mxu0
  %v943 = vpop.f32.mrb[0].mxu0
  %v944 = vadd.f32 %v895, %v943
  %v945 = vpop.f32.mrb[0].mxu0
  %946 = vmatprep.mubr.bf16.mxu0 0
  %947 = vmatmul.mubr.bf16.gmra.mrb[0].mxu0 %v259
  %v948 = vpop.f32.mrb[0].mxu0
  %v949 = vadd.f32 %v900, %v948
  %v950 = vpop.f32.mrb[0].mxu0
  %v951 = vpop.f32.mrb[0].mxu0
  %v952 = vadd.f32 %v903, %v951
  %v953 = vpop.f32.mrb[0].mxu0
  %954 = vdwg.mxu0
  %v955 = vmax.f32 %v941, 0.0
  %v956 = vmax.f32 %v944, 0.0
  %v957 = vmax.f32 %v949, 0.0
  %v958 = vmax.f32 %v952, 0.0
  %v959 = vpack.c.bf16 %v956, %v955
  %v960 = vpack.c.bf16 %v958, %v957
  %v963 = vunpack.c.l.b16 %v959
  %v964 = vunpack.c.h.b16 %v959
  %v965 = vunpack.c.l.b16 %v960
  %v966 = vunpack.c.h.b16 %v960
  %v967 = vpack.c.b16 %v963, %v963
  %v968 = vpack.c.b16 %v964, %v964
  %v969 = vpack.c.b16 %v965, %v965
  %v970 = vpack.c.b16 %v966, %v966
  %975 = vst [vmem:[%s3] sm:$0xf] %v967
  %976 = vst [vmem:[%s3 + $0x4] sm:$0xf] %v968
  %977 = vst [vmem:[%s3 + $0x8] sm:$0xf] %v969
  %978 = vst [vmem:[%s3 + $0xc] sm:$0xf] %v970
  // Predicated region
  $region14: #{_lambda_.25} parent=0 // pred_check
    _
  $region15: #{_lambda_.25} parent=0 // pred_check_branch
    %980 = sbr.rel (0) target = $region17
  $region16: #{_lambda_.25} parent=0 // pred_region
    _
  $region17: #{_lambda_.25} parent=0 // pred_fallthru
    _
  // Predicated region
  $region18: #{_lambda_.25} parent=0 // pred_check
    _
  $region19: #{_lambda_.25} parent=0 // pred_check_branch
    %982 = sbr.rel (0) target = $region21
  $region20: #{_lambda_.25} parent=0 // pred_region
    _
  $region21: #{_lambda_.25} parent=0 // pred_fallthru
    _

// kernel: _lambda_.26
$region0: #{_lambda_.26}
  #allocation0 [shape = 'u32[]', space=smem, size = 0x4, offset = 0x4, fixed_abs, tag = 'smem constant byte address 0x4 - core index']
  #allocation1 [shape = 'u32[144,128]{1,0:T(1,128)}', space=vmem, size = 0x12000, scoped, tag = 'internal scratch']
  %s0 = inlined_call_operand.vmem [shape: bf16[32,128], index: 0, kind: input, shape index: {}]
  %s1 = inlined_call_operand.vmem [shape: bf16[128,512], index: 1, kind: input, shape index: {}]
  %s2 = inlined_call_operand.vmem [shape: f32[1,512], index: 2, kind: input, shape index: {}]
  %s3 = inlined_call_operand.vmem [shape: bf16[32,512], index: 3, kind: input, shape index: {}]
  %s4 = inlined_call_operand.vmem [shape: bf16[32,512], index: 4, kind: output, shape index: {}]
  %s5 = sld [smem:[#allocation0]]
  $region26: #{_lambda_.26} parent=0
    _
  %s7 = ssub.s32 1, %s5
  %s8 = scalar_select 0, %s7, %s5
  // Predicated region
  $region2: #{_lambda_.26} parent=0 // pred_check
    _
  $region3: #{_lambda_.26} parent=0 // pred_check_branch
    %10 = sbr.rel (0) target = $region5
  $region4: #{_lambda_.26} parent=0 // pred_region
    _
  $region5: #{_lambda_.26} parent=0 // pred_fallthru
    _
  // Predicated region
  $region6: #{_lambda_.26} parent=0 // pred_check
    _
  $region7: #{_lambda_.26} parent=0 // pred_check_branch
    %12 = sbr.rel (0) target = $region9
  $region8: #{_lambda_.26} parent=0 // pred_region
    _
  $region9: #{_lambda_.26} parent=0 // pred_fallthru
    _
  // Predicated region
  $region10: #{_lambda_.26} parent=0 // pred_check
    _
  $region11: #{_lambda_.26} parent=0 // pred_check_branch
    %14 = sbr.rel (0) target = $region13
  $region12: #{_lambda_.26} parent=0 // pred_region
    _
  $region13: #{_lambda_.26} parent=0 // pred_fallthru
    _
  // Predicated region
  $region14: #{_lambda_.26} parent=0 // pred_check
    _
  $region15: #{_lambda_.26} parent=0 // pred_check_branch
    %16 = sbr.rel (0) target = $region17
  $region16: #{_lambda_.26} parent=0 // pred_region
    _
  $region17: #{_lambda_.26} parent=0 // pred_fallthru
    _
  %v18 = vld [vmem:[%s0] sm:$0xf]
  %v19 = vld [vmem:[%s0 + $0x4] sm:$0xf]
  %v20 = vld [vmem:[%s0 + $0x8] sm:$0xf]
  %v21 = vld [vmem:[%s0 + $0xc] sm:$0xf]
  %v22 = vld [vmem:[%s1] sm:$0xff]
  %v23 = vld [vmem:[%s1 + $0x8] sm:$0xff]
  %v24 = vld [vmem:[%s1 + $0x10] sm:$0xff]
  %v25 = vld [vmem:[%s1 + $0x18] sm:$0xff]
  %v26 = vld [vmem:[%s1 + $0x20] sm:$0xff]
  %v27 = vld [vmem:[%s1 + $0x28] sm:$0xff]
  %v28 = vld [vmem:[%s1 + $0x30] sm:$0xff]
  %v29 = vld [vmem:[%s1 + $0x38] sm:$0xff]
  %v30 = vld [vmem:[%s1 + $0x40] sm:$0xff]
  %v31 = vld [vmem:[%s1 + $0x48] sm:$0xff]
  %v32 = vld [vmem:[%s1 + $0x50] sm:$0xff]
  %v33 = vld [vmem:[%s1 + $0x58] sm:$0xff]
  %v34 = vld [vmem:[%s1 + $0x60] sm:$0xff]
  %v35 = vld [vmem:[%s1 + $0x68] sm:$0xff]
  %v36 = vld [vmem:[%s1 + $0x70] sm:$0xff]
  %v37 = vld [vmem:[%s1 + $0x78] sm:$0xff]
  %v38 = vld [vmem:[%s1 + $0x80] sm:$0xff]
  %v39 = vld [vmem:[%s1 + $0x88] sm:$0xff]
  %v40 = vld [vmem:[%s1 + $0x90] sm:$0xff]
  %v41 = vld [vmem:[%s1 + $0x98] sm:$0xff]
  %v42 = vld [vmem:[%s1 + $0xa0] sm:$0xff]
  %v43 = vld [vmem:[%s1 + $0xa8] sm:$0xff]
  %v44 = vld [vmem:[%s1 + $0xb0] sm:$0xff]
  %v45 = vld [vmem:[%s1 + $0xb8] sm:$0xff]
  %v46 = vld [vmem:[%s1 + $0xc0] sm:$0xff]
  %v47 = vld [vmem:[%s1 + $0xc8] sm:$0xff]
  %v48 = vld [vmem:[%s1 + $0xd0] sm:$0xff]
  %v49 = vld [vmem:[%s1 + $0xd8] sm:$0xff]
  %v50 = vld [vmem:[%s1 + $0xe0] sm:$0xff]
  %v51 = vld [vmem:[%s1 + $0xe8] sm:$0xff]
  %v52 = vld [vmem:[%s1 + $0xf0] sm:$0xff]
  %v53 = vld [vmem:[%s1 + $0xf8] sm:$0xff]
  %v54 = vld [vmem:[%s2] sm:$0xf]
  %v56 = vlaneseq
  %v57 = vshrl.u32 %v56, 7
  %v58 = vsub.s32 0, %v57
  %v59 = vrot.slane %v54, %v58
  %v60 = vlaneseq
  %v61 = vshrl.u32 %v60, 7
  %v62 = vsub.s32 1, %v61
  %v63 = vrot.slane %v54, %v62
  %v64 = vlaneseq
  %v65 = vshrl.u32 %v64, 7
  %v66 = vsub.s32 2, %v65
  %v67 = vrot.slane %v54, %v66
  %v68 = vlaneseq
  %v69 = vshrl.u32 %v68, 7
  %v70 = vsub.s32 3, %v69
  %v71 = vrot.slane %v54, %v70
  %v80 = vunpack.c.l.b16 %v18
  %v81 = vunpack.c.l.b16 %v19
  %v82 = vunpack.c.l.b16 %v20
  %v83 = vunpack.c.l.b16 %v21
  %v84 = vpack.c.b16 %v81, %v80
  %v85 = vpack.c.b16 %v83, %v82
  %v120 = vunpack.c.l.b16 %v22
  %v121 = vunpack.c.h.b16 %v22
  %v122 = vunpack.c.l.b16 %v23
  %v123 = vunpack.c.h.b16 %v23
  %v124 = vunpack.c.l.b16 %v24
  %v125 = vunpack.c.h.b16 %v24
  %v126 = vunpack.c.l.b16 %v25
  %v127 = vunpack.c.h.b16 %v25
  %v128 = vunpack.c.l.b16 %v26
  %v129 = vunpack.c.h.b16 %v26
  %v130 = vunpack.c.l.b16 %v27
  %v131 = vunpack.c.h.b16 %v27
  %v132 = vunpack.c.l.b16 %v28
  %v133 = vunpack.c.h.b16 %v28
  %v134 = vunpack.c.l.b16 %v29
  %v135 = vunpack.c.h.b16 %v29
  %v136 = vunpack.c.l.b16 %v30
  %v137 = vunpack.c.h.b16 %v30
  %v138 = vunpack.c.l.b16 %v31
  %v139 = vunpack.c.h.b16 %v31
  %v140 = vunpack.c.l.b16 %v32
  %v141 = vunpack.c.h.b16 %v32
  %v142 = vunpack.c.l.b16 %v33
  %v143 = vunpack.c.h.b16 %v33
  %v144 = vunpack.c.l.b16 %v34
  %v145 = vunpack.c.h.b16 %v34
  %v146 = vunpack.c.l.b16 %v35
  %v147 = vunpack.c.h.b16 %v35
  %v148 = vunpack.c.l.b16 %v36
  %v149 = vunpack.c.h.b16 %v36
  %v150 = vunpack.c.l.b16 %v37
  %v151 = vunpack.c.h.b16 %v37
  %v152 = vunpack.c.l.b16 %v38
  %v153 = vunpack.c.h.b16 %v38
  %v154 = vunpack.c.l.b16 %v39
  %v155 = vunpack.c.h.b16 %v39
  %v156 = vunpack.c.l.b16 %v40
  %v157 = vunpack.c.h.b16 %v40
  %v158 = vunpack.c.l.b16 %v41
  %v159 = vunpack.c.h.b16 %v41
  %v160 = vunpack.c.l.b16 %v42
  %v161 = vunpack.c.h.b16 %v42
  %v162 = vunpack.c.l.b16 %v43
  %v163 = vunpack.c.h.b16 %v43
  %v164 = vunpack.c.l.b16 %v44
  %v165 = vunpack.c.h.b16 %v44
  %v166 = vunpack.c.l.b16 %v45
  %v167 = vunpack.c.h.b16 %v45
  %v168 = vunpack.c.l.b16 %v46
  %v169 = vunpack.c.h.b16 %v46
  %v170 = vunpack.c.l.b16 %v47
  %v171 = vunpack.c.h.b16 %v47
  %v172 = vunpack.c.l.b16 %v48
  %v173 = vunpack.c.h.b16 %v48
  %v174 = vunpack.c.l.b16 %v49
  %v175 = vunpack.c.h.b16 %v49
  %v176 = vunpack.c.l.b16 %v50
  %v177 = vunpack.c.h.b16 %v50
  %v178 = vunpack.c.l.b16 %v51
  %v179 = vunpack.c.h.b16 %v51
  %v180 = vunpack.c.l.b16 %v52
  %v181 = vunpack.c.h.b16 %v52
  %v182 = vunpack.c.l.b16 %v53
  %v183 = vunpack.c.h.b16 %v53
  %v184 = vpack.c.b16 %v124, %v120
  %v185 = vpack.c.b16 %v125, %v121
  %v186 = vpack.c.b16 %v126, %v122
  %v187 = vpack.c.b16 %v127, %v123
  %v188 = vpack.c.b16 %v132, %v128
  %v189 = vpack.c.b16 %v133, %v129
  %v190 = vpack.c.b16 %v134, %v130
  %v191 = vpack.c.b16 %v135, %v131
  %v192 = vpack.c.b16 %v140, %v136
  %v193 = vpack.c.b16 %v141, %v137
  %v194 = vpack.c.b16 %v142, %v138
  %v195 = vpack.c.b16 %v143, %v139
  %v196 = vpack.c.b16 %v148, %v144
  %v197 = vpack.c.b16 %v149, %v145
  %v198 = vpack.c.b16 %v150, %v146
  %v199 = vpack.c.b16 %v151, %v147
  %v200 = vpack.c.b16 %v156, %v152
  %v201 = vpack.c.b16 %v157, %v153
  %v202 = vpack.c.b16 %v158, %v154
  %v203 = vpack.c.b16 %v159, %v155
  %v204 = vpack.c.b16 %v164, %v160
  %v205 = vpack.c.b16 %v165, %v161
  %v206 = vpack.c.b16 %v166, %v162
  %v207 = vpack.c.b16 %v167, %v163
  %v208 = vpack.c.b16 %v172, %v168
  %v209 = vpack.c.b16 %v173, %v169
  %v210 = vpack.c.b16 %v174, %v170
  %v211 = vpack.c.b16 %v175, %v171
  %v212 = vpack.c.b16 %v180, %v176
  %v213 = vpack.c.b16 %v181, %v177
  %v214 = vpack.c.b16 %v182, %v178
  %v215 = vpack.c.b16 %v183, %v179
  %248 = vmatprep.subr.bf16.mxu0 %v185
  %249 = vmatpush1.bf16.msra.mxu0 %v184
  %250 = vmatprep.subr.bf16.mxu0 %v189
  %251 = vmatpush1.bf16.msra.mxu0 %v188
  %252 = vmatprep.subr.bf16.mxu0 %v193
  %253 = vmatpush1.bf16.msra.mxu0 %v192
  %254 = vmatprep.subr.bf16.mxu0 %v197
  %255 = vmatpush1.bf16.msra.mxu0 %v196
  %256 = vmatprep.subr.bf16.mxu0 %v201
  %257 = vmatpush1.bf16.msra.mxu0 %v200
  %258 = vmatprep.subr.bf16.mxu0 %v205
  %259 = vmatpush1.bf16.msra.mxu0 %v204
  %260 = vmatprep.subr.bf16.mxu0 %v209
  %261 = vmatpush1.bf16.msra.mxu0 %v208
  %262 = vmatprep.subr.bf16.mxu0 %v213
  %263 = vmatpush1.bf16.msra.mxu0 %v212
  %264 = vmatprep.subr.bf16.mxu0 0
  %265 = vmatpush1.bf16.msra.mxu0 0
  %266 = vmatprep.subr.bf16.mxu0 0
  %267 = vmatpush1.bf16.msra.mxu0 0
  %268 = vmatprep.subr.bf16.mxu0 0
  %269 = vmatpush1.bf16.msra.mxu0 0
  %270 = vmatprep.subr.bf16.mxu0 0
  %271 = vmatpush1.bf16.msra.mxu0 0
  %272 = vmatprep.subr.bf16.mxu0 0
  %273 = vmatpush1.bf16.msra.mxu0 0
  %274 = vmatprep.subr.bf16.mxu0 0
  %275 = vmatpush1.bf16.msra.mxu0 0
  %276 = vmatprep.subr.bf16.mxu0 0
  %277 = vmatpush1.bf16.msra.mxu0 0
  %278 = vmatprep.subr.bf16.mxu0 0
  %279 = vmatpush1.bf16.msra.mxu0 0
  %280 = vmatprep.mubr.bf16.mxu0 0
  %281 = vmatmul.mubr.bf16.gmra.mrb[0].mxu0 %v84
  %v282 = vpop.f32.mrb[0].mxu0
  %v283 = vadd.f32 %v59, %v282
  %v284 = vpop.f32.mrb[0].mxu0
  %v285 = vadd.f32 %v63, %v284
  %v286 = vpop.f32.mrb[0].mxu0
  %v287 = vadd.f32 %v59, %v286
  %v288 = vpop.f32.mrb[0].mxu0
  %v289 = vadd.f32 %v63, %v288
  %290 = vmatprep.mubr.bf16.mxu0 0
  %291 = vmatmul.mubr.bf16.gmra.mrb[0].mxu0 %v85
  %v292 = vpop.f32.mrb[0].mxu0
  %v293 = vadd.f32 %v59, %v292
  %v294 = vpop.f32.mrb[0].mxu0
  %v295 = vadd.f32 %v63, %v294
  %v296 = vpop.f32.mrb[0].mxu0
  %v297 = vadd.f32 %v59, %v296
  %v298 = vpop.f32.mrb[0].mxu0
  %v299 = vadd.f32 %v63, %v298
  %300 = vdwg.mxu0
  %301 = vmatprep.subr.bf16.mxu0 %v187
  %302 = vmatpush1.bf16.msra.mxu0 %v186
  %303 = vmatprep.subr.bf16.mxu0 %v191
  %304 = vmatpush1.bf16.msra.mxu0 %v190
  %305 = vmatprep.subr.bf16.mxu0 %v195
  %306 = vmatpush1.bf16.msra.mxu0 %v194
  %307 = vmatprep.subr.bf16.mxu0 %v199
  %308 = vmatpush1.bf16.msra.mxu0 %v198
  %309 = vmatprep.subr.bf16.mxu0 %v203
  %310 = vmatpush1.bf16.msra.mxu0 %v202
  %311 = vmatprep.subr.bf16.mxu0 %v207
  %312 = vmatpush1.bf16.msra.mxu0 %v206
  %313 = vmatprep.subr.bf16.mxu0 %v211
  %314 = vmatpush1.bf16.msra.mxu0 %v210
  %315 = vmatprep.subr.bf16.mxu0 %v215
  %316 = vmatpush1.bf16.msra.mxu0 %v214
  %317 = vmatprep.subr.bf16.mxu0 0
  %318 = vmatpush1.bf16.msra.mxu0 0
  %319 = vmatprep.subr.bf16.mxu0 0
  %320 = vmatpush1.bf16.msra.mxu0 0
  %321 = vmatprep.subr.bf16.mxu0 0
  %322 = vmatpush1.bf16.msra.mxu0 0
  %323 = vmatprep.subr.bf16.mxu0 0
  %324 = vmatpush1.bf16.msra.mxu0 0
  %325 = vmatprep.subr.bf16.mxu0 0
  %326 = vmatpush1.bf16.msra.mxu0 0
  %327 = vmatprep.subr.bf16.mxu0 0
  %328 = vmatpush1.bf16.msra.mxu0 0
  %329 = vmatprep.subr.bf16.mxu0 0
  %330 = vmatpush1.bf16.msra.mxu0 0
  %331 = vmatprep.subr.bf16.mxu0 0
  %332 = vmatpush1.bf16.msra.mxu0 0
  %333 = vmatprep.mubr.bf16.mxu0 0
  %334 = vmatmul.mubr.bf16.gmra.mrb[0].mxu0 %v84
  %v335 = vpop.f32.mrb[0].mxu0
  %v336 = vadd.f32 %v67, %v335
  %v337 = vpop.f32.mrb[0].mxu0
  %v338 = vadd.f32 %v71, %v337
  %v339 = vpop.f32.mrb[0].mxu0
  %v340 = vadd.f32 %v67, %v339
  %v341 = vpop.f32.mrb[0].mxu0
  %v342 = vadd.f32 %v71, %v341
  %343 = vmatprep.mubr.bf16.mxu0 0
  %344 = vmatmul.mubr.bf16.gmra.mrb[0].mxu0 %v85
  %v345 = vpop.f32.mrb[0].mxu0
  %v346 = vadd.f32 %v67, %v345
  %v347 = vpop.f32.mrb[0].mxu0
  %v348 = vadd.f32 %v71, %v347
  %v349 = vpop.f32.mrb[0].mxu0
  %v350 = vadd.f32 %v67, %v349
  %v351 = vpop.f32.mrb[0].mxu0
  %v352 = vadd.f32 %v71, %v351
  %353 = vdwg.mxu0
  %v354 = vld [vmem:[%s3] sm:$0xff]
  %v355 = vld [vmem:[%s3 + $0x8] sm:$0xff]
  %v356 = vld [vmem:[%s3 + $0x10] sm:$0xff]
  %v357 = vld [vmem:[%s3 + $0x18] sm:$0xff]
  %v358 = vld [vmem:[%s3 + $0x20] sm:$0xff]
  %v359 = vld [vmem:[%s3 + $0x28] sm:$0xff]
  %v360 = vld [vmem:[%s3 + $0x30] sm:$0xff]
  %v361 = vld [vmem:[%s3 + $0x38] sm:$0xff]
  %v362 = vunpack.c.l.bf16 %v354
  %v363 = vunpack.c.h.bf16 %v354
  %v364 = vunpack.c.l.bf16 %v355
  %v365 = vunpack.c.h.bf16 %v355
  %v366 = vunpack.c.l.bf16 %v356
  %v367 = vunpack.c.h.bf16 %v356
  %v368 = vunpack.c.l.bf16 %v357
  %v369 = vunpack.c.h.bf16 %v357
  %v370 = vunpack.c.l.bf16 %v358
  %v371 = vunpack.c.h.bf16 %v358
  %v372 = vunpack.c.l.bf16 %v359
  %v373 = vunpack.c.h.bf16 %v359
  %v374 = vunpack.c.l.bf16 %v360
  %v375 = vunpack.c.h.bf16 %v360
  %v376 = vunpack.c.l.bf16 %v361
  %v377 = vunpack.c.h.bf16 %v361
  %v378 = vadd.f32 %v283, %v362
  %v379 = vadd.f32 %v285, %v363
  %v380 = vadd.f32 %v336, %v364
  %v381 = vadd.f32 %v338, %v365
  %v382 = vadd.f32 %v287, %v366
  %v383 = vadd.f32 %v289, %v367
  %v384 = vadd.f32 %v340, %v368
  %v385 = vadd.f32 %v342, %v369
  %v386 = vadd.f32 %v293, %v370
  %v387 = vadd.f32 %v295, %v371
  %v388 = vadd.f32 %v346, %v372
  %v389 = vadd.f32 %v348, %v373
  %v390 = vadd.f32 %v297, %v374
  %v391 = vadd.f32 %v299, %v375
  %v392 = vadd.f32 %v350, %v376
  %v393 = vadd.f32 %v352, %v377
  %v394 = vmax.f32 %v378, 0.0
  %v395 = vmax.f32 %v379, 0.0
  %v396 = vmax.f32 %v380, 0.0
  %v397 = vmax.f32 %v381, 0.0
  %v398 = vmax.f32 %v382, 0.0
  %v399 = vmax.f32 %v383, 0.0
  %v400 = vmax.f32 %v384, 0.0
  %v401 = vmax.f32 %v385, 0.0
  %v402 = vmax.f32 %v386, 0.0
  %v403 = vmax.f32 %v387, 0.0
  %v404 = vmax.f32 %v388, 0.0
  %v405 = vmax.f32 %v389, 0.0
  %v406 = vmax.f32 %v390, 0.0
  %v407 = vmax.f32 %v391, 0.0
  %v408 = vmax.f32 %v392, 0.0
  %v409 = vmax.f32 %v393, 0.0
  %v410 = vpack.c.bf16 %v398, %v394
  %v411 = vpack.c.bf16 %v399, %v395
  %v412 = vpack.c.bf16 %v400, %v396
  %v413 = vpack.c.bf16 %v401, %v397
  %v414 = vpack.c.bf16 %v406, %v402
  %v415 = vpack.c.bf16 %v407, %v403
  %v416 = vpack.c.bf16 %v408, %v404
  %v417 = vpack.c.bf16 %v409, %v405
  %v426 = vunpack.c.l.b16 %v410
  %v427 = vunpack.c.l.b16 %v411
  %v428 = vunpack.c.l.b16 %v412
  %v429 = vunpack.c.l.b16 %v413
  %v430 = vunpack.c.h.b16 %v410
  %v431 = vunpack.c.h.b16 %v411
  %v432 = vunpack.c.h.b16 %v412
  %v433 = vunpack.c.h.b16 %v413
  %v434 = vunpack.c.l.b16 %v414
  %v435 = vunpack.c.l.b16 %v415
  %v436 = vunpack.c.l.b16 %v416
  %v437 = vunpack.c.l.b16 %v417
  %v438 = vunpack.c.h.b16 %v414
  %v439 = vunpack.c.h.b16 %v415
  %v440 = vunpack.c.h.b16 %v416
  %v441 = vunpack.c.h.b16 %v417
  %v442 = vpack.c.b16 %v427, %v426
  %v443 = vpack.c.b16 %v429, %v428
  %v444 = vpack.c.b16 %v431, %v430
  %v445 = vpack.c.b16 %v433, %v432
  %v446 = vpack.c.b16 %v435, %v434
  %v447 = vpack.c.b16 %v437, %v436
  %v448 = vpack.c.b16 %v439, %v438
  %v449 = vpack.c.b16 %v441, %v440
  %458 = vst [vmem:[%s4] sm:$0xff] %v442
  %459 = vst [vmem:[%s4 + $0x8] sm:$0xff] %v443
  %460 = vst [vmem:[%s4 + $0x10] sm:$0xff] %v444
  %461 = vst [vmem:[%s4 + $0x18] sm:$0xff] %v445
  %462 = vst [vmem:[%s4 + $0x20] sm:$0xff] %v446
  %463 = vst [vmem:[%s4 + $0x28] sm:$0xff] %v447
  %464 = vst [vmem:[%s4 + $0x30] sm:$0xff] %v448
  %465 = vst [vmem:[%s4 + $0x38] sm:$0xff] %v449
  // Predicated region
  $region18: #{_lambda_.26} parent=0 // pred_check
    _
  $region19: #{_lambda_.26} parent=0 // pred_check_branch
    %467 = sbr.rel (0) target = $region21
  $region20: #{_lambda_.26} parent=0 // pred_region
    _
  $region21: #{_lambda_.26} parent=0 // pred_fallthru
    _
  // Predicated region
  $region22: #{_lambda_.26} parent=0 // pred_check
    _
  $region23: #{_lambda_.26} parent=0 // pred_check_branch
    %469 = sbr.rel (0) target = $region25
  $region24: #{_lambda_.26} parent=0 // pred_region
    _
  $region25: #{_lambda_.26} parent=0 // pred_fallthru
    _

// kernel: _lambda_.27
$region0: #{_lambda_.27}
  #allocation0 [shape = 'u32[]', space=smem, size = 0x4, offset = 0x4, fixed_abs, tag = 'smem constant byte address 0x4 - core index']
  #allocation1 [shape = 'u32[144,128]{1,0:T(1,128)}', space=vmem, size = 0x12000, scoped, tag = 'internal scratch']
  %s0 = inlined_call_operand.vmem [shape: bf16[32,512], index: 0, kind: input, shape index: {}]
  %s1 = inlined_call_operand.vmem [shape: bf16[512,128], index: 1, kind: input, shape index: {}]
  %s2 = inlined_call_operand.vmem [shape: f32[1,128], index: 2, kind: input, shape index: {}]
  %s3 = inlined_call_operand.vmem [shape: bf16[32,128], index: 3, kind: output, shape index: {}]
  %s4 = sld [smem:[#allocation0]]
  $region22: #{_lambda_.27} parent=0
    _
  %s6 = ssub.s32 1, %s4
  %s7 = scalar_select 0, %s6, %s4
  // Predicated region
  $region2: #{_lambda_.27} parent=0 // pred_check
    _
  $region3: #{_lambda_.27} parent=0 // pred_check_branch
    %9 = sbr.rel (0) target = $region5
  $region4: #{_lambda_.27} parent=0 // pred_region
    _
  $region5: #{_lambda_.27} parent=0 // pred_fallthru
    _
  // Predicated region
  $region6: #{_lambda_.27} parent=0 // pred_check
    _
  $region7: #{_lambda_.27} parent=0 // pred_check_branch
    %11 = sbr.rel (0) target = $region9
  $region8: #{_lambda_.27} parent=0 // pred_region
    _
  $region9: #{_lambda_.27} parent=0 // pred_fallthru
    _
  // Predicated region
  $region10: #{_lambda_.27} parent=0 // pred_check
    _
  $region11: #{_lambda_.27} parent=0 // pred_check_branch
    %13 = sbr.rel (0) target = $region13
  $region12: #{_lambda_.27} parent=0 // pred_region
    _
  $region13: #{_lambda_.27} parent=0 // pred_fallthru
    _
  %v15 = vld [vmem:[%s0] sm:$0xff]
  %v16 = vld [vmem:[%s0 + $0x8] sm:$0xff]
  %v17 = vld [vmem:[%s0 + $0x10] sm:$0xff]
  %v18 = vld [vmem:[%s0 + $0x18] sm:$0xff]
  %v19 = vld [vmem:[%s0 + $0x20] sm:$0xff]
  %v20 = vld [vmem:[%s0 + $0x28] sm:$0xff]
  %v21 = vld [vmem:[%s0 + $0x30] sm:$0xff]
  %v22 = vld [vmem:[%s0 + $0x38] sm:$0xff]
  %v23 = vld [vmem:[%s1] sm:$0xf]
  %v24 = vld [vmem:[%s1 + $0x4] sm:$0xf]
  %v25 = vld [vmem:[%s1 + $0x8] sm:$0xf]
  %v26 = vld [vmem:[%s1 + $0xc] sm:$0xf]
  %v27 = vld [vmem:[%s1 + $0x10] sm:$0xf]
  %v28 = vld [vmem:[%s1 + $0x14] sm:$0xf]
  %v29 = vld [vmem:[%s1 + $0x18] sm:$0xf]
  %v30 = vld [vmem:[%s1 + $0x1c] sm:$0xf]
  %v31 = vld [vmem:[%s1 + $0x20] sm:$0xf]
  %v32 = vld [vmem:[%s1 + $0x24] sm:$0xf]
  %v33 = vld [vmem:[%s1 + $0x28] sm:$0xf]
  %v34 = vld [vmem:[%s1 + $0x2c] sm:$0xf]
  %v35 = vld [vmem:[%s1 + $0x30] sm:$0xf]
  %v36 = vld [vmem:[%s1 + $0x34] sm:$0xf]
  %v37 = vld [vmem:[%s1 + $0x38] sm:$0xf]
  %v38 = vld [vmem:[%s1 + $0x3c] sm:$0xf]
  %v39 = vld [vmem:[%s1 + $0x40] sm:$0xf]
  %v40 = vld [vmem:[%s1 + $0x44] sm:$0xf]
  %v41 = vld [vmem:[%s1 + $0x48] sm:$0xf]
  %v42 = vld [vmem:[%s1 + $0x4c] sm:$0xf]
  %v43 = vld [vmem:[%s1 + $0x50] sm:$0xf]
  %v44 = vld [vmem:[%s1 + $0x54] sm:$0xf]
  %v45 = vld [vmem:[%s1 + $0x58] sm:$0xf]
  %v46 = vld [vmem:[%s1 + $0x5c] sm:$0xf]
  %v47 = vld [vmem:[%s1 + $0x60] sm:$0xf]
  %v48 = vld [vmem:[%s1 + $0x64] sm:$0xf]
  %v49 = vld [vmem:[%s1 + $0x68] sm:$0xf]
  %v50 = vld [vmem:[%s1 + $0x6c] sm:$0xf]
  %v51 = vld [vmem:[%s1 + $0x70] sm:$0xf]
  %v52 = vld [vmem:[%s1 + $0x74] sm:$0xf]
  %v53 = vld [vmem:[%s1 + $0x78] sm:$0xf]
  %v54 = vld [vmem:[%s1 + $0x7c] sm:$0xf]
  %v55 = vld [vmem:[%s1 + $0x80] sm:$0xf]
  %v56 = vld [vmem:[%s1 + $0x84] sm:$0xf]
  %v57 = vld [vmem:[%s1 + $0x88] sm:$0xf]
  %v58 = vld [vmem:[%s1 + $0x8c] sm:$0xf]
  %v59 = vld [vmem:[%s1 + $0x90] sm:$0xf]
  %v60 = vld [vmem:[%s1 + $0x94] sm:$0xf]
  %v61 = vld [vmem:[%s1 + $0x98] sm:$0xf]
  %v62 = vld [vmem:[%s1 + $0x9c] sm:$0xf]
  %v63 = vld [vmem:[%s1 + $0xa0] sm:$0xf]
  %v64 = vld [vmem:[%s1 + $0xa4] sm:$0xf]
  %v65 = vld [vmem:[%s1 + $0xa8] sm:$0xf]
  %v66 = vld [vmem:[%s1 + $0xac] sm:$0xf]
  %v67 = vld [vmem:[%s1 + $0xb0] sm:$0xf]
  %v68 = vld [vmem:[%s1 + $0xb4] sm:$0xf]
  %v69 = vld [vmem:[%s1 + $0xb8] sm:$0xf]
  %v70 = vld [vmem:[%s1 + $0xbc] sm:$0xf]
  %v71 = vld [vmem:[%s1 + $0xc0] sm:$0xf]
  %v72 = vld [vmem:[%s1 + $0xc4] sm:$0xf]
  %v73 = vld [vmem:[%s1 + $0xc8] sm:$0xf]
  %v74 = vld [vmem:[%s1 + $0xcc] sm:$0xf]
  %v75 = vld [vmem:[%s1 + $0xd0] sm:$0xf]
  %v76 = vld [vmem:[%s1 + $0xd4] sm:$0xf]
  %v77 = vld [vmem:[%s1 + $0xd8] sm:$0xf]
  %v78 = vld [vmem:[%s1 + $0xdc] sm:$0xf]
  %v79 = vld [vmem:[%s1 + $0xe0] sm:$0xf]
  %v80 = vld [vmem:[%s1 + $0xe4] sm:$0xf]
  %v81 = vld [vmem:[%s1 + $0xe8] sm:$0xf]
  %v82 = vld [vmem:[%s1 + $0xec] sm:$0xf]
  %v83 = vld [vmem:[%s1 + $0xf0] sm:$0xf]
  %v84 = vld [vmem:[%s1 + $0xf4] sm:$0xf]
  %v85 = vld [vmem:[%s1 + $0xf8] sm:$0xf]
  %v86 = vld [vmem:[%s1 + $0xfc] sm:$0xf]
  %v87 = vld [vmem:[%s2] sm:$0x1]
  %v89 = vlaneseq
  %v90 = vshrl.u32 %v89, 7
  %v91 = vsub.s32 0, %v90
  %v92 = vrot.slane %v87, %v91
  %v102 = vunpack.c.l.b16 %v15
  %v103 = vunpack.c.h.b16 %v15
  %v104 = vunpack.c.l.b16 %v16
  %v105 = vunpack.c.h.b16 %v16
  %v106 = vunpack.c.l.b16 %v17
  %v107 = vunpack.c.h.b16 %v17
  %v108 = vunpack.c.l.b16 %v18
  %v109 = vunpack.c.h.b16 %v18
  %v110 = vunpack.c.l.b16 %v19
  %v111 = vunpack.c.h.b16 %v19
  %v112 = vunpack.c.l.b16 %v20
  %v113 = vunpack.c.h.b16 %v20
  %v114 = vunpack.c.l.b16 %v21
  %v115 = vunpack.c.h.b16 %v21
  %v116 = vunpack.c.l.b16 %v22
  %v117 = vunpack.c.h.b16 %v22
  %v118 = vpack.c.b16 %v106, %v102
  %v119 = vpack.c.b16 %v107, %v103
  %v120 = vpack.c.b16 %v108, %v104
  %v121 = vpack.c.b16 %v109, %v105
  %v122 = vpack.c.b16 %v114, %v110
  %v123 = vpack.c.b16 %v115, %v111
  %v124 = vpack.c.b16 %v116, %v112
  %v125 = vpack.c.b16 %v117, %v113
  %v198 = vunpack.c.l.b16 %v23
  %v199 = vunpack.c.l.b16 %v24
  %v200 = vunpack.c.l.b16 %v25
  %v201 = vunpack.c.l.b16 %v26
  %v202 = vunpack.c.l.b16 %v27
  %v203 = vunpack.c.l.b16 %v28
  %v204 = vunpack.c.l.b16 %v29
  %v205 = vunpack.c.l.b16 %v30
  %v206 = vunpack.c.l.b16 %v31
  %v207 = vunpack.c.l.b16 %v32
  %v208 = vunpack.c.l.b16 %v33
  %v209 = vunpack.c.l.b16 %v34
  %v210 = vunpack.c.l.b16 %v35
  %v211 = vunpack.c.l.b16 %v36
  %v212 = vunpack.c.l.b16 %v37
  %v213 = vunpack.c.l.b16 %v38
  %v214 = vunpack.c.l.b16 %v39
  %v215 = vunpack.c.l.b16 %v40
  %v216 = vunpack.c.l.b16 %v41
  %v217 = vunpack.c.l.b16 %v42
  %v218 = vunpack.c.l.b16 %v43
  %v219 = vunpack.c.l.b16 %v44
  %v220 = vunpack.c.l.b16 %v45
  %v221 = vunpack.c.l.b16 %v46
  %v222 = vunpack.c.l.b16 %v47
  %v223 = vunpack.c.l.b16 %v48
  %v224 = vunpack.c.l.b16 %v49
  %v225 = vunpack.c.l.b16 %v50
  %v226 = vunpack.c.l.b16 %v51
  %v227 = vunpack.c.l.b16 %v52
  %v228 = vunpack.c.l.b16 %v53
  %v229 = vunpack.c.l.b16 %v54
  %v230 = vunpack.c.l.b16 %v55
  %v231 = vunpack.c.l.b16 %v56
  %v232 = vunpack.c.l.b16 %v57
  %v233 = vunpack.c.l.b16 %v58
  %v234 = vunpack.c.l.b16 %v59
  %v235 = vunpack.c.l.b16 %v60
  %v236 = vunpack.c.l.b16 %v61
  %v237 = vunpack.c.l.b16 %v62
  %v238 = vunpack.c.l.b16 %v63
  %v239 = vunpack.c.l.b16 %v64
  %v240 = vunpack.c.l.b16 %v65
  %v241 = vunpack.c.l.b16 %v66
  %v242 = vunpack.c.l.b16 %v67
  %v243 = vunpack.c.l.b16 %v68
  %v244 = vunpack.c.l.b16 %v69
  %v245 = vunpack.c.l.b16 %v70
  %v246 = vunpack.c.l.b16 %v71
  %v247 = vunpack.c.l.b16 %v72
  %v248 = vunpack.c.l.b16 %v73
  %v249 = vunpack.c.l.b16 %v74
  %v250 = vunpack.c.l.b16 %v75
  %v251 = vunpack.c.l.b16 %v76
  %v252 = vunpack.c.l.b16 %v77
  %v253 = vunpack.c.l.b16 %v78
  %v254 = vunpack.c.l.b16 %v79
  %v255 = vunpack.c.l.b16 %v80
  %v256 = vunpack.c.l.b16 %v81
  %v257 = vunpack.c.l.b16 %v82
  %v258 = vunpack.c.l.b16 %v83
  %v259 = vunpack.c.l.b16 %v84
  %v260 = vunpack.c.l.b16 %v85
  %v261 = vunpack.c.l.b16 %v86
  %v262 = vpack.c.b16 %v199, %v198
  %v263 = vpack.c.b16 %v201, %v200
  %v264 = vpack.c.b16 %v203, %v202
  %v265 = vpack.c.b16 %v205, %v204
  %v266 = vpack.c.b16 %v207, %v206
  %v267 = vpack.c.b16 %v209, %v208
  %v268 = vpack.c.b16 %v211, %v210
  %v269 = vpack.c.b16 %v213, %v212
  %v270 = vpack.c.b16 %v215, %v214
  %v271 = vpack.c.b16 %v217, %v216
  %v272 = vpack.c.b16 %v219, %v218
  %v273 = vpack.c.b16 %v221, %v220
  %v274 = vpack.c.b16 %v223, %v222
  %v275 = vpack.c.b16 %v225, %v224
  %v276 = vpack.c.b16 %v227, %v226
  %v277 = vpack.c.b16 %v229, %v228
  %v278 = vpack.c.b16 %v231, %v230
  %v279 = vpack.c.b16 %v233, %v232
  %v280 = vpack.c.b16 %v235, %v234
  %v281 = vpack.c.b16 %v237, %v236
  %v282 = vpack.c.b16 %v239, %v238
  %v283 = vpack.c.b16 %v241, %v240
  %v284 = vpack.c.b16 %v243, %v242
  %v285 = vpack.c.b16 %v245, %v244
  %v286 = vpack.c.b16 %v247, %v246
  %v287 = vpack.c.b16 %v249, %v248
  %v288 = vpack.c.b16 %v251, %v250
  %v289 = vpack.c.b16 %v253, %v252
  %v290 = vpack.c.b16 %v255, %v254
  %v291 = vpack.c.b16 %v257, %v256
  %v292 = vpack.c.b16 %v259, %v258
  %v293 = vpack.c.b16 %v261, %v260
  %326 = vmatprep.subr.bf16.mxu0 0
  %327 = vmatpush1.bf16.msra.mxu0 %v262
  %328 = vmatprep.subr.bf16.mxu0 0
  %329 = vmatpush1.bf16.msra.mxu0 %v263
  %330 = vmatprep.subr.bf16.mxu0 0
  %331 = vmatpush1.bf16.msra.mxu0 %v264
  %332 = vmatprep.subr.bf16.mxu0 0
  %333 = vmatpush1.bf16.msra.mxu0 %v265
  %334 = vmatprep.subr.bf16.mxu0 0
  %335 = vmatpush1.bf16.msra.mxu0 %v266
  %336 = vmatprep.subr.bf16.mxu0 0
  %337 = vmatpush1.bf16.msra.mxu0 %v267
  %338 = vmatprep.subr.bf16.mxu0 0
  %339 = vmatpush1.bf16.msra.mxu0 %v268
  %340 = vmatprep.subr.bf16.mxu0 0
  %341 = vmatpush1.bf16.msra.mxu0 %v269
  %342 = vmatprep.subr.bf16.mxu0 0
  %343 = vmatpush1.bf16.msra.mxu0 %v270
  %344 = vmatprep.subr.bf16.mxu0 0
  %345 = vmatpush1.bf16.msra.mxu0 %v271
  %346 = vmatprep.subr.bf16.mxu0 0
  %347 = vmatpush1.bf16.msra.mxu0 %v272
  %348 = vmatprep.subr.bf16.mxu0 0
  %349 = vmatpush1.bf16.msra.mxu0 %v273
  %350 = vmatprep.subr.bf16.mxu0 0
  %351 = vmatpush1.bf16.msra.mxu0 %v274
  %352 = vmatprep.subr.bf16.mxu0 0
  %353 = vmatpush1.bf16.msra.mxu0 %v275
  %354 = vmatprep.subr.bf16.mxu0 0
  %355 = vmatpush1.bf16.msra.mxu0 %v276
  %356 = vmatprep.subr.bf16.mxu0 0
  %357 = vmatpush1.bf16.msra.mxu0 %v277
  %358 = vmatprep.mubr.bf16.mxu0 %v119
  %359 = vmatmul.mubr.bf16.gmra.mrb[0].mxu0 %v118
  %v360 = vpop.f32.mrb[0].mxu0
  %v361 = vadd.f32 %v92, %v360
  %v362 = vpop.f32.mrb[0].mxu0
  %v363 = vpop.f32.mrb[0].mxu0
  %v364 = vadd.f32 %v92, %v363
  %v365 = vpop.f32.mrb[0].mxu0
  %366 = vmatprep.mubr.bf16.mxu0 %v123
  %367 = vmatmul.mubr.bf16.gmra.mrb[0].mxu0 %v122
  %v368 = vpop.f32.mrb[0].mxu0
  %v369 = vadd.f32 %v92, %v368
  %v370 = vpop.f32.mrb[0].mxu0
  %v371 = vpop.f32.mrb[0].mxu0
  %v372 = vadd.f32 %v92, %v371
  %v373 = vpop.f32.mrb[0].mxu0
  %374 = vdwg.mxu0
  %375 = vmatprep.subr.bf16.mxu0 0
  %376 = vmatpush1.bf16.msra.mxu0 %v278
  %377 = vmatprep.subr.bf16.mxu0 0
  %378 = vmatpush1.bf16.msra.mxu0 %v279
  %379 = vmatprep.subr.bf16.mxu0 0
  %380 = vmatpush1.bf16.msra.mxu0 %v280
  %381 = vmatprep.subr.bf16.mxu0 0
  %382 = vmatpush1.bf16.msra.mxu0 %v281
  %383 = vmatprep.subr.bf16.mxu0 0
  %384 = vmatpush1.bf16.msra.mxu0 %v282
  %385 = vmatprep.subr.bf16.mxu0 0
  %386 = vmatpush1.bf16.msra.mxu0 %v283
  %387 = vmatprep.subr.bf16.mxu0 0
  %388 = vmatpush1.bf16.msra.mxu0 %v284
  %389 = vmatprep.subr.bf16.mxu0 0
  %390 = vmatpush1.bf16.msra.mxu0 %v285
  %391 = vmatprep.subr.bf16.mxu0 0
  %392 = vmatpush1.bf16.msra.mxu0 %v286
  %393 = vmatprep.subr.bf16.mxu0 0
  %394 = vmatpush1.bf16.msra.mxu0 %v287
  %395 = vmatprep.subr.bf16.mxu0 0
  %396 = vmatpush1.bf16.msra.mxu0 %v288
  %397 = vmatprep.subr.bf16.mxu0 0
  %398 = vmatpush1.bf16.msra.mxu0 %v289
  %399 = vmatprep.subr.bf16.mxu0 0
  %400 = vmatpush1.bf16.msra.mxu0 %v290
  %401 = vmatprep.subr.bf16.mxu0 0
  %402 = vmatpush1.bf16.msra.mxu0 %v291
  %403 = vmatprep.subr.bf16.mxu0 0
  %404 = vmatpush1.bf16.msra.mxu0 %v292
  %405 = vmatprep.subr.bf16.mxu0 0
  %406 = vmatpush1.bf16.msra.mxu0 %v293
  %407 = vmatprep.mubr.bf16.mxu0 %v121
  %408 = vmatmul.mubr.bf16.gmra.mrb[0].mxu0 %v120
  %v409 = vpop.f32.mrb[0].mxu0
  %v410 = vadd.f32 %v361, %v409
  %v411 = vpop.f32.mrb[0].mxu0
  %v412 = vpop.f32.mrb[0].mxu0
  %v413 = vadd.f32 %v364, %v412
  %v414 = vpop.f32.mrb[0].mxu0
  %415 = vmatprep.mubr.bf16.mxu0 %v125
  %416 = vmatmul.mubr.bf16.gmra.mrb[0].mxu0 %v124
  %v417 = vpop.f32.mrb[0].mxu0
  %v418 = vadd.f32 %v369, %v417
  %v419 = vpop.f32.mrb[0].mxu0
  %v420 = vpop.f32.mrb[0].mxu0
  %v421 = vadd.f32 %v372, %v420
  %v422 = vpop.f32.mrb[0].mxu0
  %423 = vdwg.mxu0
  %v424 = vmax.f32 %v410, 0.0
  %v425 = vmax.f32 %v413, 0.0
  %v426 = vmax.f32 %v418, 0.0
  %v427 = vmax.f32 %v421, 0.0
  %v428 = vpack.c.bf16 %v425, %v424
  %v429 = vpack.c.bf16 %v427, %v426
  %v432 = vunpack.c.l.b16 %v428
  %v433 = vunpack.c.h.b16 %v428
  %v434 = vunpack.c.l.b16 %v429
  %v435 = vunpack.c.h.b16 %v429
  %v436 = vpack.c.b16 %v432, %v432
  %v437 = vpack.c.b16 %v433, %v433
  %v438 = vpack.c.b16 %v434, %v434
  %v439 = vpack.c.b16 %v435, %v435
  %444 = vst [vmem:[%s3] sm:$0xf] %v436
  %445 = vst [vmem:[%s3 + $0x4] sm:$0xf] %v437
  %446 = vst [vmem:[%s3 + $0x8] sm:$0xf] %v438
  %447 = vst [vmem:[%s3 + $0xc] sm:$0xf] %v439
  // Predicated region
  $region14: #{_lambda_.27} parent=0 // pred_check
    _
  $region15: #{_lambda_.27} parent=0 // pred_check_branch
    %449 = sbr.rel (0) target = $region17
  $region16: #{_lambda_.27} parent=0 // pred_region
    _
  $region17: #{_lambda_.27} parent=0 // pred_fallthru
    _
  // Predicated region
  $region18: #{_lambda_.27} parent=0 // pred_check
    _
  $region19: #{_lambda_.27} parent=0 // pred_check_branch
    %451 = sbr.rel (0) target = $region21
  $region20: #{_lambda_.27} parent=0 // pred_region
    _
  $region21: #{_lambda_.27} parent=0 // pred_fallthru
    _

</llo_original>
